<compile_context>
chip_gen: v7x
topology: tpu7x:2x2x1
jax: 0.10.0
libtpu: 0.0.40
codegen_flags: <defaults>
</compile_context>

<pallas_src>
import functools

import jax
import jax.numpy as jnp
from jax.experimental import pallas as pl
from jax.experimental.pallas import tpu as pltpu


def _expanding_block_kernel(x_ref, skip_ref, up_ref, mask_ref,
                            w1_ref, b1_ref, w2_ref, b2_ref, w3_ref, b3_ref,
                            o_ref, buf_ref, *, Cin, Ch, Wp, L):
    """Fused ExpandingBlock forward for one batch element.

    Layout: channels on sublanes, flattened zero-padded spatial (row stride
    Wp = Wo + 2) on lanes.  `buf_ref` always holds a properly zero-padded
    image, so the 3x3-conv tap (dy, dx) is the contiguous lane-dense slice
    buf[:, dy*Wp + dx : dy*Wp + dx + L].

    x_ref:    (1, Cin, H*W)       pre-upsample input, spatial flattened
    skip_ref: (1, Ch, L)          skip connection, already row-stride-Wp padded
    up_ref:   (H*W, L)            bilinear-2x (align_corners) interpolation matrix
    mask_ref: (1, L)              1.0 on valid columns (x < Wo), else 0.0
    w*_ref:   (9, Ch, cin)        conv weights per tap (BN folded for conv2/3)
    b*_ref:   (Ch, 1)             conv bias (BN folded for conv2/3)
    o_ref:    (1, Ch, L)          output, row-stride-Wp layout
    buf_ref:  (Cin, L + 2*Wp + 2) VMEM halo / working buffer
    """
    off0 = Wp + 1                       # flat offset of padded pixel (1, 1)
    mask = mask_ref[...]                # (1, L)

    # Zero once per grid step: halo borders + tail stay zero; the interior
    # [off0, off0 + L) is (re)written below with column-masked values.
    buf_ref[...] = jnp.zeros(buf_ref.shape, buf_ref.dtype)

    # ---- upsample 2x bilinear (align_corners=True): a single MXU matmul that
    #      also produces the padded row-stride-Wp layout (garbage cols are 0
    #      because the interpolation matrix has zero columns there) ----------
    up = jnp.dot(x_ref[0], up_ref[...], preferred_element_type=jnp.float32)
    buf_ref[:, off0:off0 + L] = up      # all Cin upsampled channels

    def conv3x3(w_ref, b_ref, cin):
        """3x3 conv, padding=1: 9 shifted lane-dense MXU matmuls."""
        acc = jnp.zeros((Ch, L), jnp.float32)
        for k in range(9):
            dy, dx = divmod(k, 3)
            off = dy * Wp + dx
            tap = buf_ref[0:cin, off:off + L]              # (cin, L) contiguous
            acc = acc + jax.lax.dot_general(
                w_ref[k], tap,
                dimension_numbers=(((1,), (0,)), ((), ())),
                preferred_element_type=jnp.float32)
        return acc + b_ref[...]                            # (Ch, L) + (Ch, 1)

    # ---- conv1 -------------------------------------------------------------
    h1 = conv3x3(w1_ref, b1_ref, Cin)
    # ---- concat([conv1_out, skip], channel axis), written straight back into
    #      the halo buffer (masked so padding positions stay zero) ------------
    buf_ref[0:Ch, off0:off0 + L] = h1 * mask
    buf_ref[Ch:Cin, off0:off0 + L] = skip_ref[0]
    # ---- conv2 + (folded, eval-mode) BN + ReLU ------------------------------
    h2 = jnp.maximum(conv3x3(w2_ref, b2_ref, Cin), 0.0)
    buf_ref[0:Ch, off0:off0 + L] = h2 * mask
    # ---- conv3 + (folded, eval-mode) BN + ReLU ------------------------------
    h3 = jnp.maximum(conv3x3(w3_ref, b3_ref, Ch), 0.0)
    o_ref[0] = h3.astype(o_ref.dtype)


def _bilinear_up2_matrix(H, W):
    """(H*W, Ho*Wp) matrix: flattened image -> flattened 2x bilinear upsample
    (align_corners=True, matching nn.Upsample) laid out with row stride
    Wp = 2*W + 2; the 2 extra columns per row are zero."""
    Ho, Wo = 2 * H, 2 * W
    Wp = Wo + 2

    def axis_weights(size_in, size_out):
        o = jnp.arange(size_out, dtype=jnp.float32)
        if size_in == 1:
            src = jnp.zeros((size_out,), jnp.float32)
        else:
            src = o * (size_in - 1) / (size_out - 1)
        lo = jnp.floor(src).astype(jnp.int32)
        hi = jnp.minimum(lo + 1, size_in - 1)
        frac = src - lo.astype(jnp.float32)
        m = jnp.zeros((size_out, size_in), jnp.float32)
        rows = jnp.arange(size_out)
        m = m.at[rows, lo].add(1.0 - frac)
        m = m.at[rows, hi].add(frac)
        return m

    uy = axis_weights(H, Ho)                                    # (Ho, H)
    ux = axis_weights(W, Wo)                                    # (Wo, W)
    uxp = jnp.zeros((Wp, W), jnp.float32).at[:Wo, :].set(ux)    # (Wp, W)
    m = jnp.einsum("yh,xw->hwyx", uy, uxp)                      # (H, W, Ho, Wp)
    return m.reshape(H * W, Ho * Wp)


def _conv_taps(w_oihw):
    """PyTorch OIHW conv weight -> (9, Cout, Cin), tap index k = dy*3 + dx."""
    cout, cin, kh, kw = w_oihw.shape
    return jnp.transpose(w_oihw, (2, 3, 0, 1)).reshape(kh * kw, cout, cin)


@functools.partial(jax.jit, static_argnames=("use_bn", "eps"))
def expanding_block_forward(x_nchw, skip_nchw, params, use_bn=True, eps=1e-5):
    """ExpandingBlock forward. Inputs/outputs are NCHW, like PyTorch."""
    N, Cin, H, W = x_nchw.shape
    Ch = Cin // 2
    Ho, Wo = 2 * H, 2 * W
    Wp = Wo + 2
    L = Ho * Wp
    BUF = L + 2 * Wp + 2
    assert skip_nchw.shape == (N, Ch, Ho, Wo)

    f32 = jnp.float32
    # Kernel-layout inputs (metadata reshape for x; one tiny pad for skip).
    x_flat = x_nchw.reshape(N, Cin, H * W).astype(f32)
    skip_flat = jnp.pad(
        skip_nchw.astype(f32),
        ((0, 0), (0, 0), (0, 0), (0, Wp - Wo))).reshape(N, Ch, L)

    up_mat = _bilinear_up2_matrix(H, W)                          # (H*W, L)
    col = jnp.arange(L, dtype=jnp.int32) % Wp
    mask = (col < Wo).astype(f32).reshape(1, L)

    # Eval-mode BatchNorm folded into conv2/conv3 (one shared BN, applied
    # twice, exactly as in the PyTorch module).
    if use_bn:
        scale = params["gamma"].astype(f32) * jax.lax.rsqrt(
            params["var"].astype(f32) + eps)
        shift = params["beta"].astype(f32) - params["mean"].astype(f32) * scale
    else:
        scale = jnp.ones((Ch,), f32)
        shift = jnp.zeros((Ch,), f32)

    w1 = _conv_taps(params["w1"].astype(f32))
    b1 = params["b1"].astype(f32).reshape(Ch, 1)
    w2 = _conv_taps(params["w2"].astype(f32)) * scale[None, :, None]
    b2 = (params["b2"].astype(f32) * scale + shift).reshape(Ch, 1)
    w3 = _conv_taps(params["w3"].astype(f32)) * scale[None, :, None]
    b3 = (params["b3"].astype(f32) * scale + shift).reshape(Ch, 1)

    kernel = functools.partial(_expanding_block_kernel,
                               Cin=Cin, Ch=Ch, Wp=Wp, L=L)

    def bcast(shape):
        ndim = len(shape)
        return pl.BlockSpec(shape, lambda b, _n=ndim: (0,) * _n)

    out_flat = pl.pallas_call(
        kernel,
        out_shape=jax.ShapeDtypeStruct((N, Ch, L), f32),
        grid_spec=pltpu.PrefetchScalarGridSpec(
            num_scalar_prefetch=0,
            grid=(N,),
            in_specs=[
                pl.BlockSpec((1, Cin, H * W), lambda b: (b, 0, 0)),   # x
                pl.BlockSpec((1, Ch, L), lambda b: (b, 0, 0)),        # skip
                bcast((H * W, L)),                                    # upsample mat
                bcast((1, L)),                                        # column mask
                bcast((9, Ch, Cin)), bcast((Ch, 1)),                  # conv1
                bcast((9, Ch, Cin)), bcast((Ch, 1)),                  # conv2 (BN folded)
                bcast((9, Ch, Ch)), bcast((Ch, 1)),                   # conv3 (BN folded)
            ],
            out_specs=pl.BlockSpec((1, Ch, L), lambda b: (b, 0, 0)),
            scratch_shapes=[pltpu.VMEM((Cin, BUF), f32)],
        ),
        compiler_params=pltpu.CompilerParams(
            dimension_semantics=("parallel",)),
    )(x_flat, skip_flat, up_mat, mask, w1, b1, w2, b2, w3, b3)

    # Drop the 2 zero/garbage columns per row and restore NCHW.
    return out_flat.reshape(N, Ch, Ho, Wp)[:, :, :, :Wo]


if __name__ == "__main__":
    key = jax.random.PRNGKey(0)
    N, C, H, W = 2, 4, 8, 8          # input_channels=4; skip is at 2x spatial
    Ch = C // 2
    ks = jax.random.split(key, 8)

    x = jax.random.normal(ks[0], (N, C, H, W), jnp.float32)
    skip = jax.random.normal(ks[1], (N, Ch, 2 * H, 2 * W), jnp.float32)

    # Deterministic parameter init; conv weights in PyTorch OIHW layout.
    params = {
        "w1": jax.random.normal(ks[2], (Ch, C, 3, 3), jnp.float32) * 0.1,
        "b1": jax.random.normal(ks[3], (Ch,), jnp.float32) * 0.1,
        "w2": jax.random.normal(ks[4], (Ch, C, 3, 3), jnp.float32) * 0.1,
        "b2": jax.random.normal(ks[5], (Ch,), jnp.float32) * 0.1,
        "w3": jax.random.normal(ks[6], (Ch, Ch, 3, 3), jnp.float32) * 0.1,
        "b3": jax.random.normal(ks[7], (Ch,), jnp.float32) * 0.1,
        # BatchNorm2d(C//2) affine params / running stats (PyTorch defaults).
        "gamma": jnp.ones((Ch,), jnp.float32),
        "beta": jnp.zeros((Ch,), jnp.float32),
        "mean": jnp.zeros((Ch,), jnp.float32),
        "var": jnp.ones((Ch,), jnp.float32),
    }

    out = expanding_block_forward(x, skip, params, use_bn=True)
    jax.block_until_ready(out)
    assert out.shape == (N, Ch, 2 * H, 2 * W), out.shape
    print("KERNEL_OK")
</pallas_src>

<mosaic_0001>
module attributes {stable_mosaic.version = 11 : i64} {
  func.func private @main(%arg0: i32) attributes {dimension_semantics = [#tpu.dimension_semantics<core_parallel>], iteration_bounds = array<i64: 2>, tpu.core_type = #tpu.core_type<sc_scalar_subcore>, window_params = []} {
    return
  }
}

module attributes {stable_mosaic.version = 11 : i64} {
  func.func private @main(%arg0: i32) attributes {dimension_semantics = [#tpu.dimension_semantics<core_parallel>], iteration_bounds = array<i64: 2>, tpu.core_type = #tpu.core_type<sc_scalar_subcore>, window_params = []} {
    return
  }
}

module attributes {stable_mosaic.version = 11 : i64} {
  func.func @_expanding_block_kernel(%arg0: i32, %arg1: memref<1x4x64xf32, #tpu.memory_space<vmem>>, %arg2: memref<1x2x288xf32, #tpu.memory_space<vmem>>, %arg3: memref<64x288xf32, #tpu.memory_space<vmem>>, %arg4: memref<1x288xf32, #tpu.memory_space<vmem>>, %arg5: memref<9x2x4xf32, #tpu.memory_space<vmem>>, %arg6: memref<2x1xf32, #tpu.memory_space<vmem>>, %arg7: memref<9x2x4xf32, #tpu.memory_space<vmem>>, %arg8: memref<2x1xf32, #tpu.memory_space<vmem>>, %arg9: memref<9x2x2xf32, #tpu.memory_space<vmem>>, %arg10: memref<2x1xf32, #tpu.memory_space<vmem>>, %arg11: memref<1x2x288xf32, #tpu.memory_space<vmem>>, %arg12: memref<4x326xf32, #tpu.memory_space<vmem>>) attributes {dimension_semantics = [#tpu.dimension_semantics<parallel>], iteration_bounds = array<i64: 2>, scalar_prefetch = 0 : i64, scratch_operands = 1 : i64, tpu.core_type = #tpu.core_type<tc>, window_params = [{transform_indices = @transform_0, window_bounds = array<i64: 1, 4, 64>}, {transform_indices = @transform_1, window_bounds = array<i64: 1, 2, 288>}, {pipeline_mode = #tpu.pipeline_mode<synchronous>, transform_indices = @transform_2, window_bounds = array<i64: 64, 288>}, {pipeline_mode = #tpu.pipeline_mode<synchronous>, transform_indices = @transform_3, window_bounds = array<i64: 1, 288>}, {pipeline_mode = #tpu.pipeline_mode<synchronous>, transform_indices = @transform_4, window_bounds = array<i64: 9, 2, 4>}, {pipeline_mode = #tpu.pipeline_mode<synchronous>, transform_indices = @transform_5, window_bounds = array<i64: 2, 1>}, {pipeline_mode = #tpu.pipeline_mode<synchronous>, transform_indices = @transform_6, window_bounds = array<i64: 9, 2, 4>}, {pipeline_mode = #tpu.pipeline_mode<synchronous>, transform_indices = @transform_7, window_bounds = array<i64: 2, 1>}, {pipeline_mode = #tpu.pipeline_mode<synchronous>, transform_indices = @transform_8, window_bounds = array<i64: 9, 2, 2>}, {pipeline_mode = #tpu.pipeline_mode<synchronous>, transform_indices = @transform_9, window_bounds = array<i64: 2, 1>}, {transform_indices = @transform_10, window_bounds = array<i64: 1, 2, 288>}]} {
    %c0 = arith.constant 0 : index
    %c0_0 = arith.constant 0 : index
    %0 = vector.load %arg4[%c0, %c0_0] : memref<1x288xf32, #tpu.memory_space<vmem>>, vector<1x288xf32>
    %cst = arith.constant 0.000000e+00 : f32
    %1 = vector.broadcast %cst : f32 to vector<4x326xf32>
    %c0_1 = arith.constant 0 : index
    %c0_2 = arith.constant 0 : index
    %2 = vector.load %arg12[%c0_1, %c0_2] : memref<4x326xf32, #tpu.memory_space<vmem>>, vector<4x326xf32>
    tpu.vector_store %arg12[%c0_1, %c0_2], %1 {strides = array<i32>} : memref<4x326xf32, #tpu.memory_space<vmem>>, vector<4x326xf32>,
    %c0_3 = arith.constant 0 : index
    %c0_4 = arith.constant 0 : index
    %c0_5 = arith.constant 0 : index
    %3 = vector.load %arg1[%c0_3, %c0_4, %c0_5] : memref<1x4x64xf32, #tpu.memory_space<vmem>>, vector<1x4x64xf32>
    %4 = vector.shape_cast %3 : vector<1x4x64xf32> to vector<4x64xf32>
    %c0_6 = arith.constant 0 : index
    %c0_7 = arith.constant 0 : index
    %5 = vector.load %arg3[%c0_6, %c0_7] : memref<64x288xf32, #tpu.memory_space<vmem>>, vector<64x288xf32>
    %cst_8 = arith.constant dense<0.000000e+00> : vector<4x288xf32>
    %6 = tpu.matmul %4, %5, %cst_8 {dimension_numbers = #tpu.dot_dimension_numbers<[1], [0], [0], [1], [0, 0, 1, 1], [], []>} : vector<4x64xf32>, vector<64x288xf32>, vector<4x288xf32> -> vector<4x288xf32>
    %c0_9 = arith.constant 0 : index
    %c19 = arith.constant 19 : index
    %7 = vector.load %arg12[%c0_9, %c19] : memref<4x326xf32, #tpu.memory_space<vmem>>, vector<4x288xf32>
    tpu.vector_store %arg12[%c0_9, %c19], %6 {strides = array<i32>} : memref<4x326xf32, #tpu.memory_space<vmem>>, vector<4x288xf32>,
    %cst_10 = arith.constant 0.000000e+00 : f32
    %8 = vector.broadcast %cst_10 : f32 to vector<2x288xf32>
    %c0_11 = arith.constant 0 : index
    %c0_12 = arith.constant 0 : index
    %9 = vector.load %arg12[%c0_11, %c0_12] : memref<4x326xf32, #tpu.memory_space<vmem>>, vector<4x288xf32>
    %c0_13 = arith.constant 0 : index
    %c0_14 = arith.constant 0 : index
    %c0_15 = arith.constant 0 : index
    %10 = vector.load %arg5[%c0_13, %c0_14, %c0_15] : memref<9x2x4xf32, #tpu.memory_space<vmem>>, vector<1x2x4xf32>
    %11 = vector.shape_cast %10 : vector<1x2x4xf32> to vector<2x4xf32>
    %cst_16 = arith.constant dense<0.000000e+00> : vector<2x288xf32>
    %12 = tpu.matmul %11, %9, %cst_16 {dimension_numbers = #tpu.dot_dimension_numbers<[1], [0], [0], [1], [0, 0, 1, 1], [], []>} : vector<2x4xf32>, vector<4x288xf32>, vector<2x288xf32> -> vector<2x288xf32>
    %13 = arith.addf %8, %12 : vector<2x288xf32>
    %c0_17 = arith.constant 0 : index
    %c1 = arith.constant 1 : index
    %14 = vector.load %arg12[%c0_17, %c1] : memref<4x326xf32, #tpu.memory_space<vmem>>, vector<4x288xf32>
    %c1_18 = arith.constant 1 : index
    %c0_19 = arith.constant 0 : index
    %c0_20 = arith.constant 0 : index
    %15 = vector.load %arg5[%c1_18, %c0_19, %c0_20] : memref<9x2x4xf32, #tpu.memory_space<vmem>>, vector<1x2x4xf32>
    %16 = vector.shape_cast %15 : vector<1x2x4xf32> to vector<2x4xf32>
    %cst_21 = arith.constant dense<0.000000e+00> : vector<2x288xf32>
    %17 = tpu.matmul %16, %14, %cst_21 {dimension_numbers = #tpu.dot_dimension_numbers<[1], [0], [0], [1], [0, 0, 1, 1], [], []>} : vector<2x4xf32>, vector<4x288xf32>, vector<2x288xf32> -> vector<2x288xf32>
    %18 = arith.addf %13, %17 : vector<2x288xf32>
    %c0_22 = arith.constant 0 : index
    %c2 = arith.constant 2 : index
    %19 = vector.load %arg12[%c0_22, %c2] : memref<4x326xf32, #tpu.memory_space<vmem>>, vector<4x288xf32>
    %c2_23 = arith.constant 2 : index
    %c0_24 = arith.constant 0 : index
    %c0_25 = arith.constant 0 : index
    %20 = vector.load %arg5[%c2_23, %c0_24, %c0_25] : memref<9x2x4xf32, #tpu.memory_space<vmem>>, vector<1x2x4xf32>
    %21 = vector.shape_cast %20 : vector<1x2x4xf32> to vector<2x4xf32>
    %cst_26 = arith.constant dense<0.000000e+00> : vector<2x288xf32>
    %22 = tpu.matmul %21, %19, %cst_26 {dimension_numbers = #tpu.dot_dimension_numbers<[1], [0], [0], [1], [0, 0, 1, 1], [], []>} : vector<2x4xf32>, vector<4x288xf32>, vector<2x288xf32> -> vector<2x288xf32>
    %23 = arith.addf %18, %22 : vector<2x288xf32>
    %c0_27 = arith.constant 0 : index
    %c18 = arith.constant 18 : index
    %24 = vector.load %arg12[%c0_27, %c18] : memref<4x326xf32, #tpu.memory_space<vmem>>, vector<4x288xf32>
    %c3 = arith.constant 3 : index
    %c0_28 = arith.constant 0 : index
    %c0_29 = arith.constant 0 : index
    %25 = vector.load %arg5[%c3, %c0_28, %c0_29] : memref<9x2x4xf32, #tpu.memory_space<vmem>>, vector<1x2x4xf32>
    %26 = vector.shape_cast %25 : vector<1x2x4xf32> to vector<2x4xf32>
    %cst_30 = arith.constant dense<0.000000e+00> : vector<2x288xf32>
    %27 = tpu.matmul %26, %24, %cst_30 {dimension_numbers = #tpu.dot_dimension_numbers<[1], [0], [0], [1], [0, 0, 1, 1], [], []>} : vector<2x4xf32>, vector<4x288xf32>, vector<2x288xf32> -> vector<2x288xf32>
    %28 = arith.addf %23, %27 : vector<2x288xf32>
    %c0_31 = arith.constant 0 : index
    %c19_32 = arith.constant 19 : index
    %29 = vector.load %arg12[%c0_31, %c19_32] : memref<4x326xf32, #tpu.memory_space<vmem>>, vector<4x288xf32>
    %c4 = arith.constant 4 : index
    %c0_33 = arith.constant 0 : index
    %c0_34 = arith.constant 0 : index
    %30 = vector.load %arg5[%c4, %c0_33, %c0_34] : memref<9x2x4xf32, #tpu.memory_space<vmem>>, vector<1x2x4xf32>
    %31 = vector.shape_cast %30 : vector<1x2x4xf32> to vector<2x4xf32>
    %cst_35 = arith.constant dense<0.000000e+00> : vector<2x288xf32>
    %32 = tpu.matmul %31, %29, %cst_35 {dimension_numbers = #tpu.dot_dimension_numbers<[1], [0], [0], [1], [0, 0, 1, 1], [], []>} : vector<2x4xf32>, vector<4x288xf32>, vector<2x288xf32> -> vector<2x288xf32>
    %33 = arith.addf %28, %32 : vector<2x288xf32>
    %c0_36 = arith.constant 0 : index
    %c20 = arith.constant 20 : index
    %34 = vector.load %arg12[%c0_36, %c20] : memref<4x326xf32, #tpu.memory_space<vmem>>, vector<4x288xf32>
    %c5 = arith.constant 5 : index
    %c0_37 = arith.constant 0 : index
    %c0_38 = arith.constant 0 : index
    %35 = vector.load %arg5[%c5, %c0_37, %c0_38] : memref<9x2x4xf32, #tpu.memory_space<vmem>>, vector<1x2x4xf32>
    %36 = vector.shape_cast %35 : vector<1x2x4xf32> to vector<2x4xf32>
    %cst_39 = arith.constant dense<0.000000e+00> : vector<2x288xf32>
    %37 = tpu.matmul %36, %34, %cst_39 {dimension_numbers = #tpu.dot_dimension_numbers<[1], [0], [0], [1], [0, 0, 1, 1], [], []>} : vector<2x4xf32>, vector<4x288xf32>, vector<2x288xf32> -> vector<2x288xf32>
    %38 = arith.addf %33, %37 : vector<2x288xf32>
    %c0_40 = arith.constant 0 : index
    %c36 = arith.constant 36 : index
    %39 = vector.load %arg12[%c0_40, %c36] : memref<4x326xf32, #tpu.memory_space<vmem>>, vector<4x288xf32>
    %c6 = arith.constant 6 : index
    %c0_41 = arith.constant 0 : index
    %c0_42 = arith.constant 0 : index
    %40 = vector.load %arg5[%c6, %c0_41, %c0_42] : memref<9x2x4xf32, #tpu.memory_space<vmem>>, vector<1x2x4xf32>
    %41 = vector.shape_cast %40 : vector<1x2x4xf32> to vector<2x4xf32>
    %cst_43 = arith.constant dense<0.000000e+00> : vector<2x288xf32>
    %42 = tpu.matmul %41, %39, %cst_43 {dimension_numbers = #tpu.dot_dimension_numbers<[1], [0], [0], [1], [0, 0, 1, 1], [], []>} : vector<2x4xf32>, vector<4x288xf32>, vector<2x288xf32> -> vector<2x288xf32>
    %43 = arith.addf %38, %42 : vector<2x288xf32>
    %c0_44 = arith.constant 0 : index
    %c37 = arith.constant 37 : index
    %44 = vector.load %arg12[%c0_44, %c37] : memref<4x326xf32, #tpu.memory_space<vmem>>, vector<4x288xf32>
    %c7 = arith.constant 7 : index
    %c0_45 = arith.constant 0 : index
    %c0_46 = arith.constant 0 : index
    %45 = vector.load %arg5[%c7, %c0_45, %c0_46] : memref<9x2x4xf32, #tpu.memory_space<vmem>>, vector<1x2x4xf32>
    %46 = vector.shape_cast %45 : vector<1x2x4xf32> to vector<2x4xf32>
    %cst_47 = arith.constant dense<0.000000e+00> : vector<2x288xf32>
    %47 = tpu.matmul %46, %44, %cst_47 {dimension_numbers = #tpu.dot_dimension_numbers<[1], [0], [0], [1], [0, 0, 1, 1], [], []>} : vector<2x4xf32>, vector<4x288xf32>, vector<2x288xf32> -> vector<2x288xf32>
    %48 = arith.addf %43, %47 : vector<2x288xf32>
    %c0_48 = arith.constant 0 : index
    %c38 = arith.constant 38 : index
    %49 = vector.load %arg12[%c0_48, %c38] : memref<4x326xf32, #tpu.memory_space<vmem>>, vector<4x288xf32>
    %c8 = arith.constant 8 : index
    %c0_49 = arith.constant 0 : index
    %c0_50 = arith.constant 0 : index
    %50 = vector.load %arg5[%c8, %c0_49, %c0_50] : memref<9x2x4xf32, #tpu.memory_space<vmem>>, vector<1x2x4xf32>
    %51 = vector.shape_cast %50 : vector<1x2x4xf32> to vector<2x4xf32>
    %cst_51 = arith.constant dense<0.000000e+00> : vector<2x288xf32>
    %52 = tpu.matmul %51, %49, %cst_51 {dimension_numbers = #tpu.dot_dimension_numbers<[1], [0], [0], [1], [0, 0, 1, 1], [], []>} : vector<2x4xf32>, vector<4x288xf32>, vector<2x288xf32> -> vector<2x288xf32>
    %53 = arith.addf %48, %52 : vector<2x288xf32>
    %c0_52 = arith.constant 0 : index
    %c0_53 = arith.constant 0 : index
    %54 = vector.load %arg6[%c0_52, %c0_53] : memref<2x1xf32, #tpu.memory_space<vmem>>, vector<2x1xf32>
    %55 = vector.broadcast %54 : vector<2x1xf32> to vector<2x288xf32>
    %56 = arith.addf %53, %55 : vector<2x288xf32>
    %57 = vector.broadcast %0 : vector<1x288xf32> to vector<2x288xf32>
    %58 = arith.mulf %56, %57 : vector<2x288xf32>
    %c0_54 = arith.constant 0 : index
    %c19_55 = arith.constant 19 : index
    %59 = vector.load %arg12[%c0_54, %c19_55] : memref<4x326xf32, #tpu.memory_space<vmem>>, vector<2x288xf32>
    tpu.vector_store %arg12[%c0_54, %c19_55], %58 {strides = array<i32>} : memref<4x326xf32, #tpu.memory_space<vmem>>, vector<2x288xf32>,
    %c0_56 = arith.constant 0 : index
    %c0_57 = arith.constant 0 : index
    %c0_58 = arith.constant 0 : index
    %60 = vector.load %arg2[%c0_56, %c0_57, %c0_58] : memref<1x2x288xf32, #tpu.memory_space<vmem>>, vector<1x2x288xf32>
    %61 = vector.shape_cast %60 : vector<1x2x288xf32> to vector<2x288xf32>
    %c2_59 = arith.constant 2 : index
    %c19_60 = arith.constant 19 : index
    %62 = vector.load %arg12[%c2_59, %c19_60] : memref<4x326xf32, #tpu.memory_space<vmem>>, vector<2x288xf32>
    tpu.vector_store %arg12[%c2_59, %c19_60], %61 {strides = array<i32>} : memref<4x326xf32, #tpu.memory_space<vmem>>, vector<2x288xf32>,
    %cst_61 = arith.constant 0.000000e+00 : f32
    %63 = vector.broadcast %cst_61 : f32 to vector<2x288xf32>
    %c0_62 = arith.constant 0 : index
    %c0_63 = arith.constant 0 : index
    %64 = vector.load %arg12[%c0_62, %c0_63] : memref<4x326xf32, #tpu.memory_space<vmem>>, vector<4x288xf32>
    %c0_64 = arith.constant 0 : index
    %c0_65 = arith.constant 0 : index
    %c0_66 = arith.constant 0 : index
    %65 = vector.load %arg7[%c0_64, %c0_65, %c0_66] : memref<9x2x4xf32, #tpu.memory_space<vmem>>, vector<1x2x4xf32>
    %66 = vector.shape_cast %65 : vector<1x2x4xf32> to vector<2x4xf32>
    %cst_67 = arith.constant dense<0.000000e+00> : vector<2x288xf32>
    %67 = tpu.matmul %66, %64, %cst_67 {dimension_numbers = #tpu.dot_dimension_numbers<[1], [0], [0], [1], [0, 0, 1, 1], [], []>} : vector<2x4xf32>, vector<4x288xf32>, vector<2x288xf32> -> vector<2x288xf32>
    %68 = arith.addf %63, %67 : vector<2x288xf32>
    %c0_68 = arith.constant 0 : index
    %c1_69 = arith.constant 1 : index
    %69 = vector.load %arg12[%c0_68, %c1_69] : memref<4x326xf32, #tpu.memory_space<vmem>>, vector<4x288xf32>
    %c1_70 = arith.constant 1 : index
    %c0_71 = arith.constant 0 : index
    %c0_72 = arith.constant 0 : index
    %70 = vector.load %arg7[%c1_70, %c0_71, %c0_72] : memref<9x2x4xf32, #tpu.memory_space<vmem>>, vector<1x2x4xf32>
    %71 = vector.shape_cast %70 : vector<1x2x4xf32> to vector<2x4xf32>
    %cst_73 = arith.constant dense<0.000000e+00> : vector<2x288xf32>
    %72 = tpu.matmul %71, %69, %cst_73 {dimension_numbers = #tpu.dot_dimension_numbers<[1], [0], [0], [1], [0, 0, 1, 1], [], []>} : vector<2x4xf32>, vector<4x288xf32>, vector<2x288xf32> -> vector<2x288xf32>
    %73 = arith.addf %68, %72 : vector<2x288xf32>
    %c0_74 = arith.constant 0 : index
    %c2_75 = arith.constant 2 : index
    %74 = vector.load %arg12[%c0_74, %c2_75] : memref<4x326xf32, #tpu.memory_space<vmem>>, vector<4x288xf32>
    %c2_76 = arith.constant 2 : index
    %c0_77 = arith.constant 0 : index
    %c0_78 = arith.constant 0 : index
    %75 = vector.load %arg7[%c2_76, %c0_77, %c0_78] : memref<9x2x4xf32, #tpu.memory_space<vmem>>, vector<1x2x4xf32>
    %76 = vector.shape_cast %75 : vector<1x2x4xf32> to vector<2x4xf32>
    %cst_79 = arith.constant dense<0.000000e+00> : vector<2x288xf32>
    %77 = tpu.matmul %76, %74, %cst_79 {dimension_numbers = #tpu.dot_dimension_numbers<[1], [0], [0], [1], [0, 0, 1, 1], [], []>} : vector<2x4xf32>, vector<4x288xf32>, vector<2x288xf32> -> vector<2x288xf32>
    %78 = arith.addf %73, %77 : vector<2x288xf32>
    %c0_80 = arith.constant 0 : index
    %c18_81 = arith.constant 18 : index
    %79 = vector.load %arg12[%c0_80, %c18_81] : memref<4x326xf32, #tpu.memory_space<vmem>>, vector<4x288xf32>
    %c3_82 = arith.constant 3 : index
    %c0_83 = arith.constant 0 : index
    %c0_84 = arith.constant 0 : index
    %80 = vector.load %arg7[%c3_82, %c0_83, %c0_84] : memref<9x2x4xf32, #tpu.memory_space<vmem>>, vector<1x2x4xf32>
    %81 = vector.shape_cast %80 : vector<1x2x4xf32> to vector<2x4xf32>
    %cst_85 = arith.constant dense<0.000000e+00> : vector<2x288xf32>
    %82 = tpu.matmul %81, %79, %cst_85 {dimension_numbers = #tpu.dot_dimension_numbers<[1], [0], [0], [1], [0, 0, 1, 1], [], []>} : vector<2x4xf32>, vector<4x288xf32>, vector<2x288xf32> -> vector<2x288xf32>
    %83 = arith.addf %78, %82 : vector<2x288xf32>
    %c0_86 = arith.constant 0 : index
    %c19_87 = arith.constant 19 : index
    %84 = vector.load %arg12[%c0_86, %c19_87] : memref<4x326xf32, #tpu.memory_space<vmem>>, vector<4x288xf32>
    %c4_88 = arith.constant 4 : index
    %c0_89 = arith.constant 0 : index
    %c0_90 = arith.constant 0 : index
    %85 = vector.load %arg7[%c4_88, %c0_89, %c0_90] : memref<9x2x4xf32, #tpu.memory_space<vmem>>, vector<1x2x4xf32>
    %86 = vector.shape_cast %85 : vector<1x2x4xf32> to vector<2x4xf32>
    %cst_91 = arith.constant dense<0.000000e+00> : vector<2x288xf32>
    %87 = tpu.matmul %86, %84, %cst_91 {dimension_numbers = #tpu.dot_dimension_numbers<[1], [0], [0], [1], [0, 0, 1, 1], [], []>} : vector<2x4xf32>, vector<4x288xf32>, vector<2x288xf32> -> vector<2x288xf32>
    %88 = arith.addf %83, %87 : vector<2x288xf32>
    %c0_92 = arith.constant 0 : index
    %c20_93 = arith.constant 20 : index
    %89 = vector.load %arg12[%c0_92, %c20_93] : memref<4x326xf32, #tpu.memory_space<vmem>>, vector<4x288xf32>
    %c5_94 = arith.constant 5 : index
    %c0_95 = arith.constant 0 : index
    %c0_96 = arith.constant 0 : index
    %90 = vector.load %arg7[%c5_94, %c0_95, %c0_96] : memref<9x2x4xf32, #tpu.memory_space<vmem>>, vector<1x2x4xf32>
    %91 = vector.shape_cast %90 : vector<1x2x4xf32> to vector<2x4xf32>
    %cst_97 = arith.constant dense<0.000000e+00> : vector<2x288xf32>
    %92 = tpu.matmul %91, %89, %cst_97 {dimension_numbers = #tpu.dot_dimension_numbers<[1], [0], [0], [1], [0, 0, 1, 1], [], []>} : vector<2x4xf32>, vector<4x288xf32>, vector<2x288xf32> -> vector<2x288xf32>
    %93 = arith.addf %88, %92 : vector<2x288xf32>
    %c0_98 = arith.constant 0 : index
    %c36_99 = arith.constant 36 : index
    %94 = vector.load %arg12[%c0_98, %c36_99] : memref<4x326xf32, #tpu.memory_space<vmem>>, vector<4x288xf32>
    %c6_100 = arith.constant 6 : index
    %c0_101 = arith.constant 0 : index
    %c0_102 = arith.constant 0 : index
    %95 = vector.load %arg7[%c6_100, %c0_101, %c0_102] : memref<9x2x4xf32, #tpu.memory_space<vmem>>, vector<1x2x4xf32>
    %96 = vector.shape_cast %95 : vector<1x2x4xf32> to vector<2x4xf32>
    %cst_103 = arith.constant dense<0.000000e+00> : vector<2x288xf32>
    %97 = tpu.matmul %96, %94, %cst_103 {dimension_numbers = #tpu.dot_dimension_numbers<[1], [0], [0], [1], [0, 0, 1, 1], [], []>} : vector<2x4xf32>, vector<4x288xf32>, vector<2x288xf32> -> vector<2x288xf32>
    %98 = arith.addf %93, %97 : vector<2x288xf32>
    %c0_104 = arith.constant 0 : index
    %c37_105 = arith.constant 37 : index
    %99 = vector.load %arg12[%c0_104, %c37_105] : memref<4x326xf32, #tpu.memory_space<vmem>>, vector<4x288xf32>
    %c7_106 = arith.constant 7 : index
    %c0_107 = arith.constant 0 : index
    %c0_108 = arith.constant 0 : index
    %100 = vector.load %arg7[%c7_106, %c0_107, %c0_108] : memref<9x2x4xf32, #tpu.memory_space<vmem>>, vector<1x2x4xf32>
    %101 = vector.shape_cast %100 : vector<1x2x4xf32> to vector<2x4xf32>
    %cst_109 = arith.constant dense<0.000000e+00> : vector<2x288xf32>
    %102 = tpu.matmul %101, %99, %cst_109 {dimension_numbers = #tpu.dot_dimension_numbers<[1], [0], [0], [1], [0, 0, 1, 1], [], []>} : vector<2x4xf32>, vector<4x288xf32>, vector<2x288xf32> -> vector<2x288xf32>
    %103 = arith.addf %98, %102 : vector<2x288xf32>
    %c0_110 = arith.constant 0 : index
    %c38_111 = arith.constant 38 : index
    %104 = vector.load %arg12[%c0_110, %c38_111] : memref<4x326xf32, #tpu.memory_space<vmem>>, vector<4x288xf32>
    %c8_112 = arith.constant 8 : index
    %c0_113 = arith.constant 0 : index
    %c0_114 = arith.constant 0 : index
    %105 = vector.load %arg7[%c8_112, %c0_113, %c0_114] : memref<9x2x4xf32, #tpu.memory_space<vmem>>, vector<1x2x4xf32>
    %106 = vector.shape_cast %105 : vector<1x2x4xf32> to vector<2x4xf32>
    %cst_115 = arith.constant dense<0.000000e+00> : vector<2x288xf32>
    %107 = tpu.matmul %106, %104, %cst_115 {dimension_numbers = #tpu.dot_dimension_numbers<[1], [0], [0], [1], [0, 0, 1, 1], [], []>} : vector<2x4xf32>, vector<4x288xf32>, vector<2x288xf32> -> vector<2x288xf32>
    %108 = arith.addf %103, %107 : vector<2x288xf32>
    %c0_116 = arith.constant 0 : index
    %c0_117 = arith.constant 0 : index
    %109 = vector.load %arg8[%c0_116, %c0_117] : memref<2x1xf32, #tpu.memory_space<vmem>>, vector<2x1xf32>
    %110 = vector.broadcast %109 : vector<2x1xf32> to vector<2x288xf32>
    %111 = arith.addf %108, %110 : vector<2x288xf32>
    %cst_118 = arith.constant 0.000000e+00 : f32
    %112 = vector.broadcast %cst_118 : f32 to vector<2x288xf32>
    %113 = arith.maximumf %111, %112 : vector<2x288xf32>
    %114 = vector.broadcast %0 : vector<1x288xf32> to vector<2x288xf32>
    %115 = arith.mulf %113, %114 : vector<2x288xf32>
    %c0_119 = arith.constant 0 : index
    %c19_120 = arith.constant 19 : index
    %116 = vector.load %arg12[%c0_119, %c19_120] : memref<4x326xf32, #tpu.memory_space<vmem>>, vector<2x288xf32>
    tpu.vector_store %arg12[%c0_119, %c19_120], %115 {strides = array<i32>} : memref<4x326xf32, #tpu.memory_space<vmem>>, vector<2x288xf32>,
    %cst_121 = arith.constant 0.000000e+00 : f32
    %117 = vector.broadcast %cst_121 : f32 to vector<2x288xf32>
    %c0_122 = arith.constant 0 : index
    %c0_123 = arith.constant 0 : index
    %118 = vector.load %arg12[%c0_122, %c0_123] : memref<4x326xf32, #tpu.memory_space<vmem>>, vector<2x288xf32>
    %c0_124 = arith.constant 0 : index
    %c0_125 = arith.constant 0 : index
    %c0_126 = arith.constant 0 : index
    %119 = vector.load %arg9[%c0_124, %c0_125, %c0_126] : memref<9x2x2xf32, #tpu.memory_space<vmem>>, vector<1x2x2xf32>
    %120 = vector.shape_cast %119 : vector<1x2x2xf32> to vector<2x2xf32>
    %cst_127 = arith.constant dense<0.000000e+00> : vector<2x288xf32>
    %121 = tpu.matmul %120, %118, %cst_127 {dimension_numbers = #tpu.dot_dimension_numbers<[1], [0], [0], [1], [0, 0, 1, 1], [], []>} : vector<2x2xf32>, vector<2x288xf32>, vector<2x288xf32> -> vector<2x288xf32>
    %122 = arith.addf %117, %121 : vector<2x288xf32>
    %c0_128 = arith.constant 0 : index
    %c1_129 = arith.constant 1 : index
    %123 = vector.load %arg12[%c0_128, %c1_129] : memref<4x326xf32, #tpu.memory_space<vmem>>, vector<2x288xf32>
    %c1_130 = arith.constant 1 : index
    %c0_131 = arith.constant 0 : index
    %c0_132 = arith.constant 0 : index
    %124 = vector.load %arg9[%c1_130, %c0_131, %c0_132] : memref<9x2x2xf32, #tpu.memory_space<vmem>>, vector<1x2x2xf32>
    %125 = vector.shape_cast %124 : vector<1x2x2xf32> to vector<2x2xf32>
    %cst_133 = arith.constant dense<0.000000e+00> : vector<2x288xf32>
    %126 = tpu.matmul %125, %123, %cst_133 {dimension_numbers = #tpu.dot_dimension_numbers<[1], [0], [0], [1], [0, 0, 1, 1], [], []>} : vector<2x2xf32>, vector<2x288xf32>, vector<2x288xf32> -> vector<2x288xf32>
    %127 = arith.addf %122, %126 : vector<2x288xf32>
    %c0_134 = arith.constant 0 : index
    %c2_135 = arith.constant 2 : index
    %128 = vector.load %arg12[%c0_134, %c2_135] : memref<4x326xf32, #tpu.memory_space<vmem>>, vector<2x288xf32>
    %c2_136 = arith.constant 2 : index
    %c0_137 = arith.constant 0 : index
    %c0_138 = arith.constant 0 : index
    %129 = vector.load %arg9[%c2_136, %c0_137, %c0_138] : memref<9x2x2xf32, #tpu.memory_space<vmem>>, vector<1x2x2xf32>
    %130 = vector.shape_cast %129 : vector<1x2x2xf32> to vector<2x2xf32>
    %cst_139 = arith.constant dense<0.000000e+00> : vector<2x288xf32>
    %131 = tpu.matmul %130, %128, %cst_139 {dimension_numbers = #tpu.dot_dimension_numbers<[1], [0], [0], [1], [0, 0, 1, 1], [], []>} : vector<2x2xf32>, vector<2x288xf32>, vector<2x288xf32> -> vector<2x288xf32>
    %132 = arith.addf %127, %131 : vector<2x288xf32>
    %c0_140 = arith.constant 0 : index
    %c18_141 = arith.constant 18 : index
    %133 = vector.load %arg12[%c0_140, %c18_141] : memref<4x326xf32, #tpu.memory_space<vmem>>, vector<2x288xf32>
    %c3_142 = arith.constant 3 : index
    %c0_143 = arith.constant 0 : index
    %c0_144 = arith.constant 0 : index
    %134 = vector.load %arg9[%c3_142, %c0_143, %c0_144] : memref<9x2x2xf32, #tpu.memory_space<vmem>>, vector<1x2x2xf32>
    %135 = vector.shape_cast %134 : vector<1x2x2xf32> to vector<2x2xf32>
    %cst_145 = arith.constant dense<0.000000e+00> : vector<2x288xf32>
    %136 = tpu.matmul %135, %133, %cst_145 {dimension_numbers = #tpu.dot_dimension_numbers<[1], [0], [0], [1], [0, 0, 1, 1], [], []>} : vector<2x2xf32>, vector<2x288xf32>, vector<2x288xf32> -> vector<2x288xf32>
    %137 = arith.addf %132, %136 : vector<2x288xf32>
    %c0_146 = arith.constant 0 : index
    %c19_147 = arith.constant 19 : index
    %138 = vector.load %arg12[%c0_146, %c19_147] : memref<4x326xf32, #tpu.memory_space<vmem>>, vector<2x288xf32>
    %c4_148 = arith.constant 4 : index
    %c0_149 = arith.constant 0 : index
    %c0_150 = arith.constant 0 : index
    %139 = vector.load %arg9[%c4_148, %c0_149, %c0_150] : memref<9x2x2xf32, #tpu.memory_space<vmem>>, vector<1x2x2xf32>
    %140 = vector.shape_cast %139 : vector<1x2x2xf32> to vector<2x2xf32>
    %cst_151 = arith.constant dense<0.000000e+00> : vector<2x288xf32>
    %141 = tpu.matmul %140, %138, %cst_151 {dimension_numbers = #tpu.dot_dimension_numbers<[1], [0], [0], [1], [0, 0, 1, 1], [], []>} : vector<2x2xf32>, vector<2x288xf32>, vector<2x288xf32> -> vector<2x288xf32>
    %142 = arith.addf %137, %141 : vector<2x288xf32>
    %c0_152 = arith.constant 0 : index
    %c20_153 = arith.constant 20 : index
    %143 = vector.load %arg12[%c0_152, %c20_153] : memref<4x326xf32, #tpu.memory_space<vmem>>, vector<2x288xf32>
    %c5_154 = arith.constant 5 : index
    %c0_155 = arith.constant 0 : index
    %c0_156 = arith.constant 0 : index
    %144 = vector.load %arg9[%c5_154, %c0_155, %c0_156] : memref<9x2x2xf32, #tpu.memory_space<vmem>>, vector<1x2x2xf32>
    %145 = vector.shape_cast %144 : vector<1x2x2xf32> to vector<2x2xf32>
    %cst_157 = arith.constant dense<0.000000e+00> : vector<2x288xf32>
    %146 = tpu.matmul %145, %143, %cst_157 {dimension_numbers = #tpu.dot_dimension_numbers<[1], [0], [0], [1], [0, 0, 1, 1], [], []>} : vector<2x2xf32>, vector<2x288xf32>, vector<2x288xf32> -> vector<2x288xf32>
    %147 = arith.addf %142, %146 : vector<2x288xf32>
    %c0_158 = arith.constant 0 : index
    %c36_159 = arith.constant 36 : index
    %148 = vector.load %arg12[%c0_158, %c36_159] : memref<4x326xf32, #tpu.memory_space<vmem>>, vector<2x288xf32>
    %c6_160 = arith.constant 6 : index
    %c0_161 = arith.constant 0 : index
    %c0_162 = arith.constant 0 : index
    %149 = vector.load %arg9[%c6_160, %c0_161, %c0_162] : memref<9x2x2xf32, #tpu.memory_space<vmem>>, vector<1x2x2xf32>
    %150 = vector.shape_cast %149 : vector<1x2x2xf32> to vector<2x2xf32>
    %cst_163 = arith.constant dense<0.000000e+00> : vector<2x288xf32>
    %151 = tpu.matmul %150, %148, %cst_163 {dimension_numbers = #tpu.dot_dimension_numbers<[1], [0], [0], [1], [0, 0, 1, 1], [], []>} : vector<2x2xf32>, vector<2x288xf32>, vector<2x288xf32> -> vector<2x288xf32>
    %152 = arith.addf %147, %151 : vector<2x288xf32>
    %c0_164 = arith.constant 0 : index
    %c37_165 = arith.constant 37 : index
    %153 = vector.load %arg12[%c0_164, %c37_165] : memref<4x326xf32, #tpu.memory_space<vmem>>, vector<2x288xf32>
    %c7_166 = arith.constant 7 : index
    %c0_167 = arith.constant 0 : index
    %c0_168 = arith.constant 0 : index
    %154 = vector.load %arg9[%c7_166, %c0_167, %c0_168] : memref<9x2x2xf32, #tpu.memory_space<vmem>>, vector<1x2x2xf32>
    %155 = vector.shape_cast %154 : vector<1x2x2xf32> to vector<2x2xf32>
    %cst_169 = arith.constant dense<0.000000e+00> : vector<2x288xf32>
    %156 = tpu.matmul %155, %153, %cst_169 {dimension_numbers = #tpu.dot_dimension_numbers<[1], [0], [0], [1], [0, 0, 1, 1], [], []>} : vector<2x2xf32>, vector<2x288xf32>, vector<2x288xf32> -> vector<2x288xf32>
    %157 = arith.addf %152, %156 : vector<2x288xf32>
    %c0_170 = arith.constant 0 : index
    %c38_171 = arith.constant 38 : index
    %158 = vector.load %arg12[%c0_170, %c38_171] : memref<4x326xf32, #tpu.memory_space<vmem>>, vector<2x288xf32>
    %c8_172 = arith.constant 8 : index
    %c0_173 = arith.constant 0 : index
    %c0_174 = arith.constant 0 : index
    %159 = vector.load %arg9[%c8_172, %c0_173, %c0_174] : memref<9x2x2xf32, #tpu.memory_space<vmem>>, vector<1x2x2xf32>
    %160 = vector.shape_cast %159 : vector<1x2x2xf32> to vector<2x2xf32>
    %cst_175 = arith.constant dense<0.000000e+00> : vector<2x288xf32>
    %161 = tpu.matmul %160, %158, %cst_175 {dimension_numbers = #tpu.dot_dimension_numbers<[1], [0], [0], [1], [0, 0, 1, 1], [], []>} : vector<2x2xf32>, vector<2x288xf32>, vector<2x288xf32> -> vector<2x288xf32>
    %162 = arith.addf %157, %161 : vector<2x288xf32>
    %c0_176 = arith.constant 0 : index
    %c0_177 = arith.constant 0 : index
    %163 = vector.load %arg10[%c0_176, %c0_177] : memref<2x1xf32, #tpu.memory_space<vmem>>, vector<2x1xf32>
    %164 = vector.broadcast %163 : vector<2x1xf32> to vector<2x288xf32>
    %165 = arith.addf %162, %164 : vector<2x288xf32>
    %cst_178 = arith.constant 0.000000e+00 : f32
    %166 = vector.broadcast %cst_178 : f32 to vector<2x288xf32>
    %167 = arith.maximumf %165, %166 : vector<2x288xf32>
    %c0_179 = arith.constant 0 : index
    %c0_180 = arith.constant 0 : index
    %c0_181 = arith.constant 0 : index
    %168 = vector.load %arg11[%c0_179, %c0_180, %c0_181] : memref<1x2x288xf32, #tpu.memory_space<vmem>>, vector<1x2x288xf32>
    %169 = vector.shape_cast %168 : vector<1x2x288xf32> to vector<2x288xf32>
    %170 = vector.shape_cast %167 : vector<2x288xf32> to vector<1x2x288xf32>
    tpu.vector_store %arg11[%c0_179, %c0_180, %c0_181], %170 {strides = array<i32>} : memref<1x2x288xf32, #tpu.memory_space<vmem>>, vector<1x2x288xf32>,
    return
  }
  func.func @transform_0(%arg0: i32) -> (i32, i32, i32) {
    %c0_i32 = arith.constant 0 : i32
    %c0_i32_0 = arith.constant 0 : i32
    %c0_i32_1 = arith.constant 0 : i32
    return %arg0, %c0_i32, %c0_i32_0 : i32, i32, i32
  }
  func.func @transform_1(%arg0: i32) -> (i32, i32, i32) {
    %c0_i32 = arith.constant 0 : i32
    %c0_i32_0 = arith.constant 0 : i32
    %c0_i32_1 = arith.constant 0 : i32
    return %arg0, %c0_i32, %c0_i32_0 : i32, i32, i32
  }
  func.func @transform_2(%arg0: i32) -> (i32, i32) {
    %c0_i32 = arith.constant 0 : i32
    %c0_i32_0 = arith.constant 0 : i32
    %c0_i32_1 = arith.constant 0 : i32
    return %c0_i32, %c0_i32_0 : i32, i32
  }
  func.func @transform_3(%arg0: i32) -> (i32, i32) {
    %c0_i32 = arith.constant 0 : i32
    %c0_i32_0 = arith.constant 0 : i32
    %c0_i32_1 = arith.constant 0 : i32
    return %c0_i32, %c0_i32_0 : i32, i32
  }
  func.func @transform_4(%arg0: i32) -> (i32, i32, i32) {
    %c0_i32 = arith.constant 0 : i32
    %c0_i32_0 = arith.constant 0 : i32
    %c0_i32_1 = arith.constant 0 : i32
    %c0_i32_2 = arith.constant 0 : i32
    return %c0_i32, %c0_i32_0, %c0_i32_1 : i32, i32, i32
  }
  func.func @transform_5(%arg0: i32) -> (i32, i32) {
    %c0_i32 = arith.constant 0 : i32
    %c0_i32_0 = arith.constant 0 : i32
    %c0_i32_1 = arith.constant 0 : i32
    return %c0_i32, %c0_i32_0 : i32, i32
  }
  func.func @transform_6(%arg0: i32) -> (i32, i32, i32) {
    %c0_i32 = arith.constant 0 : i32
    %c0_i32_0 = arith.constant 0 : i32
    %c0_i32_1 = arith.constant 0 : i32
    %c0_i32_2 = arith.constant 0 : i32
    return %c0_i32, %c0_i32_0, %c0_i32_1 : i32, i32, i32
  }
  func.func @transform_7(%arg0: i32) -> (i32, i32) {
    %c0_i32 = arith.constant 0 : i32
    %c0_i32_0 = arith.constant 0 : i32
    %c0_i32_1 = arith.constant 0 : i32
    return %c0_i32, %c0_i32_0 : i32, i32
  }
  func.func @transform_8(%arg0: i32) -> (i32, i32, i32) {
    %c0_i32 = arith.constant 0 : i32
    %c0_i32_0 = arith.constant 0 : i32
    %c0_i32_1 = arith.constant 0 : i32
    %c0_i32_2 = arith.constant 0 : i32
    return %c0_i32, %c0_i32_0, %c0_i32_1 : i32, i32, i32
  }
  func.func @transform_9(%arg0: i32) -> (i32, i32) {
    %c0_i32 = arith.constant 0 : i32
    %c0_i32_0 = arith.constant 0 : i32
    %c0_i32_1 = arith.constant 0 : i32
    return %c0_i32, %c0_i32_0 : i32, i32
  }
  func.func @transform_10(%arg0: i32) -> (i32, i32, i32) {
    %c0_i32 = arith.constant 0 : i32
    %c0_i32_0 = arith.constant 0 : i32
    %c0_i32_1 = arith.constant 0 : i32
    return %arg0, %c0_i32, %c0_i32_0 : i32, i32, i32
  }
}

</mosaic_0001>

<llo_original>
// kernel: expanding_block_forward.1
$region0: #{expanding_block_forward.1}
  #allocation0 [shape = 'u32[]', space=smem, size = 0x4, offset = 0x4, fixed_abs, tag = 'smem constant byte address 0x4 - core index']
  #allocation1 [shape = 'u32[144,128]{1,0:T(1,128)}', space=vmem, size = 0x12000, scoped, tag = 'internal scratch']
  #allocation2 [shape = 'f32[4,326]{1,0:T(4,128)}', space=vmem, size = 0x1800, scoped, tag = 'scratch operand']
  %s0 = inlined_call_operand.vmem [shape: f32[2,4,64], index: 0, kind: input, shape index: {}]
  %s1 = inlined_call_operand.vmem [shape: f32[2,2,288], index: 1, kind: input, shape index: {}]
  %s2 = inlined_call_operand.vmem [shape: f32[64,288], index: 2, kind: input, shape index: {}]
  %s3 = inlined_call_operand.vmem [shape: f32[1,288], index: 3, kind: input, shape index: {}]
  %s4 = inlined_call_operand.vmem [shape: f32[9,2,4], index: 4, kind: input, shape index: {}]
  %s5 = inlined_call_operand.vmem [shape: f32[2,1], index: 5, kind: input, shape index: {}]
  %s6 = inlined_call_operand.vmem [shape: f32[9,2,4], index: 6, kind: input, shape index: {}]
  %s7 = inlined_call_operand.vmem [shape: f32[2,1], index: 7, kind: input, shape index: {}]
  %s8 = inlined_call_operand.vmem [shape: f32[9,2,2], index: 8, kind: input, shape index: {}]
  %s9 = inlined_call_operand.vmem [shape: f32[2,1], index: 9, kind: input, shape index: {}]
  %s10 = inlined_call_operand.vmem [shape: f32[2,2,288], index: 10, kind: output, shape index: {}]
  %s11 = sld [smem:[#allocation0]]
  $region73: #{expanding_block_forward.1} parent=0
    _
  %s13 = ssub.s32 1, %s11
  %s14 = scalar_select 0, %s13, %s11
  loop: start=0, step=1, limit=4
  $region2: #{expanding_block_forward.1} parent=0 // loop_pre_header
    _
  $region3: #{expanding_block_forward.1} parent=0 // loop_header
    %s16 = sphi 0, %s20
    %p17 = scmp.ge.s32.totalorder %s16, 4
    %s26 = sphi 0, %s28
    %s29 = sphi 0, %s26
    %s30 = sphi 0, %s29
    %s46 = sphi 0, %s30
    %s52 = sphi 0, %s54
    %s55 = sphi 0, %s52
    %s56 = sphi 0, %s55
    %s72 = sphi 0, %s56
    %s76 = sphi 0, %s76
    %s78 = sphi 0, %s76
    %s79 = sphi 0, %s78
    %s93 = sphi 0, %s79
    %s97 = sphi 0, %s97
    %s99 = sphi 0, %s97
    %s100 = sphi 0, %s99
    %s114 = sphi 0, %s100
    %s118 = sphi 0, %s118
    %s120 = sphi 0, %s118
    %s121 = sphi 0, %s120
    %s135 = sphi 0, %s121
    %s139 = sphi 0, %s139
    %s141 = sphi 0, %s139
    %s142 = sphi 0, %s141
    %s156 = sphi 0, %s142
    %s160 = sphi 0, %s160
    %s162 = sphi 0, %s160
    %s163 = sphi 0, %s162
    %s177 = sphi 0, %s163
    %s181 = sphi 0, %s181
    %s183 = sphi 0, %s181
    %s184 = sphi 0, %s183
    %s198 = sphi 0, %s184
    %s202 = sphi 0, %s202
    %s204 = sphi 0, %s202
    %s205 = sphi 0, %s204
    %s219 = sphi 0, %s205
    %s223 = sphi 0, %s223
    %s225 = sphi 0, %s223
    %s226 = sphi 0, %s225
    %s240 = sphi 0, %s226
    %s246 = sphi 0, %s248
    %s249 = sphi 0, %s246
    %s250 = sphi 0, %s249
    %s266 = sphi 0, %s250
  $region4: #{expanding_block_forward.1} parent=0 // loop_header_branch
    %19 = sbr.rel (%p17) target = $region8
  $region5: #{expanding_block_forward.1} parent=0 // loop_body
    %s21 = ssub.s32 %s16, 1
    %s22 = ssub.s32 %s16, 2
    %s23 = sadd.s32 %s16, 1
    %s24 = ssub.s32 %s16, %s23
    %p25 = scmp.eq.s32.totalorder %s24, 0
    %s27 = sadd.s32 %s26, 1
    %s28 = scalar_select %p25, %s26, %s27
    %p31 = pneg %p25
    %p32 = scmp.eq.s32.totalorder %s16, 1
    %p33 = por %p31, %p32
    %p34 = scmp.ne.s32.totalorder %s26, %s29
    %p35 = scmp.eq.s32.totalorder %s16, 0
    %p36 = por %p34, %p35
    %p37 = scmp.ne.s32.totalorder %s26, %s29
    %p38 = scmp.eq.s32.totalorder %s21, 1
    %p39 = por %p37, %p38
    %p40 = scmp.ne.s32.totalorder %s29, %s30
    %p41 = scmp.eq.s32.totalorder %s21, 0
    %p42 = por %p40, %p41
    %p43 = scmp.ne.s32.totalorder %s29, %s30
    %p44 = scmp.eq.s32.totalorder %s22, 1
    %p45 = por %p43, %p44
    %p47 = scmp.ne.s32.totalorder %s30, %s46
    %p48 = scmp.eq.s32.totalorder %s22, 0
    %p49 = por %p47, %p48
    %s50 = ssub.s32 %s16, %s23
    %p51 = scmp.eq.s32.totalorder %s50, 0
    %s53 = sadd.s32 %s52, 1
    %s54 = scalar_select %p51, %s52, %s53
    %p57 = pneg %p51
    %p58 = scmp.eq.s32.totalorder %s16, 1
    %p59 = por %p57, %p58
    %p60 = scmp.ne.s32.totalorder %s52, %s55
    %p61 = scmp.eq.s32.totalorder %s16, 0
    %p62 = por %p60, %p61
    %p63 = scmp.ne.s32.totalorder %s52, %s55
    %p64 = scmp.eq.s32.totalorder %s21, 1
    %p65 = por %p63, %p64
    %p66 = scmp.ne.s32.totalorder %s55, %s56
    %p67 = scmp.eq.s32.totalorder %s21, 0
    %p68 = por %p66, %p67
    %p69 = scmp.ne.s32.totalorder %s55, %s56
    %p70 = scmp.eq.s32.totalorder %s22, 1
    %p71 = por %p69, %p70
    %p73 = scmp.ne.s32.totalorder %s56, %s72
    %p74 = scmp.eq.s32.totalorder %s22, 0
    %p75 = por %p73, %p74
    %s77 = sadd.s32 %s76, 1
    %p80 = scmp.eq.s32.totalorder %s16, 1
    %p81 = scmp.ne.s32.totalorder %s76, %s78
    %p82 = scmp.eq.s32.totalorder %s16, 0
    %p83 = por %p81, %p82
    %p84 = scmp.ne.s32.totalorder %s76, %s78
    %p85 = scmp.eq.s32.totalorder %s21, 1
    %p86 = por %p84, %p85
    %p87 = scmp.ne.s32.totalorder %s78, %s79
    %p88 = scmp.eq.s32.totalorder %s21, 0
    %p89 = por %p87, %p88
    %p90 = scmp.ne.s32.totalorder %s78, %s79
    %p91 = scmp.eq.s32.totalorder %s22, 1
    %p92 = por %p90, %p91
    %p94 = scmp.ne.s32.totalorder %s79, %s93
    %p95 = scmp.eq.s32.totalorder %s22, 0
    %p96 = por %p94, %p95
    %s98 = sadd.s32 %s97, 1
    %p101 = scmp.eq.s32.totalorder %s16, 1
    %p102 = scmp.ne.s32.totalorder %s97, %s99
    %p103 = scmp.eq.s32.totalorder %s16, 0
    %p104 = por %p102, %p103
    %p105 = scmp.ne.s32.totalorder %s97, %s99
    %p106 = scmp.eq.s32.totalorder %s21, 1
    %p107 = por %p105, %p106
    %p108 = scmp.ne.s32.totalorder %s99, %s100
    %p109 = scmp.eq.s32.totalorder %s21, 0
    %p110 = por %p108, %p109
    %p111 = scmp.ne.s32.totalorder %s99, %s100
    %p112 = scmp.eq.s32.totalorder %s22, 1
    %p113 = por %p111, %p112
    %p115 = scmp.ne.s32.totalorder %s100, %s114
    %p116 = scmp.eq.s32.totalorder %s22, 0
    %p117 = por %p115, %p116
    %s119 = sadd.s32 %s118, 1
    %p122 = scmp.eq.s32.totalorder %s16, 1
    %p123 = scmp.ne.s32.totalorder %s118, %s120
    %p124 = scmp.eq.s32.totalorder %s16, 0
    %p125 = por %p123, %p124
    %p126 = scmp.ne.s32.totalorder %s118, %s120
    %p127 = scmp.eq.s32.totalorder %s21, 1
    %p128 = por %p126, %p127
    %p129 = scmp.ne.s32.totalorder %s120, %s121
    %p130 = scmp.eq.s32.totalorder %s21, 0
    %p131 = por %p129, %p130
    %p132 = scmp.ne.s32.totalorder %s120, %s121
    %p133 = scmp.eq.s32.totalorder %s22, 1
    %p134 = por %p132, %p133
    %p136 = scmp.ne.s32.totalorder %s121, %s135
    %p137 = scmp.eq.s32.totalorder %s22, 0
    %p138 = por %p136, %p137
    %s140 = sadd.s32 %s139, 1
    %p143 = scmp.eq.s32.totalorder %s16, 1
    %p144 = scmp.ne.s32.totalorder %s139, %s141
    %p145 = scmp.eq.s32.totalorder %s16, 0
    %p146 = por %p144, %p145
    %p147 = scmp.ne.s32.totalorder %s139, %s141
    %p148 = scmp.eq.s32.totalorder %s21, 1
    %p149 = por %p147, %p148
    %p150 = scmp.ne.s32.totalorder %s141, %s142
    %p151 = scmp.eq.s32.totalorder %s21, 0
    %p152 = por %p150, %p151
    %p153 = scmp.ne.s32.totalorder %s141, %s142
    %p154 = scmp.eq.s32.totalorder %s22, 1
    %p155 = por %p153, %p154
    %p157 = scmp.ne.s32.totalorder %s142, %s156
    %p158 = scmp.eq.s32.totalorder %s22, 0
    %p159 = por %p157, %p158
    %s161 = sadd.s32 %s160, 1
    %p164 = scmp.eq.s32.totalorder %s16, 1
    %p165 = scmp.ne.s32.totalorder %s160, %s162
    %p166 = scmp.eq.s32.totalorder %s16, 0
    %p167 = por %p165, %p166
    %p168 = scmp.ne.s32.totalorder %s160, %s162
    %p169 = scmp.eq.s32.totalorder %s21, 1
    %p170 = por %p168, %p169
    %p171 = scmp.ne.s32.totalorder %s162, %s163
    %p172 = scmp.eq.s32.totalorder %s21, 0
    %p173 = por %p171, %p172
    %p174 = scmp.ne.s32.totalorder %s162, %s163
    %p175 = scmp.eq.s32.totalorder %s22, 1
    %p176 = por %p174, %p175
    %p178 = scmp.ne.s32.totalorder %s163, %s177
    %p179 = scmp.eq.s32.totalorder %s22, 0
    %p180 = por %p178, %p179
    %s182 = sadd.s32 %s181, 1
    %p185 = scmp.eq.s32.totalorder %s16, 1
    %p186 = scmp.ne.s32.totalorder %s181, %s183
    %p187 = scmp.eq.s32.totalorder %s16, 0
    %p188 = por %p186, %p187
    %p189 = scmp.ne.s32.totalorder %s181, %s183
    %p190 = scmp.eq.s32.totalorder %s21, 1
    %p191 = por %p189, %p190
    %p192 = scmp.ne.s32.totalorder %s183, %s184
    %p193 = scmp.eq.s32.totalorder %s21, 0
    %p194 = por %p192, %p193
    %p195 = scmp.ne.s32.totalorder %s183, %s184
    %p196 = scmp.eq.s32.totalorder %s22, 1
    %p197 = por %p195, %p196
    %p199 = scmp.ne.s32.totalorder %s184, %s198
    %p200 = scmp.eq.s32.totalorder %s22, 0
    %p201 = por %p199, %p200
    %s203 = sadd.s32 %s202, 1
    %p206 = scmp.eq.s32.totalorder %s16, 1
    %p207 = scmp.ne.s32.totalorder %s202, %s204
    %p208 = scmp.eq.s32.totalorder %s16, 0
    %p209 = por %p207, %p208
    %p210 = scmp.ne.s32.totalorder %s202, %s204
    %p211 = scmp.eq.s32.totalorder %s21, 1
    %p212 = por %p210, %p211
    %p213 = scmp.ne.s32.totalorder %s204, %s205
    %p214 = scmp.eq.s32.totalorder %s21, 0
    %p215 = por %p213, %p214
    %p216 = scmp.ne.s32.totalorder %s204, %s205
    %p217 = scmp.eq.s32.totalorder %s22, 1
    %p218 = por %p216, %p217
    %p220 = scmp.ne.s32.totalorder %s205, %s219
    %p221 = scmp.eq.s32.totalorder %s22, 0
    %p222 = por %p220, %p221
    %s224 = sadd.s32 %s223, 1
    %p227 = scmp.eq.s32.totalorder %s16, 1
    %p228 = scmp.ne.s32.totalorder %s223, %s225
    %p229 = scmp.eq.s32.totalorder %s16, 0
    %p230 = por %p228, %p229
    %p231 = scmp.ne.s32.totalorder %s223, %s225
    %p232 = scmp.eq.s32.totalorder %s21, 1
    %p233 = por %p231, %p232
    %p234 = scmp.ne.s32.totalorder %s225, %s226
    %p235 = scmp.eq.s32.totalorder %s21, 0
    %p236 = por %p234, %p235
    %p237 = scmp.ne.s32.totalorder %s225, %s226
    %p238 = scmp.eq.s32.totalorder %s22, 1
    %p239 = por %p237, %p238
    %p241 = scmp.ne.s32.totalorder %s226, %s240
    %p242 = scmp.eq.s32.totalorder %s22, 0
    %p243 = por %p241, %p242
    %s244 = ssub.s32 %s16, %s23
    %p245 = scmp.eq.s32.totalorder %s244, 0
    %s247 = sadd.s32 %s246, 1
    %s248 = scalar_select %p245, %s246, %s247
    %p251 = pneg %p245
    %p252 = scmp.eq.s32.totalorder %s16, 1
    %p253 = por %p251, %p252
    %p254 = scmp.ne.s32.totalorder %s246, %s249
    %p255 = scmp.eq.s32.totalorder %s16, 0
    %p256 = por %p254, %p255
    %p257 = scmp.ne.s32.totalorder %s246, %s249
    %p258 = scmp.eq.s32.totalorder %s21, 1
    %p259 = por %p257, %p258
    %p260 = scmp.ne.s32.totalorder %s249, %s250
    %p261 = scmp.eq.s32.totalorder %s21, 0
    %p262 = por %p260, %p261
    %p263 = scmp.ne.s32.totalorder %s249, %s250
    %p264 = scmp.eq.s32.totalorder %s22, 1
    %p265 = por %p263, %p264
    %p267 = scmp.ne.s32.totalorder %s250, %s266
    %p268 = scmp.eq.s32.totalorder %s22, 0
    %p269 = por %p267, %p268
    %p270 = scmp.le.s32.totalorder 1, %s16
    %p271 = scmp.lt.s32.totalorder %s16, 3
    %p272 = pnand %p270, %p271
    %p273 = pneg %p272
    // Predicated region
    $region9: #{expanding_block_forward.1} parent=5 // pred_check
      _
    $region10: #{expanding_block_forward.1} parent=5 // pred_check_branch
      %275 = sbr.rel (%p272) target = $region12
    $region11: #{expanding_block_forward.1} parent=5 // pred_region
      %s276 = ssub.s32 %s16, 1
      // Predicated region
      $region13: #{expanding_block_forward.1} parent=11 // pred_check
        %p277 = pneg %p89
      $region14: #{expanding_block_forward.1} parent=11 // pred_check_branch
        %279 = sbr.rel (%p277) target = $region16
      $region15: #{expanding_block_forward.1} parent=11 // pred_region
        _
      $region16: #{expanding_block_forward.1} parent=11 // pred_fallthru
        _
      // Predicated region
      $region17: #{expanding_block_forward.1} parent=11 // pred_check
        %p280 = pneg %p110
      $region18: #{expanding_block_forward.1} parent=11 // pred_check_branch
        %282 = sbr.rel (%p280) target = $region20
      $region19: #{expanding_block_forward.1} parent=11 // pred_region
        _
      $region20: #{expanding_block_forward.1} parent=11 // pred_fallthru
        _
      // Predicated region
      $region21: #{expanding_block_forward.1} parent=11 // pred_check
        %p283 = pneg %p131
      $region22: #{expanding_block_forward.1} parent=11 // pred_check_branch
        %285 = sbr.rel (%p283) target = $region24
      $region23: #{expanding_block_forward.1} parent=11 // pred_region
        _
      $region24: #{expanding_block_forward.1} parent=11 // pred_fallthru
        _
      // Predicated region
      $region25: #{expanding_block_forward.1} parent=11 // pred_check
        %p286 = pneg %p152
      $region26: #{expanding_block_forward.1} parent=11 // pred_check_branch
        %288 = sbr.rel (%p286) target = $region28
      $region27: #{expanding_block_forward.1} parent=11 // pred_region
        _
      $region28: #{expanding_block_forward.1} parent=11 // pred_fallthru
        _
      // Predicated region
      $region29: #{expanding_block_forward.1} parent=11 // pred_check
        %p289 = pneg %p173
      $region30: #{expanding_block_forward.1} parent=11 // pred_check_branch
        %291 = sbr.rel (%p289) target = $region32
      $region31: #{expanding_block_forward.1} parent=11 // pred_region
        _
      $region32: #{expanding_block_forward.1} parent=11 // pred_fallthru
        _
      // Predicated region
      $region33: #{expanding_block_forward.1} parent=11 // pred_check
        %p292 = pneg %p194
      $region34: #{expanding_block_forward.1} parent=11 // pred_check_branch
        %294 = sbr.rel (%p292) target = $region36
      $region35: #{expanding_block_forward.1} parent=11 // pred_region
        _
      $region36: #{expanding_block_forward.1} parent=11 // pred_fallthru
        _
      // Predicated region
      $region37: #{expanding_block_forward.1} parent=11 // pred_check
        %p295 = pneg %p215
      $region38: #{expanding_block_forward.1} parent=11 // pred_check_branch
        %297 = sbr.rel (%p295) target = $region40
      $region39: #{expanding_block_forward.1} parent=11 // pred_region
        _
      $region40: #{expanding_block_forward.1} parent=11 // pred_fallthru
        _
      // Predicated region
      $region41: #{expanding_block_forward.1} parent=11 // pred_check
        %p298 = pneg %p236
      $region42: #{expanding_block_forward.1} parent=11 // pred_check_branch
        %300 = sbr.rel (%p298) target = $region44
      $region43: #{expanding_block_forward.1} parent=11 // pred_region
        _
      $region44: #{expanding_block_forward.1} parent=11 // pred_fallthru
        _
    $region12: #{expanding_block_forward.1} parent=5 // pred_fallthru
      _
    %p301 = scmp.lt.s32.totalorder %s16, 2
    // Predicated region
    $region45: #{expanding_block_forward.1} parent=5 // pred_check
      %p302 = pneg %p301
    $region46: #{expanding_block_forward.1} parent=5 // pred_check_branch
      %304 = sbr.rel (%p302) target = $region48
    $region47: #{expanding_block_forward.1} parent=5 // pred_region
      // Predicated region
      $region49: #{expanding_block_forward.1} parent=47 // pred_check
        %p305 = pneg %p36
      $region50: #{expanding_block_forward.1} parent=47 // pred_check_branch
        %307 = sbr.rel (%p305) target = $region52
      $region51: #{expanding_block_forward.1} parent=47 // pred_region
        %p308 = scmp.lt.s32.totalorder %s16, 1
        %s309 = scalar_select %p308, %s16, 1
        %s310 = smul.addr %s309, 4
        %s311 = scalar_lea.vmem %s0, %s310
      $region52: #{expanding_block_forward.1} parent=47 // pred_fallthru
        _
      // Predicated region
      $region53: #{expanding_block_forward.1} parent=47 // pred_check
        %p312 = pneg %p62
      $region54: #{expanding_block_forward.1} parent=47 // pred_check_branch
        %314 = sbr.rel (%p312) target = $region56
      $region55: #{expanding_block_forward.1} parent=47 // pred_region
        %p315 = scmp.lt.s32.totalorder %s16, 1
        %s316 = scalar_select %p315, %s16, 1
        %s317 = smul.addr %s316, 3
        %s318 = smul.addr %s317, 2
        %s319 = scalar_lea.vmem %s1, %s318
      $region56: #{expanding_block_forward.1} parent=47 // pred_fallthru
        _
    $region48: #{expanding_block_forward.1} parent=5 // pred_fallthru
      _
    %p320 = scmp.le.s32.totalorder 1, %s16
    %p321 = scmp.lt.s32.totalorder %s16, 3
    %p322 = pnand %p320, %p321
    %p323 = pneg %p322
    // Predicated region
    $region57: #{expanding_block_forward.1} parent=5 // pred_check
      _
    $region58: #{expanding_block_forward.1} parent=5 // pred_check_branch
      %325 = sbr.rel (%p322) target = $region60
    $region59: #{expanding_block_forward.1} parent=5 // pred_region
      %s326 = ssub.s32 %s16, 1
      %p327 = scmp.lt.s32.totalorder %s21, 1
      %s328 = scalar_select %p327, %s21, 1
      %s329 = smul.addr %s328, 4
      %s330 = scalar_lea.vmem %s0, %s329
      %p331 = pneg %p42
      %p332 = pneg %p39
      %p333 = scmp.lt.s32.totalorder %s21, 1
      %s334 = scalar_select %p333, %s21, 1
      %s335 = smul.addr %s334, 3
      %s336 = smul.addr %s335, 2
      %s337 = scalar_lea.vmem %s1, %s336
      %p338 = pneg %p68
      %p339 = pneg %p65
      %p340 = pneg %p89
      %p341 = pneg %p86
      %p342 = pneg %p110
      %p343 = pneg %p107
      %p344 = pneg %p131
      %p345 = pneg %p128
      %p346 = pneg %p152
      %p347 = pneg %p149
      %p348 = pneg %p173
      %p349 = pneg %p170
      %p350 = pneg %p194
      %p351 = pneg %p191
      %p352 = pneg %p215
      %p353 = pneg %p212
      %p354 = pneg %p236
      %p355 = pneg %p233
      %p356 = pneg %p262
      %p357 = pneg %p259
      %p358 = scmp.lt.s32.totalorder %s21, 1
      %s359 = scalar_select %p358, %s21, 1
      %s360 = smul.addr %s359, 3
      %s361 = smul.addr %s360, 2
      %s362 = scalar_lea.vmem %s10, %s361
      %p363 = scmp.lt.s32.totalorder %s21, 1
      %s364 = scalar_select %p363, %s21, 1
      %s365 = smul.addr %s364, 4
      %s366 = scalar_lea.vmem %s0, %s365
      %p367 = scmp.lt.s32.totalorder %s21, 1
      %s368 = scalar_select %p367, %s21, 1
      %s369 = smul.addr %s368, 3
      %s370 = smul.addr %s369, 2
      %s371 = scalar_lea.vmem %s1, %s370
      %p372 = scmp.lt.s32.totalorder %s21, 1
      %s373 = scalar_select %p372, %s21, 1
      %s374 = smul.addr %s373, 3
      %s375 = smul.addr %s374, 2
      %s376 = scalar_lea.vmem %s10, %s375
      %v377 = vld [vmem:[%s3] sm:$0x7]
      %378 = vst [vmem:[#allocation2] sm:$0xff] 0.0
      %vm379 = vcmask 568320
      %380 = vst.msk [vmem:[#allocation2 + $0x8] sm:$0xf] %vm379, 0.0
      %v381 = vld [vmem:[%s366] sm:$0xf]
      %v382 = vld [vmem:[%s2] sm:$0xff]
      %v383 = vld [vmem:[%s2 + $0x8] sm:$0xff]
      %v384 = vld [vmem:[%s2 + $0x10] sm:$0xff]
      %v385 = vld [vmem:[%s2 + $0x18] sm:$0xff]
      %v386 = vld [vmem:[%s2 + $0x20] sm:$0xff]
      %v387 = vld [vmem:[%s2 + $0x28] sm:$0xff]
      %v388 = vld [vmem:[%s2 + $0x30] sm:$0xff]
      %v389 = vld [vmem:[%s2 + $0x38] sm:$0xff]
      %v390 = vld [vmem:[%s2 + $0x40] sm:$0xff]
      %v391 = vld [vmem:[%s2 + $0x48] sm:$0xff]
      %v392 = vld [vmem:[%s2 + $0x50] sm:$0xff]
      %v393 = vld [vmem:[%s2 + $0x58] sm:$0xff]
      %v394 = vld [vmem:[%s2 + $0x60] sm:$0xff]
      %v395 = vld [vmem:[%s2 + $0x68] sm:$0xff]
      %v396 = vld [vmem:[%s2 + $0x70] sm:$0xff]
      %v397 = vld [vmem:[%s2 + $0x78] sm:$0xff]
      %v398 = vld [vmem:[%s2 + $0x80] sm:$0xff]
      %v399 = vld [vmem:[%s2 + $0x88] sm:$0xff]
      %v400 = vld [vmem:[%s2 + $0x90] sm:$0xff]
      %v401 = vld [vmem:[%s2 + $0x98] sm:$0xff]
      %v402 = vld [vmem:[%s2 + $0xa0] sm:$0xff]
      %v403 = vld [vmem:[%s2 + $0xa8] sm:$0xff]
      %v404 = vld [vmem:[%s2 + $0xb0] sm:$0xff]
      %v405 = vld [vmem:[%s2 + $0xb8] sm:$0xff]
      %vm406 = vcmask 523264
      %v408 = vsel %vm406, %v381, 0
      %410 = vmatprep.subr.mxu0 %v383
      %411 = vmatpush1.msra.mxu0 %v382
      %412 = vmatprep.subr.mxu0 %v386
      %413 = vmatpush1.msra.mxu0 %v385
      %414 = vmatprep.subr.mxu0 %v389
      %415 = vmatpush1.msra.mxu0 %v388
      %416 = vmatprep.subr.mxu0 %v392
      %417 = vmatpush1.msra.mxu0 %v391
      %418 = vmatprep.subr.mxu0 %v395
      %419 = vmatpush1.msra.mxu0 %v394
      %420 = vmatprep.subr.mxu0 %v398
      %421 = vmatpush1.msra.mxu0 %v397
      %422 = vmatprep.subr.mxu0 %v401
      %423 = vmatpush1.msra.mxu0 %v400
      %424 = vmatprep.subr.mxu0 %v404
      %425 = vmatpush1.msra.mxu0 %v403
      %426 = vmatprep.subr.mxu0 0.0
      %427 = vmatpush1.msra.mxu0 0.0
      %428 = vmatprep.subr.mxu0 0.0
      %429 = vmatpush1.msra.mxu0 0.0
      %430 = vmatprep.subr.mxu0 0.0
      %431 = vmatpush1.msra.mxu0 0.0
      %432 = vmatprep.subr.mxu0 0.0
      %433 = vmatpush1.msra.mxu0 0.0
      %434 = vmatprep.subr.mxu0 0.0
      %435 = vmatpush1.msra.mxu0 0.0
      %436 = vmatprep.subr.mxu0 0.0
      %437 = vmatpush1.msra.mxu0 0.0
      %438 = vmatprep.subr.mxu0 0.0
      %439 = vmatpush1.msra.mxu0 0.0
      %440 = vmatprep.subr.mxu0 0.0
      %441 = vmatpush1.msra.mxu0 0.0
      %442 = vmatprep.subr.mxu0 0.0
      %443 = vmatpush1.msra.mxu0 0.0
      %444 = vmatprep.subr.mxu0 0.0
      %445 = vmatpush1.msra.mxu0 0.0
      %446 = vmatprep.subr.mxu0 0.0
      %447 = vmatpush1.msra.mxu0 0.0
      %448 = vmatprep.subr.mxu0 0.0
      %449 = vmatpush1.msra.mxu0 0.0
      %450 = vmatprep.subr.mxu0 0.0
      %451 = vmatpush1.msra.mxu0 0.0
      %452 = vmatprep.subr.mxu0 0.0
      %453 = vmatpush1.msra.mxu0 0.0
      %454 = vmatprep.subr.mxu0 0.0
      %455 = vmatpush1.msra.mxu0 0.0
      %456 = vmatprep.subr.mxu0 0.0
      %457 = vmatpush1.msra.mxu0 0.0
      %458 = vmatprep.subr.mxu0 0.0
      %459 = vmatpush1.msra.mxu0 0.0
      %460 = vmatprep.subr.mxu0 0.0
      %461 = vmatpush1.msra.mxu0 0.0
      %462 = vmatprep.subr.mxu0 0.0
      %463 = vmatpush1.msra.mxu0 0.0
      %464 = vmatprep.subr.mxu0 0.0
      %465 = vmatpush1.msra.mxu0 0.0
      %466 = vmatprep.subr.mxu0 0.0
      %467 = vmatpush1.msra.mxu0 0.0
      %468 = vmatprep.subr.mxu0 0.0
      %469 = vmatpush1.msra.mxu0 0.0
      %470 = vmatprep.subr.mxu0 0.0
      %471 = vmatpush1.msra.mxu0 0.0
      %472 = vmatprep.subr.mxu0 0.0
      %473 = vmatpush1.msra.mxu0 0.0
      %474 = vmatprep.mubr.f32.mxu0 0.0
      %475 = vmatmul.mubr.f32.gmra.mrb[0].mxu0 %v408
      %v476 = vpop.f32.mrb[0].mxu0
      %v477 = vadd.f32 0.0, %v476
      %v478 = vpop.f32.mrb[0].mxu0
      %v479 = vadd.f32 0.0, %v478
      %480 = vdwg.mxu0
      %481 = vmatprep.subr.mxu0 0.0
      %482 = vmatpush1.msra.mxu0 %v384
      %483 = vmatprep.subr.mxu0 0.0
      %484 = vmatpush1.msra.mxu0 %v387
      %485 = vmatprep.subr.mxu0 0.0
      %486 = vmatpush1.msra.mxu0 %v390
      %487 = vmatprep.subr.mxu0 0.0
      %488 = vmatpush1.msra.mxu0 %v393
      %489 = vmatprep.subr.mxu0 0.0
      %490 = vmatpush1.msra.mxu0 %v396
      %491 = vmatprep.subr.mxu0 0.0
      %492 = vmatpush1.msra.mxu0 %v399
      %493 = vmatprep.subr.mxu0 0.0
      %494 = vmatpush1.msra.mxu0 %v402
      %495 = vmatprep.subr.mxu0 0.0
      %496 = vmatpush1.msra.mxu0 %v405
      %497 = vmatprep.subr.mxu0 0.0
      %498 = vmatpush1.msra.mxu0 0.0
      %499 = vmatprep.subr.mxu0 0.0
      %500 = vmatpush1.msra.mxu0 0.0
      %501 = vmatprep.subr.mxu0 0.0
      %502 = vmatpush1.msra.mxu0 0.0
      %503 = vmatprep.subr.mxu0 0.0
      %504 = vmatpush1.msra.mxu0 0.0
      %505 = vmatprep.subr.mxu0 0.0
      %506 = vmatpush1.msra.mxu0 0.0
      %507 = vmatprep.subr.mxu0 0.0
      %508 = vmatpush1.msra.mxu0 0.0
      %509 = vmatprep.subr.mxu0 0.0
      %510 = vmatpush1.msra.mxu0 0.0
      %511 = vmatprep.subr.mxu0 0.0
      %512 = vmatpush1.msra.mxu0 0.0
      %513 = vmatprep.subr.mxu0 0.0
      %514 = vmatpush1.msra.mxu0 0.0
      %515 = vmatprep.subr.mxu0 0.0
      %516 = vmatpush1.msra.mxu0 0.0
      %517 = vmatprep.subr.mxu0 0.0
      %518 = vmatpush1.msra.mxu0 0.0
      %519 = vmatprep.subr.mxu0 0.0
      %520 = vmatpush1.msra.mxu0 0.0
      %521 = vmatprep.subr.mxu0 0.0
      %522 = vmatpush1.msra.mxu0 0.0
      %523 = vmatprep.subr.mxu0 0.0
      %524 = vmatpush1.msra.mxu0 0.0
      %525 = vmatprep.subr.mxu0 0.0
      %526 = vmatpush1.msra.mxu0 0.0
      %527 = vmatprep.subr.mxu0 0.0
      %528 = vmatpush1.msra.mxu0 0.0
      %529 = vmatprep.subr.mxu0 0.0
      %530 = vmatpush1.msra.mxu0 0.0
      %531 = vmatprep.subr.mxu0 0.0
      %532 = vmatpush1.msra.mxu0 0.0
      %533 = vmatprep.subr.mxu0 0.0
      %534 = vmatpush1.msra.mxu0 0.0
      %535 = vmatprep.subr.mxu0 0.0
      %536 = vmatpush1.msra.mxu0 0.0
      %537 = vmatprep.subr.mxu0 0.0
      %538 = vmatpush1.msra.mxu0 0.0
      %539 = vmatprep.subr.mxu0 0.0
      %540 = vmatpush1.msra.mxu0 0.0
      %541 = vmatprep.subr.mxu0 0.0
      %542 = vmatpush1.msra.mxu0 0.0
      %543 = vmatprep.subr.mxu0 0.0
      %544 = vmatpush1.msra.mxu0 0.0
      %545 = vmatprep.mubr.f32.mxu0 0.0
      %546 = vmatmul.mubr.f32.gmra.mrb[0].mxu0 %v408
      %v547 = vpop.f32.mrb[0].mxu0
      %v548 = vadd.f32 0.0, %v547
      %v549 = vpop.f32.mrb[0].mxu0
      %550 = vdwg.mxu0
      %v554 = vcombine.low %v477, %v479
      %555 = vrot.lane.b32.xlu0 %v554, 19
      %v556 = vpop.permute.xlu0 %555
      %557 = vrot.lane.b32.xlu0 %v548, 19
      %v558 = vpop.permute.xlu0 %557
      %v559 = vrot.slane %v556, 4
      %vm560 = vcmask 154624
      %v561 = vsel %vm560, %v559, %v556
      %v562 = vsel %vm560, %v559, %v558
      %vm565 = vcmask 1043608
      %vm566 = vcmask 1047556
      %vm567 = vmor %vm566, %vm565
      %568 = vst.msk [vmem:[#allocation2] sm:$0xff] %vm567, %v561
      %vm569 = vcmask 412672
      %570 = vst.msk [vmem:[#allocation2 + $0x8] sm:$0xf] %vm569, %v562
      %v571 = vld [vmem:[#allocation2] sm:$0xff]
      %v572 = vld [vmem:[#allocation2 + $0x8] sm:$0xf]
      %v573 = vld [vmem:[%s4] sm:$0x3]
      %s574 = scalar_lea.vmem %s4, 2
      %v575 = vld [vmem:[%s574] sm:$0x3]
      %v578 = vcombine.high %v571, %v571
      %579 = vrot.lane.b32.xlu0 %v571, 127
      %v580 = vpop.permute.xlu0 %579
      %581 = vrot.lane.b32.xlu0 %v578, 127
      %v582 = vpop.permute.xlu0 %581
      %583 = vrot.lane.b32.xlu0 %v572, 127
      %v584 = vpop.permute.xlu0 %583
      %vm585 = vcmask 1039360
      %v586 = vsel %vm585, %v580, %v582
      %v587 = vsel %vm585, %v582, %v584
      %vm588 = vcmask 31744
      %v590 = vsel %vm588, %v575, 0
      %vm592 = vcmask 1043456
      %v593 = vsel %vm592, %v586, 0
      %v595 = vsel %vm592, %v587, 0
      %v597 = vsel %vm592, %v584, 0
      %599 = vmatprep.subr.mxu0 %v595
      %600 = vmatpush1.msra.mxu0 %v593
      %601 = vmatprep.subr.mxu0 0.0
      %602 = vmatpush1.msra.mxu0 0.0
      %603 = vmatprep.subr.mxu0 0.0
      %604 = vmatpush1.msra.mxu0 0.0
      %605 = vmatprep.subr.mxu0 0.0
      %606 = vmatpush1.msra.mxu0 0.0
      %607 = vmatprep.subr.mxu0 0.0
      %608 = vmatpush1.msra.mxu0 0.0
      %609 = vmatprep.subr.mxu0 0.0
      %610 = vmatpush1.msra.mxu0 0.0
      %611 = vmatprep.subr.mxu0 0.0
      %612 = vmatpush1.msra.mxu0 0.0
      %613 = vmatprep.subr.mxu0 0.0
      %614 = vmatpush1.msra.mxu0 0.0
      %615 = vmatprep.subr.mxu0 0.0
      %616 = vmatpush1.msra.mxu0 0.0
      %617 = vmatprep.subr.mxu0 0.0
      %618 = vmatpush1.msra.mxu0 0.0
      %619 = vmatprep.subr.mxu0 0.0
      %620 = vmatpush1.msra.mxu0 0.0
      %621 = vmatprep.subr.mxu0 0.0
      %622 = vmatpush1.msra.mxu0 0.0
      %623 = vmatprep.subr.mxu0 0.0
      %624 = vmatpush1.msra.mxu0 0.0
      %625 = vmatprep.subr.mxu0 0.0
      %626 = vmatpush1.msra.mxu0 0.0
      %627 = vmatprep.subr.mxu0 0.0
      %628 = vmatpush1.msra.mxu0 0.0
      %629 = vmatprep.subr.mxu0 0.0
      %630 = vmatpush1.msra.mxu0 0.0
      %631 = vmatprep.subr.mxu0 0.0
      %632 = vmatpush1.msra.mxu0 0.0
      %633 = vmatprep.subr.mxu0 0.0
      %634 = vmatpush1.msra.mxu0 0.0
      %635 = vmatprep.subr.mxu0 0.0
      %636 = vmatpush1.msra.mxu0 0.0
      %637 = vmatprep.subr.mxu0 0.0
      %638 = vmatpush1.msra.mxu0 0.0
      %639 = vmatprep.subr.mxu0 0.0
      %640 = vmatpush1.msra.mxu0 0.0
      %641 = vmatprep.subr.mxu0 0.0
      %642 = vmatpush1.msra.mxu0 0.0
      %643 = vmatprep.subr.mxu0 0.0
      %644 = vmatpush1.msra.mxu0 0.0
      %645 = vmatprep.subr.mxu0 0.0
      %646 = vmatpush1.msra.mxu0 0.0
      %647 = vmatprep.subr.mxu0 0.0
      %648 = vmatpush1.msra.mxu0 0.0
      %649 = vmatprep.subr.mxu0 0.0
      %650 = vmatpush1.msra.mxu0 0.0
      %651 = vmatprep.subr.mxu0 0.0
      %652 = vmatpush1.msra.mxu0 0.0
      %653 = vmatprep.subr.mxu0 0.0
      %654 = vmatpush1.msra.mxu0 0.0
      %655 = vmatprep.subr.mxu0 0.0
      %656 = vmatpush1.msra.mxu0 0.0
      %657 = vmatprep.subr.mxu0 0.0
      %658 = vmatpush1.msra.mxu0 0.0
      %659 = vmatprep.subr.mxu0 0.0
      %660 = vmatpush1.msra.mxu0 0.0
      %661 = vmatprep.subr.mxu0 0.0
      %662 = vmatpush1.msra.mxu0 0.0
      %663 = vmatprep.mubr.f32.mxu0 0.0
      %664 = vmatmul.mubr.f32.gmra.mrb[0].mxu0 %v590
      %v665 = vpop.f32.mrb[0].mxu0
      %v666 = vadd.f32 0.0, %v665
      %v667 = vpop.f32.mrb[0].mxu0
      %v668 = vadd.f32 0.0, %v667
      %669 = vdwg.mxu0
      %670 = vmatprep.subr.mxu0 0.0
      %671 = vmatpush1.msra.mxu0 %v597
      %672 = vmatprep.subr.mxu0 0.0
      %673 = vmatpush1.msra.mxu0 0.0
      %674 = vmatprep.subr.mxu0 0.0
      %675 = vmatpush1.msra.mxu0 0.0
      %676 = vmatprep.subr.mxu0 0.0
      %677 = vmatpush1.msra.mxu0 0.0
      %678 = vmatprep.subr.mxu0 0.0
      %679 = vmatpush1.msra.mxu0 0.0
      %680 = vmatprep.subr.mxu0 0.0
      %681 = vmatpush1.msra.mxu0 0.0
      %682 = vmatprep.subr.mxu0 0.0
      %683 = vmatpush1.msra.mxu0 0.0
      %684 = vmatprep.subr.mxu0 0.0
      %685 = vmatpush1.msra.mxu0 0.0
      %686 = vmatprep.subr.mxu0 0.0
      %687 = vmatpush1.msra.mxu0 0.0
      %688 = vmatprep.subr.mxu0 0.0
      %689 = vmatpush1.msra.mxu0 0.0
      %690 = vmatprep.subr.mxu0 0.0
      %691 = vmatpush1.msra.mxu0 0.0
      %692 = vmatprep.subr.mxu0 0.0
      %693 = vmatpush1.msra.mxu0 0.0
      %694 = vmatprep.subr.mxu0 0.0
      %695 = vmatpush1.msra.mxu0 0.0
      %696 = vmatprep.subr.mxu0 0.0
      %697 = vmatpush1.msra.mxu0 0.0
      %698 = vmatprep.subr.mxu0 0.0
      %699 = vmatpush1.msra.mxu0 0.0
      %700 = vmatprep.subr.mxu0 0.0
      %701 = vmatpush1.msra.mxu0 0.0
      %702 = vmatprep.subr.mxu0 0.0
      %703 = vmatpush1.msra.mxu0 0.0
      %704 = vmatprep.subr.mxu0 0.0
      %705 = vmatpush1.msra.mxu0 0.0
      %706 = vmatprep.subr.mxu0 0.0
      %707 = vmatpush1.msra.mxu0 0.0
      %708 = vmatprep.subr.mxu0 0.0
      %709 = vmatpush1.msra.mxu0 0.0
      %710 = vmatprep.subr.mxu0 0.0
      %711 = vmatpush1.msra.mxu0 0.0
      %712 = vmatprep.subr.mxu0 0.0
      %713 = vmatpush1.msra.mxu0 0.0
      %714 = vmatprep.subr.mxu0 0.0
      %715 = vmatpush1.msra.mxu0 0.0
      %716 = vmatprep.subr.mxu0 0.0
      %717 = vmatpush1.msra.mxu0 0.0
      %718 = vmatprep.subr.mxu0 0.0
      %719 = vmatpush1.msra.mxu0 0.0
      %720 = vmatprep.subr.mxu0 0.0
      %721 = vmatpush1.msra.mxu0 0.0
      %722 = vmatprep.subr.mxu0 0.0
      %723 = vmatpush1.msra.mxu0 0.0
      %724 = vmatprep.subr.mxu0 0.0
      %725 = vmatpush1.msra.mxu0 0.0
      %726 = vmatprep.subr.mxu0 0.0
      %727 = vmatpush1.msra.mxu0 0.0
      %728 = vmatprep.subr.mxu0 0.0
      %729 = vmatpush1.msra.mxu0 0.0
      %730 = vmatprep.subr.mxu0 0.0
      %731 = vmatpush1.msra.mxu0 0.0
      %732 = vmatprep.subr.mxu0 0.0
      %733 = vmatpush1.msra.mxu0 0.0
      %734 = vmatprep.mubr.f32.mxu0 0.0
      %735 = vmatmul.mubr.f32.gmra.mrb[0].mxu0 %v590
      %v736 = vpop.f32.mrb[0].mxu0
      %v737 = vadd.f32 0.0, %v736
      %v738 = vpop.f32.mrb[0].mxu0
      %739 = vdwg.mxu0
      %v741 = vsel %vm588, %v573, 0
      %v743 = vsel %vm592, %v571, 0
      %v745 = vsel %vm592, %v578, 0
      %v747 = vsel %vm592, %v572, 0
      %749 = vmatprep.subr.mxu0 %v745
      %750 = vmatpush1.msra.mxu0 %v743
      %751 = vmatprep.subr.mxu0 0.0
      %752 = vmatpush1.msra.mxu0 0.0
      %753 = vmatprep.subr.mxu0 0.0
      %754 = vmatpush1.msra.mxu0 0.0
      %755 = vmatprep.subr.mxu0 0.0
      %756 = vmatpush1.msra.mxu0 0.0
      %757 = vmatprep.subr.mxu0 0.0
      %758 = vmatpush1.msra.mxu0 0.0
      %759 = vmatprep.subr.mxu0 0.0
      %760 = vmatpush1.msra.mxu0 0.0
      %761 = vmatprep.subr.mxu0 0.0
      %762 = vmatpush1.msra.mxu0 0.0
      %763 = vmatprep.subr.mxu0 0.0
      %764 = vmatpush1.msra.mxu0 0.0
      %765 = vmatprep.subr.mxu0 0.0
      %766 = vmatpush1.msra.mxu0 0.0
      %767 = vmatprep.subr.mxu0 0.0
      %768 = vmatpush1.msra.mxu0 0.0
      %769 = vmatprep.subr.mxu0 0.0
      %770 = vmatpush1.msra.mxu0 0.0
      %771 = vmatprep.subr.mxu0 0.0
      %772 = vmatpush1.msra.mxu0 0.0
      %773 = vmatprep.subr.mxu0 0.0
      %774 = vmatpush1.msra.mxu0 0.0
      %775 = vmatprep.subr.mxu0 0.0
      %776 = vmatpush1.msra.mxu0 0.0
      %777 = vmatprep.subr.mxu0 0.0
      %778 = vmatpush1.msra.mxu0 0.0
      %779 = vmatprep.subr.mxu0 0.0
      %780 = vmatpush1.msra.mxu0 0.0
      %781 = vmatprep.subr.mxu0 0.0
      %782 = vmatpush1.msra.mxu0 0.0
      %783 = vmatprep.subr.mxu0 0.0
      %784 = vmatpush1.msra.mxu0 0.0
      %785 = vmatprep.subr.mxu0 0.0
      %786 = vmatpush1.msra.mxu0 0.0
      %787 = vmatprep.subr.mxu0 0.0
      %788 = vmatpush1.msra.mxu0 0.0
      %789 = vmatprep.subr.mxu0 0.0
      %790 = vmatpush1.msra.mxu0 0.0
      %791 = vmatprep.subr.mxu0 0.0
      %792 = vmatpush1.msra.mxu0 0.0
      %793 = vmatprep.subr.mxu0 0.0
      %794 = vmatpush1.msra.mxu0 0.0
      %795 = vmatprep.subr.mxu0 0.0
      %796 = vmatpush1.msra.mxu0 0.0
      %797 = vmatprep.subr.mxu0 0.0
      %798 = vmatpush1.msra.mxu0 0.0
      %799 = vmatprep.subr.mxu0 0.0
      %800 = vmatpush1.msra.mxu0 0.0
      %801 = vmatprep.subr.mxu0 0.0
      %802 = vmatpush1.msra.mxu0 0.0
      %803 = vmatprep.subr.mxu0 0.0
      %804 = vmatpush1.msra.mxu0 0.0
      %805 = vmatprep.subr.mxu0 0.0
      %806 = vmatpush1.msra.mxu0 0.0
      %807 = vmatprep.subr.mxu0 0.0
      %808 = vmatpush1.msra.mxu0 0.0
      %809 = vmatprep.subr.mxu0 0.0
      %810 = vmatpush1.msra.mxu0 0.0
      %811 = vmatprep.subr.mxu0 0.0
      %812 = vmatpush1.msra.mxu0 0.0
      %813 = vmatprep.mubr.f32.mxu0 0.0
      %814 = vmatmul.mubr.f32.gmra.mrb[0].mxu0 %v741
      %v815 = vpop.f32.mrb[0].mxu0
      %v816 = vadd.f32 %v666, %v815
      %v817 = vpop.f32.mrb[0].mxu0
      %v818 = vadd.f32 %v668, %v817
      %819 = vdwg.mxu0
      %820 = vmatprep.subr.mxu0 0.0
      %821 = vmatpush1.msra.mxu0 %v747
      %822 = vmatprep.subr.mxu0 0.0
      %823 = vmatpush1.msra.mxu0 0.0
      %824 = vmatprep.subr.mxu0 0.0
      %825 = vmatpush1.msra.mxu0 0.0
      %826 = vmatprep.subr.mxu0 0.0
      %827 = vmatpush1.msra.mxu0 0.0
      %828 = vmatprep.subr.mxu0 0.0
      %829 = vmatpush1.msra.mxu0 0.0
      %830 = vmatprep.subr.mxu0 0.0
      %831 = vmatpush1.msra.mxu0 0.0
      %832 = vmatprep.subr.mxu0 0.0
      %833 = vmatpush1.msra.mxu0 0.0
      %834 = vmatprep.subr.mxu0 0.0
      %835 = vmatpush1.msra.mxu0 0.0
      %836 = vmatprep.subr.mxu0 0.0
      %837 = vmatpush1.msra.mxu0 0.0
      %838 = vmatprep.subr.mxu0 0.0
      %839 = vmatpush1.msra.mxu0 0.0
      %840 = vmatprep.subr.mxu0 0.0
      %841 = vmatpush1.msra.mxu0 0.0
      %842 = vmatprep.subr.mxu0 0.0
      %843 = vmatpush1.msra.mxu0 0.0
      %844 = vmatprep.subr.mxu0 0.0
      %845 = vmatpush1.msra.mxu0 0.0
      %846 = vmatprep.subr.mxu0 0.0
      %847 = vmatpush1.msra.mxu0 0.0
      %848 = vmatprep.subr.mxu0 0.0
      %849 = vmatpush1.msra.mxu0 0.0
      %850 = vmatprep.subr.mxu0 0.0
      %851 = vmatpush1.msra.mxu0 0.0
      %852 = vmatprep.subr.mxu0 0.0
      %853 = vmatpush1.msra.mxu0 0.0
      %854 = vmatprep.subr.mxu0 0.0
      %855 = vmatpush1.msra.mxu0 0.0
      %856 = vmatprep.subr.mxu0 0.0
      %857 = vmatpush1.msra.mxu0 0.0
      %858 = vmatprep.subr.mxu0 0.0
      %859 = vmatpush1.msra.mxu0 0.0
      %860 = vmatprep.subr.mxu0 0.0
      %861 = vmatpush1.msra.mxu0 0.0
      %862 = vmatprep.subr.mxu0 0.0
      %863 = vmatpush1.msra.mxu0 0.0
      %864 = vmatprep.subr.mxu0 0.0
      %865 = vmatpush1.msra.mxu0 0.0
      %866 = vmatprep.subr.mxu0 0.0
      %867 = vmatpush1.msra.mxu0 0.0
      %868 = vmatprep.subr.mxu0 0.0
      %869 = vmatpush1.msra.mxu0 0.0
      %870 = vmatprep.subr.mxu0 0.0
      %871 = vmatpush1.msra.mxu0 0.0
      %872 = vmatprep.subr.mxu0 0.0
      %873 = vmatpush1.msra.mxu0 0.0
      %874 = vmatprep.subr.mxu0 0.0
      %875 = vmatpush1.msra.mxu0 0.0
      %876 = vmatprep.subr.mxu0 0.0
      %877 = vmatpush1.msra.mxu0 0.0
      %878 = vmatprep.subr.mxu0 0.0
      %879 = vmatpush1.msra.mxu0 0.0
      %880 = vmatprep.subr.mxu0 0.0
      %881 = vmatpush1.msra.mxu0 0.0
      %882 = vmatprep.subr.mxu0 0.0
      %883 = vmatpush1.msra.mxu0 0.0
      %884 = vmatprep.mubr.f32.mxu0 0.0
      %885 = vmatmul.mubr.f32.gmra.mrb[0].mxu0 %v741
      %v886 = vpop.f32.mrb[0].mxu0
      %v887 = vadd.f32 %v737, %v886
      %v888 = vpop.f32.mrb[0].mxu0
      %889 = vdwg.mxu0
      %v890 = vld [vmem:[#allocation2] sm:$0xff]
      %v891 = vld [vmem:[#allocation2 + $0x8] sm:$0xf]
      %s892 = scalar_lea.vmem %s4, 4
      %v893 = vld [vmem:[%s892] sm:$0x3]
      %v896 = vcombine.high %v890, %v890
      %897 = vrot.lane.b32.xlu0 %v890, 126
      %v898 = vpop.permute.xlu0 %897
      %899 = vrot.lane.b32.xlu0 %v896, 126
      %v900 = vpop.permute.xlu0 %899
      %901 = vrot.lane.b32.xlu0 %v891, 126
      %v902 = vpop.permute.xlu0 %901
      %vm903 = vcmask 1031168
      %v904 = vsel %vm903, %v898, %v900
      %v905 = vsel %vm903, %v900, %v902
      %v907 = vsel %vm588, %v893, 0
      %v909 = vsel %vm592, %v904, 0
      %v911 = vsel %vm592, %v905, 0
      %v913 = vsel %vm592, %v902, 0
      %915 = vmatprep.subr.mxu0 %v911
      %916 = vmatpush1.msra.mxu0 %v909
      %917 = vmatprep.subr.mxu0 0.0
      %918 = vmatpush1.msra.mxu0 0.0
      %919 = vmatprep.subr.mxu0 0.0
      %920 = vmatpush1.msra.mxu0 0.0
      %921 = vmatprep.subr.mxu0 0.0
      %922 = vmatpush1.msra.mxu0 0.0
      %923 = vmatprep.subr.mxu0 0.0
      %924 = vmatpush1.msra.mxu0 0.0
      %925 = vmatprep.subr.mxu0 0.0
      %926 = vmatpush1.msra.mxu0 0.0
      %927 = vmatprep.subr.mxu0 0.0
      %928 = vmatpush1.msra.mxu0 0.0
      %929 = vmatprep.subr.mxu0 0.0
      %930 = vmatpush1.msra.mxu0 0.0
      %931 = vmatprep.subr.mxu0 0.0
      %932 = vmatpush1.msra.mxu0 0.0
      %933 = vmatprep.subr.mxu0 0.0
      %934 = vmatpush1.msra.mxu0 0.0
      %935 = vmatprep.subr.mxu0 0.0
      %936 = vmatpush1.msra.mxu0 0.0
      %937 = vmatprep.subr.mxu0 0.0
      %938 = vmatpush1.msra.mxu0 0.0
      %939 = vmatprep.subr.mxu0 0.0
      %940 = vmatpush1.msra.mxu0 0.0
      %941 = vmatprep.subr.mxu0 0.0
      %942 = vmatpush1.msra.mxu0 0.0
      %943 = vmatprep.subr.mxu0 0.0
      %944 = vmatpush1.msra.mxu0 0.0
      %945 = vmatprep.subr.mxu0 0.0
      %946 = vmatpush1.msra.mxu0 0.0
      %947 = vmatprep.subr.mxu0 0.0
      %948 = vmatpush1.msra.mxu0 0.0
      %949 = vmatprep.subr.mxu0 0.0
      %950 = vmatpush1.msra.mxu0 0.0
      %951 = vmatprep.subr.mxu0 0.0
      %952 = vmatpush1.msra.mxu0 0.0
      %953 = vmatprep.subr.mxu0 0.0
      %954 = vmatpush1.msra.mxu0 0.0
      %955 = vmatprep.subr.mxu0 0.0
      %956 = vmatpush1.msra.mxu0 0.0
      %957 = vmatprep.subr.mxu0 0.0
      %958 = vmatpush1.msra.mxu0 0.0
      %959 = vmatprep.subr.mxu0 0.0
      %960 = vmatpush1.msra.mxu0 0.0
      %961 = vmatprep.subr.mxu0 0.0
      %962 = vmatpush1.msra.mxu0 0.0
      %963 = vmatprep.subr.mxu0 0.0
      %964 = vmatpush1.msra.mxu0 0.0
      %965 = vmatprep.subr.mxu0 0.0
      %966 = vmatpush1.msra.mxu0 0.0
      %967 = vmatprep.subr.mxu0 0.0
      %968 = vmatpush1.msra.mxu0 0.0
      %969 = vmatprep.subr.mxu0 0.0
      %970 = vmatpush1.msra.mxu0 0.0
      %971 = vmatprep.subr.mxu0 0.0
      %972 = vmatpush1.msra.mxu0 0.0
      %973 = vmatprep.subr.mxu0 0.0
      %974 = vmatpush1.msra.mxu0 0.0
      %975 = vmatprep.subr.mxu0 0.0
      %976 = vmatpush1.msra.mxu0 0.0
      %977 = vmatprep.subr.mxu0 0.0
      %978 = vmatpush1.msra.mxu0 0.0
      %979 = vmatprep.mubr.f32.mxu0 0.0
      %980 = vmatmul.mubr.f32.gmra.mrb[0].mxu0 %v907
      %v981 = vpop.f32.mrb[0].mxu0
      %v982 = vadd.f32 0.0, %v981
      %v983 = vpop.f32.mrb[0].mxu0
      %v984 = vadd.f32 0.0, %v983
      %985 = vdwg.mxu0
      %986 = vmatprep.subr.mxu0 0.0
      %987 = vmatpush1.msra.mxu0 %v913
      %988 = vmatprep.subr.mxu0 0.0
      %989 = vmatpush1.msra.mxu0 0.0
      %990 = vmatprep.subr.mxu0 0.0
      %991 = vmatpush1.msra.mxu0 0.0
      %992 = vmatprep.subr.mxu0 0.0
      %993 = vmatpush1.msra.mxu0 0.0
      %994 = vmatprep.subr.mxu0 0.0
      %995 = vmatpush1.msra.mxu0 0.0
      %996 = vmatprep.subr.mxu0 0.0
      %997 = vmatpush1.msra.mxu0 0.0
      %998 = vmatprep.subr.mxu0 0.0
      %999 = vmatpush1.msra.mxu0 0.0
      %1000 = vmatprep.subr.mxu0 0.0
      %1001 = vmatpush1.msra.mxu0 0.0
      %1002 = vmatprep.subr.mxu0 0.0
      %1003 = vmatpush1.msra.mxu0 0.0
      %1004 = vmatprep.subr.mxu0 0.0
      %1005 = vmatpush1.msra.mxu0 0.0
      %1006 = vmatprep.subr.mxu0 0.0
      %1007 = vmatpush1.msra.mxu0 0.0
      %1008 = vmatprep.subr.mxu0 0.0
      %1009 = vmatpush1.msra.mxu0 0.0
      %1010 = vmatprep.subr.mxu0 0.0
      %1011 = vmatpush1.msra.mxu0 0.0
      %1012 = vmatprep.subr.mxu0 0.0
      %1013 = vmatpush1.msra.mxu0 0.0
      %1014 = vmatprep.subr.mxu0 0.0
      %1015 = vmatpush1.msra.mxu0 0.0
      %1016 = vmatprep.subr.mxu0 0.0
      %1017 = vmatpush1.msra.mxu0 0.0
      %1018 = vmatprep.subr.mxu0 0.0
      %1019 = vmatpush1.msra.mxu0 0.0
      %1020 = vmatprep.subr.mxu0 0.0
      %1021 = vmatpush1.msra.mxu0 0.0
      %1022 = vmatprep.subr.mxu0 0.0
      %1023 = vmatpush1.msra.mxu0 0.0
      %1024 = vmatprep.subr.mxu0 0.0
      %1025 = vmatpush1.msra.mxu0 0.0
      %1026 = vmatprep.subr.mxu0 0.0
      %1027 = vmatpush1.msra.mxu0 0.0
      %1028 = vmatprep.subr.mxu0 0.0
      %1029 = vmatpush1.msra.mxu0 0.0
      %1030 = vmatprep.subr.mxu0 0.0
      %1031 = vmatpush1.msra.mxu0 0.0
      %1032 = vmatprep.subr.mxu0 0.0
      %1033 = vmatpush1.msra.mxu0 0.0
      %1034 = vmatprep.subr.mxu0 0.0
      %1035 = vmatpush1.msra.mxu0 0.0
      %1036 = vmatprep.subr.mxu0 0.0
      %1037 = vmatpush1.msra.mxu0 0.0
      %1038 = vmatprep.subr.mxu0 0.0
      %1039 = vmatpush1.msra.mxu0 0.0
      %1040 = vmatprep.subr.mxu0 0.0
      %1041 = vmatpush1.msra.mxu0 0.0
      %1042 = vmatprep.subr.mxu0 0.0
      %1043 = vmatpush1.msra.mxu0 0.0
      %1044 = vmatprep.subr.mxu0 0.0
      %1045 = vmatpush1.msra.mxu0 0.0
      %1046 = vmatprep.subr.mxu0 0.0
      %1047 = vmatpush1.msra.mxu0 0.0
      %1048 = vmatprep.subr.mxu0 0.0
      %1049 = vmatpush1.msra.mxu0 0.0
      %1050 = vmatprep.mubr.f32.mxu0 0.0
      %1051 = vmatmul.mubr.f32.gmra.mrb[0].mxu0 %v907
      %v1052 = vpop.f32.mrb[0].mxu0
      %v1053 = vadd.f32 0.0, %v1052
      %v1054 = vpop.f32.mrb[0].mxu0
      %1055 = vdwg.mxu0
      %v1056 = vadd.f32 %v816, %v982
      %v1057 = vadd.f32 %v818, %v984
      %v1058 = vadd.f32 %v887, %v1053
      %v1059 = vld [vmem:[#allocation2] sm:$0xff]
      %v1060 = vld [vmem:[#allocation2 + $0x8] sm:$0xf]
      %s1061 = scalar_lea.vmem %s4, 6
      %v1062 = vld [vmem:[%s1061] sm:$0x3]
      %v1065 = vcombine.high %v1059, %v1059
      %1066 = vrot.lane.b32.xlu0 %v1059, 110
      %v1067 = vpop.permute.xlu0 %1066
      %1068 = vrot.lane.b32.xlu0 %v1065, 110
      %v1069 = vpop.permute.xlu0 %1068
      %1070 = vrot.lane.b32.xlu0 %v1060, 110
      %v1071 = vpop.permute.xlu0 %1070
      %vm1072 = vcmask 900096
      %v1073 = vsel %vm1072, %v1067, %v1069
      %v1074 = vsel %vm1072, %v1069, %v1071
      %v1076 = vsel %vm588, %v1062, 0
      %v1078 = vsel %vm592, %v1073, 0
      %v1080 = vsel %vm592, %v1074, 0
      %v1082 = vsel %vm592, %v1071, 0
      %1084 = vmatprep.subr.mxu0 %v1080
      %1085 = vmatpush1.msra.mxu0 %v1078
      %1086 = vmatprep.subr.mxu0 0.0
      %1087 = vmatpush1.msra.mxu0 0.0
      %1088 = vmatprep.subr.mxu0 0.0
      %1089 = vmatpush1.msra.mxu0 0.0
      %1090 = vmatprep.subr.mxu0 0.0
      %1091 = vmatpush1.msra.mxu0 0.0
      %1092 = vmatprep.subr.mxu0 0.0
      %1093 = vmatpush1.msra.mxu0 0.0
      %1094 = vmatprep.subr.mxu0 0.0
      %1095 = vmatpush1.msra.mxu0 0.0
      %1096 = vmatprep.subr.mxu0 0.0
      %1097 = vmatpush1.msra.mxu0 0.0
      %1098 = vmatprep.subr.mxu0 0.0
      %1099 = vmatpush1.msra.mxu0 0.0
      %1100 = vmatprep.subr.mxu0 0.0
      %1101 = vmatpush1.msra.mxu0 0.0
      %1102 = vmatprep.subr.mxu0 0.0
      %1103 = vmatpush1.msra.mxu0 0.0
      %1104 = vmatprep.subr.mxu0 0.0
      %1105 = vmatpush1.msra.mxu0 0.0
      %1106 = vmatprep.subr.mxu0 0.0
      %1107 = vmatpush1.msra.mxu0 0.0
      %1108 = vmatprep.subr.mxu0 0.0
      %1109 = vmatpush1.msra.mxu0 0.0
      %1110 = vmatprep.subr.mxu0 0.0
      %1111 = vmatpush1.msra.mxu0 0.0
      %1112 = vmatprep.subr.mxu0 0.0
      %1113 = vmatpush1.msra.mxu0 0.0
      %1114 = vmatprep.subr.mxu0 0.0
      %1115 = vmatpush1.msra.mxu0 0.0
      %1116 = vmatprep.subr.mxu0 0.0
      %1117 = vmatpush1.msra.mxu0 0.0
      %1118 = vmatprep.subr.mxu0 0.0
      %1119 = vmatpush1.msra.mxu0 0.0
      %1120 = vmatprep.subr.mxu0 0.0
      %1121 = vmatpush1.msra.mxu0 0.0
      %1122 = vmatprep.subr.mxu0 0.0
      %1123 = vmatpush1.msra.mxu0 0.0
      %1124 = vmatprep.subr.mxu0 0.0
      %1125 = vmatpush1.msra.mxu0 0.0
      %1126 = vmatprep.subr.mxu0 0.0
      %1127 = vmatpush1.msra.mxu0 0.0
      %1128 = vmatprep.subr.mxu0 0.0
      %1129 = vmatpush1.msra.mxu0 0.0
      %1130 = vmatprep.subr.mxu0 0.0
      %1131 = vmatpush1.msra.mxu0 0.0
      %1132 = vmatprep.subr.mxu0 0.0
      %1133 = vmatpush1.msra.mxu0 0.0
      %1134 = vmatprep.subr.mxu0 0.0
      %1135 = vmatpush1.msra.mxu0 0.0
      %1136 = vmatprep.subr.mxu0 0.0
      %1137 = vmatpush1.msra.mxu0 0.0
      %1138 = vmatprep.subr.mxu0 0.0
      %1139 = vmatpush1.msra.mxu0 0.0
      %1140 = vmatprep.subr.mxu0 0.0
      %1141 = vmatpush1.msra.mxu0 0.0
      %1142 = vmatprep.subr.mxu0 0.0
      %1143 = vmatpush1.msra.mxu0 0.0
      %1144 = vmatprep.subr.mxu0 0.0
      %1145 = vmatpush1.msra.mxu0 0.0
      %1146 = vmatprep.subr.mxu0 0.0
      %1147 = vmatpush1.msra.mxu0 0.0
      %1148 = vmatprep.mubr.f32.mxu0 0.0
      %1149 = vmatmul.mubr.f32.gmra.mrb[0].mxu0 %v1076
      %v1150 = vpop.f32.mrb[0].mxu0
      %v1151 = vadd.f32 0.0, %v1150
      %v1152 = vpop.f32.mrb[0].mxu0
      %v1153 = vadd.f32 0.0, %v1152
      %1154 = vdwg.mxu0
      %1155 = vmatprep.subr.mxu0 0.0
      %1156 = vmatpush1.msra.mxu0 %v1082
      %1157 = vmatprep.subr.mxu0 0.0
      %1158 = vmatpush1.msra.mxu0 0.0
      %1159 = vmatprep.subr.mxu0 0.0
      %1160 = vmatpush1.msra.mxu0 0.0
      %1161 = vmatprep.subr.mxu0 0.0
      %1162 = vmatpush1.msra.mxu0 0.0
      %1163 = vmatprep.subr.mxu0 0.0
      %1164 = vmatpush1.msra.mxu0 0.0
      %1165 = vmatprep.subr.mxu0 0.0
      %1166 = vmatpush1.msra.mxu0 0.0
      %1167 = vmatprep.subr.mxu0 0.0
      %1168 = vmatpush1.msra.mxu0 0.0
      %1169 = vmatprep.subr.mxu0 0.0
      %1170 = vmatpush1.msra.mxu0 0.0
      %1171 = vmatprep.subr.mxu0 0.0
      %1172 = vmatpush1.msra.mxu0 0.0
      %1173 = vmatprep.subr.mxu0 0.0
      %1174 = vmatpush1.msra.mxu0 0.0
      %1175 = vmatprep.subr.mxu0 0.0
      %1176 = vmatpush1.msra.mxu0 0.0
      %1177 = vmatprep.subr.mxu0 0.0
      %1178 = vmatpush1.msra.mxu0 0.0
      %1179 = vmatprep.subr.mxu0 0.0
      %1180 = vmatpush1.msra.mxu0 0.0
      %1181 = vmatprep.subr.mxu0 0.0
      %1182 = vmatpush1.msra.mxu0 0.0
      %1183 = vmatprep.subr.mxu0 0.0
      %1184 = vmatpush1.msra.mxu0 0.0
      %1185 = vmatprep.subr.mxu0 0.0
      %1186 = vmatpush1.msra.mxu0 0.0
      %1187 = vmatprep.subr.mxu0 0.0
      %1188 = vmatpush1.msra.mxu0 0.0
      %1189 = vmatprep.subr.mxu0 0.0
      %1190 = vmatpush1.msra.mxu0 0.0
      %1191 = vmatprep.subr.mxu0 0.0
      %1192 = vmatpush1.msra.mxu0 0.0
      %1193 = vmatprep.subr.mxu0 0.0
      %1194 = vmatpush1.msra.mxu0 0.0
      %1195 = vmatprep.subr.mxu0 0.0
      %1196 = vmatpush1.msra.mxu0 0.0
      %1197 = vmatprep.subr.mxu0 0.0
      %1198 = vmatpush1.msra.mxu0 0.0
      %1199 = vmatprep.subr.mxu0 0.0
      %1200 = vmatpush1.msra.mxu0 0.0
      %1201 = vmatprep.subr.mxu0 0.0
      %1202 = vmatpush1.msra.mxu0 0.0
      %1203 = vmatprep.subr.mxu0 0.0
      %1204 = vmatpush1.msra.mxu0 0.0
      %1205 = vmatprep.subr.mxu0 0.0
      %1206 = vmatpush1.msra.mxu0 0.0
      %1207 = vmatprep.subr.mxu0 0.0
      %1208 = vmatpush1.msra.mxu0 0.0
      %1209 = vmatprep.subr.mxu0 0.0
      %1210 = vmatpush1.msra.mxu0 0.0
      %1211 = vmatprep.subr.mxu0 0.0
      %1212 = vmatpush1.msra.mxu0 0.0
      %1213 = vmatprep.subr.mxu0 0.0
      %1214 = vmatpush1.msra.mxu0 0.0
      %1215 = vmatprep.subr.mxu0 0.0
      %1216 = vmatpush1.msra.mxu0 0.0
      %1217 = vmatprep.subr.mxu0 0.0
      %1218 = vmatpush1.msra.mxu0 0.0
      %1219 = vmatprep.mubr.f32.mxu0 0.0
      %1220 = vmatmul.mubr.f32.gmra.mrb[0].mxu0 %v1076
      %v1221 = vpop.f32.mrb[0].mxu0
      %v1222 = vadd.f32 0.0, %v1221
      %v1223 = vpop.f32.mrb[0].mxu0
      %1224 = vdwg.mxu0
      %v1225 = vadd.f32 %v1056, %v1151
      %v1226 = vadd.f32 %v1057, %v1153
      %v1227 = vadd.f32 %v1058, %v1222
      %v1228 = vld [vmem:[#allocation2] sm:$0xff]
      %v1229 = vld [vmem:[#allocation2 + $0x8] sm:$0xf]
      %s1230 = scalar_lea.vmem %s4, 8
      %v1231 = vld [vmem:[%s1230] sm:$0x3]
      %v1234 = vcombine.high %v1228, %v1228
      %1235 = vrot.lane.b32.xlu0 %v1228, 109
      %v1236 = vpop.permute.xlu0 %1235
      %1237 = vrot.lane.b32.xlu0 %v1234, 109
      %v1238 = vpop.permute.xlu0 %1237
      %1239 = vrot.lane.b32.xlu0 %v1229, 109
      %v1240 = vpop.permute.xlu0 %1239
      %vm1241 = vcmask 891904
      %v1242 = vsel %vm1241, %v1236, %v1238
      %v1243 = vsel %vm1241, %v1238, %v1240
      %v1245 = vsel %vm588, %v1231, 0
      %v1247 = vsel %vm592, %v1242, 0
      %v1249 = vsel %vm592, %v1243, 0
      %v1251 = vsel %vm592, %v1240, 0
      %1253 = vmatprep.subr.mxu0 %v1249
      %1254 = vmatpush1.msra.mxu0 %v1247
      %1255 = vmatprep.subr.mxu0 0.0
      %1256 = vmatpush1.msra.mxu0 0.0
      %1257 = vmatprep.subr.mxu0 0.0
      %1258 = vmatpush1.msra.mxu0 0.0
      %1259 = vmatprep.subr.mxu0 0.0
      %1260 = vmatpush1.msra.mxu0 0.0
      %1261 = vmatprep.subr.mxu0 0.0
      %1262 = vmatpush1.msra.mxu0 0.0
      %1263 = vmatprep.subr.mxu0 0.0
      %1264 = vmatpush1.msra.mxu0 0.0
      %1265 = vmatprep.subr.mxu0 0.0
      %1266 = vmatpush1.msra.mxu0 0.0
      %1267 = vmatprep.subr.mxu0 0.0
      %1268 = vmatpush1.msra.mxu0 0.0
      %1269 = vmatprep.subr.mxu0 0.0
      %1270 = vmatpush1.msra.mxu0 0.0
      %1271 = vmatprep.subr.mxu0 0.0
      %1272 = vmatpush1.msra.mxu0 0.0
      %1273 = vmatprep.subr.mxu0 0.0
      %1274 = vmatpush1.msra.mxu0 0.0
      %1275 = vmatprep.subr.mxu0 0.0
      %1276 = vmatpush1.msra.mxu0 0.0
      %1277 = vmatprep.subr.mxu0 0.0
      %1278 = vmatpush1.msra.mxu0 0.0
      %1279 = vmatprep.subr.mxu0 0.0
      %1280 = vmatpush1.msra.mxu0 0.0
      %1281 = vmatprep.subr.mxu0 0.0
      %1282 = vmatpush1.msra.mxu0 0.0
      %1283 = vmatprep.subr.mxu0 0.0
      %1284 = vmatpush1.msra.mxu0 0.0
      %1285 = vmatprep.subr.mxu0 0.0
      %1286 = vmatpush1.msra.mxu0 0.0
      %1287 = vmatprep.subr.mxu0 0.0
      %1288 = vmatpush1.msra.mxu0 0.0
      %1289 = vmatprep.subr.mxu0 0.0
      %1290 = vmatpush1.msra.mxu0 0.0
      %1291 = vmatprep.subr.mxu0 0.0
      %1292 = vmatpush1.msra.mxu0 0.0
      %1293 = vmatprep.subr.mxu0 0.0
      %1294 = vmatpush1.msra.mxu0 0.0
      %1295 = vmatprep.subr.mxu0 0.0
      %1296 = vmatpush1.msra.mxu0 0.0
      %1297 = vmatprep.subr.mxu0 0.0
      %1298 = vmatpush1.msra.mxu0 0.0
      %1299 = vmatprep.subr.mxu0 0.0
      %1300 = vmatpush1.msra.mxu0 0.0
      %1301 = vmatprep.subr.mxu0 0.0
      %1302 = vmatpush1.msra.mxu0 0.0
      %1303 = vmatprep.subr.mxu0 0.0
      %1304 = vmatpush1.msra.mxu0 0.0
      %1305 = vmatprep.subr.mxu0 0.0
      %1306 = vmatpush1.msra.mxu0 0.0
      %1307 = vmatprep.subr.mxu0 0.0
      %1308 = vmatpush1.msra.mxu0 0.0
      %1309 = vmatprep.subr.mxu0 0.0
      %1310 = vmatpush1.msra.mxu0 0.0
      %1311 = vmatprep.subr.mxu0 0.0
      %1312 = vmatpush1.msra.mxu0 0.0
      %1313 = vmatprep.subr.mxu0 0.0
      %1314 = vmatpush1.msra.mxu0 0.0
      %1315 = vmatprep.subr.mxu0 0.0
      %1316 = vmatpush1.msra.mxu0 0.0
      %1317 = vmatprep.mubr.f32.mxu0 0.0
      %1318 = vmatmul.mubr.f32.gmra.mrb[0].mxu0 %v1245
      %v1319 = vpop.f32.mrb[0].mxu0
      %v1320 = vadd.f32 0.0, %v1319
      %v1321 = vpop.f32.mrb[0].mxu0
      %v1322 = vadd.f32 0.0, %v1321
      %1323 = vdwg.mxu0
      %1324 = vmatprep.subr.mxu0 0.0
      %1325 = vmatpush1.msra.mxu0 %v1251
      %1326 = vmatprep.subr.mxu0 0.0
      %1327 = vmatpush1.msra.mxu0 0.0
      %1328 = vmatprep.subr.mxu0 0.0
      %1329 = vmatpush1.msra.mxu0 0.0
      %1330 = vmatprep.subr.mxu0 0.0
      %1331 = vmatpush1.msra.mxu0 0.0
      %1332 = vmatprep.subr.mxu0 0.0
      %1333 = vmatpush1.msra.mxu0 0.0
      %1334 = vmatprep.subr.mxu0 0.0
      %1335 = vmatpush1.msra.mxu0 0.0
      %1336 = vmatprep.subr.mxu0 0.0
      %1337 = vmatpush1.msra.mxu0 0.0
      %1338 = vmatprep.subr.mxu0 0.0
      %1339 = vmatpush1.msra.mxu0 0.0
      %1340 = vmatprep.subr.mxu0 0.0
      %1341 = vmatpush1.msra.mxu0 0.0
      %1342 = vmatprep.subr.mxu0 0.0
      %1343 = vmatpush1.msra.mxu0 0.0
      %1344 = vmatprep.subr.mxu0 0.0
      %1345 = vmatpush1.msra.mxu0 0.0
      %1346 = vmatprep.subr.mxu0 0.0
      %1347 = vmatpush1.msra.mxu0 0.0
      %1348 = vmatprep.subr.mxu0 0.0
      %1349 = vmatpush1.msra.mxu0 0.0
      %1350 = vmatprep.subr.mxu0 0.0
      %1351 = vmatpush1.msra.mxu0 0.0
      %1352 = vmatprep.subr.mxu0 0.0
      %1353 = vmatpush1.msra.mxu0 0.0
      %1354 = vmatprep.subr.mxu0 0.0
      %1355 = vmatpush1.msra.mxu0 0.0
      %1356 = vmatprep.subr.mxu0 0.0
      %1357 = vmatpush1.msra.mxu0 0.0
      %1358 = vmatprep.subr.mxu0 0.0
      %1359 = vmatpush1.msra.mxu0 0.0
      %1360 = vmatprep.subr.mxu0 0.0
      %1361 = vmatpush1.msra.mxu0 0.0
      %1362 = vmatprep.subr.mxu0 0.0
      %1363 = vmatpush1.msra.mxu0 0.0
      %1364 = vmatprep.subr.mxu0 0.0
      %1365 = vmatpush1.msra.mxu0 0.0
      %1366 = vmatprep.subr.mxu0 0.0
      %1367 = vmatpush1.msra.mxu0 0.0
      %1368 = vmatprep.subr.mxu0 0.0
      %1369 = vmatpush1.msra.mxu0 0.0
      %1370 = vmatprep.subr.mxu0 0.0
      %1371 = vmatpush1.msra.mxu0 0.0
      %1372 = vmatprep.subr.mxu0 0.0
      %1373 = vmatpush1.msra.mxu0 0.0
      %1374 = vmatprep.subr.mxu0 0.0
      %1375 = vmatpush1.msra.mxu0 0.0
      %1376 = vmatprep.subr.mxu0 0.0
      %1377 = vmatpush1.msra.mxu0 0.0
      %1378 = vmatprep.subr.mxu0 0.0
      %1379 = vmatpush1.msra.mxu0 0.0
      %1380 = vmatprep.subr.mxu0 0.0
      %1381 = vmatpush1.msra.mxu0 0.0
      %1382 = vmatprep.subr.mxu0 0.0
      %1383 = vmatpush1.msra.mxu0 0.0
      %1384 = vmatprep.subr.mxu0 0.0
      %1385 = vmatpush1.msra.mxu0 0.0
      %1386 = vmatprep.subr.mxu0 0.0
      %1387 = vmatpush1.msra.mxu0 0.0
      %1388 = vmatprep.mubr.f32.mxu0 0.0
      %1389 = vmatmul.mubr.f32.gmra.mrb[0].mxu0 %v1245
      %v1390 = vpop.f32.mrb[0].mxu0
      %v1391 = vadd.f32 0.0, %v1390
      %v1392 = vpop.f32.mrb[0].mxu0
      %1393 = vdwg.mxu0
      %v1394 = vadd.f32 %v1225, %v1320
      %v1395 = vadd.f32 %v1226, %v1322
      %v1396 = vadd.f32 %v1227, %v1391
      %v1397 = vld [vmem:[#allocation2] sm:$0xff]
      %v1398 = vld [vmem:[#allocation2 + $0x8] sm:$0xf]
      %s1399 = scalar_lea.vmem %s4, 10
      %v1400 = vld [vmem:[%s1399] sm:$0x3]
      %v1403 = vcombine.high %v1397, %v1397
      %1404 = vrot.lane.b32.xlu0 %v1397, 108
      %v1405 = vpop.permute.xlu0 %1404
      %1406 = vrot.lane.b32.xlu0 %v1403, 108
      %v1407 = vpop.permute.xlu0 %1406
      %1408 = vrot.lane.b32.xlu0 %v1398, 108
      %v1409 = vpop.permute.xlu0 %1408
      %vm1410 = vcmask 883712
      %v1411 = vsel %vm1410, %v1405, %v1407
      %v1412 = vsel %vm1410, %v1407, %v1409
      %v1414 = vsel %vm588, %v1400, 0
      %v1416 = vsel %vm592, %v1411, 0
      %v1418 = vsel %vm592, %v1412, 0
      %v1420 = vsel %vm592, %v1409, 0
      %1422 = vmatprep.subr.mxu0 %v1418
      %1423 = vmatpush1.msra.mxu0 %v1416
      %1424 = vmatprep.subr.mxu0 0.0
      %1425 = vmatpush1.msra.mxu0 0.0
      %1426 = vmatprep.subr.mxu0 0.0
      %1427 = vmatpush1.msra.mxu0 0.0
      %1428 = vmatprep.subr.mxu0 0.0
      %1429 = vmatpush1.msra.mxu0 0.0
      %1430 = vmatprep.subr.mxu0 0.0
      %1431 = vmatpush1.msra.mxu0 0.0
      %1432 = vmatprep.subr.mxu0 0.0
      %1433 = vmatpush1.msra.mxu0 0.0
      %1434 = vmatprep.subr.mxu0 0.0
      %1435 = vmatpush1.msra.mxu0 0.0
      %1436 = vmatprep.subr.mxu0 0.0
      %1437 = vmatpush1.msra.mxu0 0.0
      %1438 = vmatprep.subr.mxu0 0.0
      %1439 = vmatpush1.msra.mxu0 0.0
      %1440 = vmatprep.subr.mxu0 0.0
      %1441 = vmatpush1.msra.mxu0 0.0
      %1442 = vmatprep.subr.mxu0 0.0
      %1443 = vmatpush1.msra.mxu0 0.0
      %1444 = vmatprep.subr.mxu0 0.0
      %1445 = vmatpush1.msra.mxu0 0.0
      %1446 = vmatprep.subr.mxu0 0.0
      %1447 = vmatpush1.msra.mxu0 0.0
      %1448 = vmatprep.subr.mxu0 0.0
      %1449 = vmatpush1.msra.mxu0 0.0
      %1450 = vmatprep.subr.mxu0 0.0
      %1451 = vmatpush1.msra.mxu0 0.0
      %1452 = vmatprep.subr.mxu0 0.0
      %1453 = vmatpush1.msra.mxu0 0.0
      %1454 = vmatprep.subr.mxu0 0.0
      %1455 = vmatpush1.msra.mxu0 0.0
      %1456 = vmatprep.subr.mxu0 0.0
      %1457 = vmatpush1.msra.mxu0 0.0
      %1458 = vmatprep.subr.mxu0 0.0
      %1459 = vmatpush1.msra.mxu0 0.0
      %1460 = vmatprep.subr.mxu0 0.0
      %1461 = vmatpush1.msra.mxu0 0.0
      %1462 = vmatprep.subr.mxu0 0.0
      %1463 = vmatpush1.msra.mxu0 0.0
      %1464 = vmatprep.subr.mxu0 0.0
      %1465 = vmatpush1.msra.mxu0 0.0
      %1466 = vmatprep.subr.mxu0 0.0
      %1467 = vmatpush1.msra.mxu0 0.0
      %1468 = vmatprep.subr.mxu0 0.0
      %1469 = vmatpush1.msra.mxu0 0.0
      %1470 = vmatprep.subr.mxu0 0.0
      %1471 = vmatpush1.msra.mxu0 0.0
      %1472 = vmatprep.subr.mxu0 0.0
      %1473 = vmatpush1.msra.mxu0 0.0
      %1474 = vmatprep.subr.mxu0 0.0
      %1475 = vmatpush1.msra.mxu0 0.0
      %1476 = vmatprep.subr.mxu0 0.0
      %1477 = vmatpush1.msra.mxu0 0.0
      %1478 = vmatprep.subr.mxu0 0.0
      %1479 = vmatpush1.msra.mxu0 0.0
      %1480 = vmatprep.subr.mxu0 0.0
      %1481 = vmatpush1.msra.mxu0 0.0
      %1482 = vmatprep.subr.mxu0 0.0
      %1483 = vmatpush1.msra.mxu0 0.0
      %1484 = vmatprep.subr.mxu0 0.0
      %1485 = vmatpush1.msra.mxu0 0.0
      %1486 = vmatprep.mubr.f32.mxu0 0.0
      %1487 = vmatmul.mubr.f32.gmra.mrb[0].mxu0 %v1414
      %v1488 = vpop.f32.mrb[0].mxu0
      %v1489 = vadd.f32 0.0, %v1488
      %v1490 = vpop.f32.mrb[0].mxu0
      %v1491 = vadd.f32 0.0, %v1490
      %1492 = vdwg.mxu0
      %1493 = vmatprep.subr.mxu0 0.0
      %1494 = vmatpush1.msra.mxu0 %v1420
      %1495 = vmatprep.subr.mxu0 0.0
      %1496 = vmatpush1.msra.mxu0 0.0
      %1497 = vmatprep.subr.mxu0 0.0
      %1498 = vmatpush1.msra.mxu0 0.0
      %1499 = vmatprep.subr.mxu0 0.0
      %1500 = vmatpush1.msra.mxu0 0.0
      %1501 = vmatprep.subr.mxu0 0.0
      %1502 = vmatpush1.msra.mxu0 0.0
      %1503 = vmatprep.subr.mxu0 0.0
      %1504 = vmatpush1.msra.mxu0 0.0
      %1505 = vmatprep.subr.mxu0 0.0
      %1506 = vmatpush1.msra.mxu0 0.0
      %1507 = vmatprep.subr.mxu0 0.0
      %1508 = vmatpush1.msra.mxu0 0.0
      %1509 = vmatprep.subr.mxu0 0.0
      %1510 = vmatpush1.msra.mxu0 0.0
      %1511 = vmatprep.subr.mxu0 0.0
      %1512 = vmatpush1.msra.mxu0 0.0
      %1513 = vmatprep.subr.mxu0 0.0
      %1514 = vmatpush1.msra.mxu0 0.0
      %1515 = vmatprep.subr.mxu0 0.0
      %1516 = vmatpush1.msra.mxu0 0.0
      %1517 = vmatprep.subr.mxu0 0.0
      %1518 = vmatpush1.msra.mxu0 0.0
      %1519 = vmatprep.subr.mxu0 0.0
      %1520 = vmatpush1.msra.mxu0 0.0
      %1521 = vmatprep.subr.mxu0 0.0
      %1522 = vmatpush1.msra.mxu0 0.0
      %1523 = vmatprep.subr.mxu0 0.0
      %1524 = vmatpush1.msra.mxu0 0.0
      %1525 = vmatprep.subr.mxu0 0.0
      %1526 = vmatpush1.msra.mxu0 0.0
      %1527 = vmatprep.subr.mxu0 0.0
      %1528 = vmatpush1.msra.mxu0 0.0
      %1529 = vmatprep.subr.mxu0 0.0
      %1530 = vmatpush1.msra.mxu0 0.0
      %1531 = vmatprep.subr.mxu0 0.0
      %1532 = vmatpush1.msra.mxu0 0.0
      %1533 = vmatprep.subr.mxu0 0.0
      %1534 = vmatpush1.msra.mxu0 0.0
      %1535 = vmatprep.subr.mxu0 0.0
      %1536 = vmatpush1.msra.mxu0 0.0
      %1537 = vmatprep.subr.mxu0 0.0
      %1538 = vmatpush1.msra.mxu0 0.0
      %1539 = vmatprep.subr.mxu0 0.0
      %1540 = vmatpush1.msra.mxu0 0.0
      %1541 = vmatprep.subr.mxu0 0.0
      %1542 = vmatpush1.msra.mxu0 0.0
      %1543 = vmatprep.subr.mxu0 0.0
      %1544 = vmatpush1.msra.mxu0 0.0
      %1545 = vmatprep.subr.mxu0 0.0
      %1546 = vmatpush1.msra.mxu0 0.0
      %1547 = vmatprep.subr.mxu0 0.0
      %1548 = vmatpush1.msra.mxu0 0.0
      %1549 = vmatprep.subr.mxu0 0.0
      %1550 = vmatpush1.msra.mxu0 0.0
      %1551 = vmatprep.subr.mxu0 0.0
      %1552 = vmatpush1.msra.mxu0 0.0
      %1553 = vmatprep.subr.mxu0 0.0
      %1554 = vmatpush1.msra.mxu0 0.0
      %1555 = vmatprep.subr.mxu0 0.0
      %1556 = vmatpush1.msra.mxu0 0.0
      %1557 = vmatprep.mubr.f32.mxu0 0.0
      %1558 = vmatmul.mubr.f32.gmra.mrb[0].mxu0 %v1414
      %v1559 = vpop.f32.mrb[0].mxu0
      %v1560 = vadd.f32 0.0, %v1559
      %v1561 = vpop.f32.mrb[0].mxu0
      %1562 = vdwg.mxu0
      %v1563 = vadd.f32 %v1394, %v1489
      %v1564 = vadd.f32 %v1395, %v1491
      %v1565 = vadd.f32 %v1396, %v1560
      %v1566 = vld [vmem:[#allocation2] sm:$0xff]
      %v1567 = vld [vmem:[#allocation2 + $0x8] sm:$0xf]
      %s1568 = scalar_lea.vmem %s4, 12
      %v1569 = vld [vmem:[%s1568] sm:$0x3]
      %v1572 = vcombine.high %v1566, %v1566
      %1573 = vrot.lane.b32.xlu0 %v1566, 92
      %v1574 = vpop.permute.xlu0 %1573
      %1575 = vrot.lane.b32.xlu0 %v1572, 92
      %v1576 = vpop.permute.xlu0 %1575
      %1577 = vrot.lane.b32.xlu0 %v1567, 92
      %v1578 = vpop.permute.xlu0 %1577
      %vm1579 = vcmask 752640
      %v1580 = vsel %vm1579, %v1574, %v1576
      %v1581 = vsel %vm1579, %v1576, %v1578
      %v1583 = vsel %vm588, %v1569, 0
      %v1585 = vsel %vm592, %v1580, 0
      %v1587 = vsel %vm592, %v1581, 0
      %v1589 = vsel %vm592, %v1578, 0
      %1591 = vmatprep.subr.mxu0 %v1587
      %1592 = vmatpush1.msra.mxu0 %v1585
      %1593 = vmatprep.subr.mxu0 0.0
      %1594 = vmatpush1.msra.mxu0 0.0
      %1595 = vmatprep.subr.mxu0 0.0
      %1596 = vmatpush1.msra.mxu0 0.0
      %1597 = vmatprep.subr.mxu0 0.0
      %1598 = vmatpush1.msra.mxu0 0.0
      %1599 = vmatprep.subr.mxu0 0.0
      %1600 = vmatpush1.msra.mxu0 0.0
      %1601 = vmatprep.subr.mxu0 0.0
      %1602 = vmatpush1.msra.mxu0 0.0
      %1603 = vmatprep.subr.mxu0 0.0
      %1604 = vmatpush1.msra.mxu0 0.0
      %1605 = vmatprep.subr.mxu0 0.0
      %1606 = vmatpush1.msra.mxu0 0.0
      %1607 = vmatprep.subr.mxu0 0.0
      %1608 = vmatpush1.msra.mxu0 0.0
      %1609 = vmatprep.subr.mxu0 0.0
      %1610 = vmatpush1.msra.mxu0 0.0
      %1611 = vmatprep.subr.mxu0 0.0
      %1612 = vmatpush1.msra.mxu0 0.0
      %1613 = vmatprep.subr.mxu0 0.0
      %1614 = vmatpush1.msra.mxu0 0.0
      %1615 = vmatprep.subr.mxu0 0.0
      %1616 = vmatpush1.msra.mxu0 0.0
      %1617 = vmatprep.subr.mxu0 0.0
      %1618 = vmatpush1.msra.mxu0 0.0
      %1619 = vmatprep.subr.mxu0 0.0
      %1620 = vmatpush1.msra.mxu0 0.0
      %1621 = vmatprep.subr.mxu0 0.0
      %1622 = vmatpush1.msra.mxu0 0.0
      %1623 = vmatprep.subr.mxu0 0.0
      %1624 = vmatpush1.msra.mxu0 0.0
      %1625 = vmatprep.subr.mxu0 0.0
      %1626 = vmatpush1.msra.mxu0 0.0
      %1627 = vmatprep.subr.mxu0 0.0
      %1628 = vmatpush1.msra.mxu0 0.0
      %1629 = vmatprep.subr.mxu0 0.0
      %1630 = vmatpush1.msra.mxu0 0.0
      %1631 = vmatprep.subr.mxu0 0.0
      %1632 = vmatpush1.msra.mxu0 0.0
      %1633 = vmatprep.subr.mxu0 0.0
      %1634 = vmatpush1.msra.mxu0 0.0
      %1635 = vmatprep.subr.mxu0 0.0
      %1636 = vmatpush1.msra.mxu0 0.0
      %1637 = vmatprep.subr.mxu0 0.0
      %1638 = vmatpush1.msra.mxu0 0.0
      %1639 = vmatprep.subr.mxu0 0.0
      %1640 = vmatpush1.msra.mxu0 0.0
      %1641 = vmatprep.subr.mxu0 0.0
      %1642 = vmatpush1.msra.mxu0 0.0
      %1643 = vmatprep.subr.mxu0 0.0
      %1644 = vmatpush1.msra.mxu0 0.0
      %1645 = vmatprep.subr.mxu0 0.0
      %1646 = vmatpush1.msra.mxu0 0.0
      %1647 = vmatprep.subr.mxu0 0.0
      %1648 = vmatpush1.msra.mxu0 0.0
      %1649 = vmatprep.subr.mxu0 0.0
      %1650 = vmatpush1.msra.mxu0 0.0
      %1651 = vmatprep.subr.mxu0 0.0
      %1652 = vmatpush1.msra.mxu0 0.0
      %1653 = vmatprep.subr.mxu0 0.0
      %1654 = vmatpush1.msra.mxu0 0.0
      %1655 = vmatprep.mubr.f32.mxu0 0.0
      %1656 = vmatmul.mubr.f32.gmra.mrb[0].mxu0 %v1583
      %v1657 = vpop.f32.mrb[0].mxu0
      %v1658 = vadd.f32 0.0, %v1657
      %v1659 = vpop.f32.mrb[0].mxu0
      %v1660 = vadd.f32 0.0, %v1659
      %1661 = vdwg.mxu0
      %1662 = vmatprep.subr.mxu0 0.0
      %1663 = vmatpush1.msra.mxu0 %v1589
      %1664 = vmatprep.subr.mxu0 0.0
      %1665 = vmatpush1.msra.mxu0 0.0
      %1666 = vmatprep.subr.mxu0 0.0
      %1667 = vmatpush1.msra.mxu0 0.0
      %1668 = vmatprep.subr.mxu0 0.0
      %1669 = vmatpush1.msra.mxu0 0.0
      %1670 = vmatprep.subr.mxu0 0.0
      %1671 = vmatpush1.msra.mxu0 0.0
      %1672 = vmatprep.subr.mxu0 0.0
      %1673 = vmatpush1.msra.mxu0 0.0
      %1674 = vmatprep.subr.mxu0 0.0
      %1675 = vmatpush1.msra.mxu0 0.0
      %1676 = vmatprep.subr.mxu0 0.0
      %1677 = vmatpush1.msra.mxu0 0.0
      %1678 = vmatprep.subr.mxu0 0.0
      %1679 = vmatpush1.msra.mxu0 0.0
      %1680 = vmatprep.subr.mxu0 0.0
      %1681 = vmatpush1.msra.mxu0 0.0
      %1682 = vmatprep.subr.mxu0 0.0
      %1683 = vmatpush1.msra.mxu0 0.0
      %1684 = vmatprep.subr.mxu0 0.0
      %1685 = vmatpush1.msra.mxu0 0.0
      %1686 = vmatprep.subr.mxu0 0.0
      %1687 = vmatpush1.msra.mxu0 0.0
      %1688 = vmatprep.subr.mxu0 0.0
      %1689 = vmatpush1.msra.mxu0 0.0
      %1690 = vmatprep.subr.mxu0 0.0
      %1691 = vmatpush1.msra.mxu0 0.0
      %1692 = vmatprep.subr.mxu0 0.0
      %1693 = vmatpush1.msra.mxu0 0.0
      %1694 = vmatprep.subr.mxu0 0.0
      %1695 = vmatpush1.msra.mxu0 0.0
      %1696 = vmatprep.subr.mxu0 0.0
      %1697 = vmatpush1.msra.mxu0 0.0
      %1698 = vmatprep.subr.mxu0 0.0
      %1699 = vmatpush1.msra.mxu0 0.0
      %1700 = vmatprep.subr.mxu0 0.0
      %1701 = vmatpush1.msra.mxu0 0.0
      %1702 = vmatprep.subr.mxu0 0.0
      %1703 = vmatpush1.msra.mxu0 0.0
      %1704 = vmatprep.subr.mxu0 0.0
      %1705 = vmatpush1.msra.mxu0 0.0
      %1706 = vmatprep.subr.mxu0 0.0
      %1707 = vmatpush1.msra.mxu0 0.0
      %1708 = vmatprep.subr.mxu0 0.0
      %1709 = vmatpush1.msra.mxu0 0.0
      %1710 = vmatprep.subr.mxu0 0.0
      %1711 = vmatpush1.msra.mxu0 0.0
      %1712 = vmatprep.subr.mxu0 0.0
      %1713 = vmatpush1.msra.mxu0 0.0
      %1714 = vmatprep.subr.mxu0 0.0
      %1715 = vmatpush1.msra.mxu0 0.0
      %1716 = vmatprep.subr.mxu0 0.0
      %1717 = vmatpush1.msra.mxu0 0.0
      %1718 = vmatprep.subr.mxu0 0.0
      %1719 = vmatpush1.msra.mxu0 0.0
      %1720 = vmatprep.subr.mxu0 0.0
      %1721 = vmatpush1.msra.mxu0 0.0
      %1722 = vmatprep.subr.mxu0 0.0
      %1723 = vmatpush1.msra.mxu0 0.0
      %1724 = vmatprep.subr.mxu0 0.0
      %1725 = vmatpush1.msra.mxu0 0.0
      %1726 = vmatprep.mubr.f32.mxu0 0.0
      %1727 = vmatmul.mubr.f32.gmra.mrb[0].mxu0 %v1583
      %v1728 = vpop.f32.mrb[0].mxu0
      %v1729 = vadd.f32 0.0, %v1728
      %v1730 = vpop.f32.mrb[0].mxu0
      %1731 = vdwg.mxu0
      %v1732 = vadd.f32 %v1563, %v1658
      %v1733 = vadd.f32 %v1564, %v1660
      %v1734 = vadd.f32 %v1565, %v1729
      %v1735 = vld [vmem:[#allocation2] sm:$0xff]
      %v1736 = vld [vmem:[#allocation2 + $0x8] sm:$0xf]
      %s1737 = scalar_lea.vmem %s4, 14
      %v1738 = vld [vmem:[%s1737] sm:$0x3]
      %v1741 = vcombine.high %v1735, %v1735
      %1742 = vrot.lane.b32.xlu0 %v1735, 91
      %v1743 = vpop.permute.xlu0 %1742
      %1744 = vrot.lane.b32.xlu0 %v1741, 91
      %v1745 = vpop.permute.xlu0 %1744
      %1746 = vrot.lane.b32.xlu0 %v1736, 91
      %v1747 = vpop.permute.xlu0 %1746
      %vm1748 = vcmask 744448
      %v1749 = vsel %vm1748, %v1743, %v1745
      %v1750 = vsel %vm1748, %v1745, %v1747
      %v1752 = vsel %vm588, %v1738, 0
      %v1754 = vsel %vm592, %v1749, 0
      %v1756 = vsel %vm592, %v1750, 0
      %v1758 = vsel %vm592, %v1747, 0
      %1760 = vmatprep.subr.mxu0 %v1756
      %1761 = vmatpush1.msra.mxu0 %v1754
      %1762 = vmatprep.subr.mxu0 0.0
      %1763 = vmatpush1.msra.mxu0 0.0
      %1764 = vmatprep.subr.mxu0 0.0
      %1765 = vmatpush1.msra.mxu0 0.0
      %1766 = vmatprep.subr.mxu0 0.0
      %1767 = vmatpush1.msra.mxu0 0.0
      %1768 = vmatprep.subr.mxu0 0.0
      %1769 = vmatpush1.msra.mxu0 0.0
      %1770 = vmatprep.subr.mxu0 0.0
      %1771 = vmatpush1.msra.mxu0 0.0
      %1772 = vmatprep.subr.mxu0 0.0
      %1773 = vmatpush1.msra.mxu0 0.0
      %1774 = vmatprep.subr.mxu0 0.0
      %1775 = vmatpush1.msra.mxu0 0.0
      %1776 = vmatprep.subr.mxu0 0.0
      %1777 = vmatpush1.msra.mxu0 0.0
      %1778 = vmatprep.subr.mxu0 0.0
      %1779 = vmatpush1.msra.mxu0 0.0
      %1780 = vmatprep.subr.mxu0 0.0
      %1781 = vmatpush1.msra.mxu0 0.0
      %1782 = vmatprep.subr.mxu0 0.0
      %1783 = vmatpush1.msra.mxu0 0.0
      %1784 = vmatprep.subr.mxu0 0.0
      %1785 = vmatpush1.msra.mxu0 0.0
      %1786 = vmatprep.subr.mxu0 0.0
      %1787 = vmatpush1.msra.mxu0 0.0
      %1788 = vmatprep.subr.mxu0 0.0
      %1789 = vmatpush1.msra.mxu0 0.0
      %1790 = vmatprep.subr.mxu0 0.0
      %1791 = vmatpush1.msra.mxu0 0.0
      %1792 = vmatprep.subr.mxu0 0.0
      %1793 = vmatpush1.msra.mxu0 0.0
      %1794 = vmatprep.subr.mxu0 0.0
      %1795 = vmatpush1.msra.mxu0 0.0
      %1796 = vmatprep.subr.mxu0 0.0
      %1797 = vmatpush1.msra.mxu0 0.0
      %1798 = vmatprep.subr.mxu0 0.0
      %1799 = vmatpush1.msra.mxu0 0.0
      %1800 = vmatprep.subr.mxu0 0.0
      %1801 = vmatpush1.msra.mxu0 0.0
      %1802 = vmatprep.subr.mxu0 0.0
      %1803 = vmatpush1.msra.mxu0 0.0
      %1804 = vmatprep.subr.mxu0 0.0
      %1805 = vmatpush1.msra.mxu0 0.0
      %1806 = vmatprep.subr.mxu0 0.0
      %1807 = vmatpush1.msra.mxu0 0.0
      %1808 = vmatprep.subr.mxu0 0.0
      %1809 = vmatpush1.msra.mxu0 0.0
      %1810 = vmatprep.subr.mxu0 0.0
      %1811 = vmatpush1.msra.mxu0 0.0
      %1812 = vmatprep.subr.mxu0 0.0
      %1813 = vmatpush1.msra.mxu0 0.0
      %1814 = vmatprep.subr.mxu0 0.0
      %1815 = vmatpush1.msra.mxu0 0.0
      %1816 = vmatprep.subr.mxu0 0.0
      %1817 = vmatpush1.msra.mxu0 0.0
      %1818 = vmatprep.subr.mxu0 0.0
      %1819 = vmatpush1.msra.mxu0 0.0
      %1820 = vmatprep.subr.mxu0 0.0
      %1821 = vmatpush1.msra.mxu0 0.0
      %1822 = vmatprep.subr.mxu0 0.0
      %1823 = vmatpush1.msra.mxu0 0.0
      %1824 = vmatprep.mubr.f32.mxu0 0.0
      %1825 = vmatmul.mubr.f32.gmra.mrb[0].mxu0 %v1752
      %v1826 = vpop.f32.mrb[0].mxu0
      %v1827 = vadd.f32 0.0, %v1826
      %v1828 = vpop.f32.mrb[0].mxu0
      %v1829 = vadd.f32 0.0, %v1828
      %1830 = vdwg.mxu0
      %1831 = vmatprep.subr.mxu0 0.0
      %1832 = vmatpush1.msra.mxu0 %v1758
      %1833 = vmatprep.subr.mxu0 0.0
      %1834 = vmatpush1.msra.mxu0 0.0
      %1835 = vmatprep.subr.mxu0 0.0
      %1836 = vmatpush1.msra.mxu0 0.0
      %1837 = vmatprep.subr.mxu0 0.0
      %1838 = vmatpush1.msra.mxu0 0.0
      %1839 = vmatprep.subr.mxu0 0.0
      %1840 = vmatpush1.msra.mxu0 0.0
      %1841 = vmatprep.subr.mxu0 0.0
      %1842 = vmatpush1.msra.mxu0 0.0
      %1843 = vmatprep.subr.mxu0 0.0
      %1844 = vmatpush1.msra.mxu0 0.0
      %1845 = vmatprep.subr.mxu0 0.0
      %1846 = vmatpush1.msra.mxu0 0.0
      %1847 = vmatprep.subr.mxu0 0.0
      %1848 = vmatpush1.msra.mxu0 0.0
      %1849 = vmatprep.subr.mxu0 0.0
      %1850 = vmatpush1.msra.mxu0 0.0
      %1851 = vmatprep.subr.mxu0 0.0
      %1852 = vmatpush1.msra.mxu0 0.0
      %1853 = vmatprep.subr.mxu0 0.0
      %1854 = vmatpush1.msra.mxu0 0.0
      %1855 = vmatprep.subr.mxu0 0.0
      %1856 = vmatpush1.msra.mxu0 0.0
      %1857 = vmatprep.subr.mxu0 0.0
      %1858 = vmatpush1.msra.mxu0 0.0
      %1859 = vmatprep.subr.mxu0 0.0
      %1860 = vmatpush1.msra.mxu0 0.0
      %1861 = vmatprep.subr.mxu0 0.0
      %1862 = vmatpush1.msra.mxu0 0.0
      %1863 = vmatprep.subr.mxu0 0.0
      %1864 = vmatpush1.msra.mxu0 0.0
      %1865 = vmatprep.subr.mxu0 0.0
      %1866 = vmatpush1.msra.mxu0 0.0
      %1867 = vmatprep.subr.mxu0 0.0
      %1868 = vmatpush1.msra.mxu0 0.0
      %1869 = vmatprep.subr.mxu0 0.0
      %1870 = vmatpush1.msra.mxu0 0.0
      %1871 = vmatprep.subr.mxu0 0.0
      %1872 = vmatpush1.msra.mxu0 0.0
      %1873 = vmatprep.subr.mxu0 0.0
      %1874 = vmatpush1.msra.mxu0 0.0
      %1875 = vmatprep.subr.mxu0 0.0
      %1876 = vmatpush1.msra.mxu0 0.0
      %1877 = vmatprep.subr.mxu0 0.0
      %1878 = vmatpush1.msra.mxu0 0.0
      %1879 = vmatprep.subr.mxu0 0.0
      %1880 = vmatpush1.msra.mxu0 0.0
      %1881 = vmatprep.subr.mxu0 0.0
      %1882 = vmatpush1.msra.mxu0 0.0
      %1883 = vmatprep.subr.mxu0 0.0
      %1884 = vmatpush1.msra.mxu0 0.0
      %1885 = vmatprep.subr.mxu0 0.0
      %1886 = vmatpush1.msra.mxu0 0.0
      %1887 = vmatprep.subr.mxu0 0.0
      %1888 = vmatpush1.msra.mxu0 0.0
      %1889 = vmatprep.subr.mxu0 0.0
      %1890 = vmatpush1.msra.mxu0 0.0
      %1891 = vmatprep.subr.mxu0 0.0
      %1892 = vmatpush1.msra.mxu0 0.0
      %1893 = vmatprep.subr.mxu0 0.0
      %1894 = vmatpush1.msra.mxu0 0.0
      %1895 = vmatprep.mubr.f32.mxu0 0.0
      %1896 = vmatmul.mubr.f32.gmra.mrb[0].mxu0 %v1752
      %v1897 = vpop.f32.mrb[0].mxu0
      %v1898 = vadd.f32 0.0, %v1897
      %v1899 = vpop.f32.mrb[0].mxu0
      %1900 = vdwg.mxu0
      %v1901 = vadd.f32 %v1732, %v1827
      %v1902 = vadd.f32 %v1733, %v1829
      %v1903 = vadd.f32 %v1734, %v1898
      %v1904 = vld [vmem:[#allocation2] sm:$0xff]
      %v1905 = vld [vmem:[#allocation2 + $0x8] sm:$0xf]
      %s1906 = scalar_lea.vmem %s4, 16
      %v1907 = vld [vmem:[%s1906] sm:$0x3]
      %v1910 = vcombine.high %v1904, %v1904
      %1911 = vrot.lane.b32.xlu0 %v1904, 90
      %v1912 = vpop.permute.xlu0 %1911
      %1913 = vrot.lane.b32.xlu0 %v1910, 90
      %v1914 = vpop.permute.xlu0 %1913
      %1915 = vrot.lane.b32.xlu0 %v1905, 90
      %v1916 = vpop.permute.xlu0 %1915
      %vm1917 = vcmask 736256
      %v1918 = vsel %vm1917, %v1912, %v1914
      %v1919 = vsel %vm1917, %v1914, %v1916
      %v1921 = vsel %vm588, %v1907, 0
      %v1923 = vsel %vm592, %v1918, 0
      %v1925 = vsel %vm592, %v1919, 0
      %v1927 = vsel %vm592, %v1916, 0
      %1929 = vmatprep.subr.mxu0 %v1925
      %1930 = vmatpush1.msra.mxu0 %v1923
      %1931 = vmatprep.subr.mxu0 0.0
      %1932 = vmatpush1.msra.mxu0 0.0
      %1933 = vmatprep.subr.mxu0 0.0
      %1934 = vmatpush1.msra.mxu0 0.0
      %1935 = vmatprep.subr.mxu0 0.0
      %1936 = vmatpush1.msra.mxu0 0.0
      %1937 = vmatprep.subr.mxu0 0.0
      %1938 = vmatpush1.msra.mxu0 0.0
      %1939 = vmatprep.subr.mxu0 0.0
      %1940 = vmatpush1.msra.mxu0 0.0
      %1941 = vmatprep.subr.mxu0 0.0
      %1942 = vmatpush1.msra.mxu0 0.0
      %1943 = vmatprep.subr.mxu0 0.0
      %1944 = vmatpush1.msra.mxu0 0.0
      %1945 = vmatprep.subr.mxu0 0.0
      %1946 = vmatpush1.msra.mxu0 0.0
      %1947 = vmatprep.subr.mxu0 0.0
      %1948 = vmatpush1.msra.mxu0 0.0
      %1949 = vmatprep.subr.mxu0 0.0
      %1950 = vmatpush1.msra.mxu0 0.0
      %1951 = vmatprep.subr.mxu0 0.0
      %1952 = vmatpush1.msra.mxu0 0.0
      %1953 = vmatprep.subr.mxu0 0.0
      %1954 = vmatpush1.msra.mxu0 0.0
      %1955 = vmatprep.subr.mxu0 0.0
      %1956 = vmatpush1.msra.mxu0 0.0
      %1957 = vmatprep.subr.mxu0 0.0
      %1958 = vmatpush1.msra.mxu0 0.0
      %1959 = vmatprep.subr.mxu0 0.0
      %1960 = vmatpush1.msra.mxu0 0.0
      %1961 = vmatprep.subr.mxu0 0.0
      %1962 = vmatpush1.msra.mxu0 0.0
      %1963 = vmatprep.subr.mxu0 0.0
      %1964 = vmatpush1.msra.mxu0 0.0
      %1965 = vmatprep.subr.mxu0 0.0
      %1966 = vmatpush1.msra.mxu0 0.0
      %1967 = vmatprep.subr.mxu0 0.0
      %1968 = vmatpush1.msra.mxu0 0.0
      %1969 = vmatprep.subr.mxu0 0.0
      %1970 = vmatpush1.msra.mxu0 0.0
      %1971 = vmatprep.subr.mxu0 0.0
      %1972 = vmatpush1.msra.mxu0 0.0
      %1973 = vmatprep.subr.mxu0 0.0
      %1974 = vmatpush1.msra.mxu0 0.0
      %1975 = vmatprep.subr.mxu0 0.0
      %1976 = vmatpush1.msra.mxu0 0.0
      %1977 = vmatprep.subr.mxu0 0.0
      %1978 = vmatpush1.msra.mxu0 0.0
      %1979 = vmatprep.subr.mxu0 0.0
      %1980 = vmatpush1.msra.mxu0 0.0
      %1981 = vmatprep.subr.mxu0 0.0
      %1982 = vmatpush1.msra.mxu0 0.0
      %1983 = vmatprep.subr.mxu0 0.0
      %1984 = vmatpush1.msra.mxu0 0.0
      %1985 = vmatprep.subr.mxu0 0.0
      %1986 = vmatpush1.msra.mxu0 0.0
      %1987 = vmatprep.subr.mxu0 0.0
      %1988 = vmatpush1.msra.mxu0 0.0
      %1989 = vmatprep.subr.mxu0 0.0
      %1990 = vmatpush1.msra.mxu0 0.0
      %1991 = vmatprep.subr.mxu0 0.0
      %1992 = vmatpush1.msra.mxu0 0.0
      %1993 = vmatprep.mubr.f32.mxu0 0.0
      %1994 = vmatmul.mubr.f32.gmra.mrb[0].mxu0 %v1921
      %v1995 = vpop.f32.mrb[0].mxu0
      %v1996 = vadd.f32 0.0, %v1995
      %v1997 = vpop.f32.mrb[0].mxu0
      %v1998 = vadd.f32 0.0, %v1997
      %1999 = vdwg.mxu0
      %2000 = vmatprep.subr.mxu0 0.0
      %2001 = vmatpush1.msra.mxu0 %v1927
      %2002 = vmatprep.subr.mxu0 0.0
      %2003 = vmatpush1.msra.mxu0 0.0
      %2004 = vmatprep.subr.mxu0 0.0
      %2005 = vmatpush1.msra.mxu0 0.0
      %2006 = vmatprep.subr.mxu0 0.0
      %2007 = vmatpush1.msra.mxu0 0.0
      %2008 = vmatprep.subr.mxu0 0.0
      %2009 = vmatpush1.msra.mxu0 0.0
      %2010 = vmatprep.subr.mxu0 0.0
      %2011 = vmatpush1.msra.mxu0 0.0
      %2012 = vmatprep.subr.mxu0 0.0
      %2013 = vmatpush1.msra.mxu0 0.0
      %2014 = vmatprep.subr.mxu0 0.0
      %2015 = vmatpush1.msra.mxu0 0.0
      %2016 = vmatprep.subr.mxu0 0.0
      %2017 = vmatpush1.msra.mxu0 0.0
      %2018 = vmatprep.subr.mxu0 0.0
      %2019 = vmatpush1.msra.mxu0 0.0
      %2020 = vmatprep.subr.mxu0 0.0
      %2021 = vmatpush1.msra.mxu0 0.0
      %2022 = vmatprep.subr.mxu0 0.0
      %2023 = vmatpush1.msra.mxu0 0.0
      %2024 = vmatprep.subr.mxu0 0.0
      %2025 = vmatpush1.msra.mxu0 0.0
      %2026 = vmatprep.subr.mxu0 0.0
      %2027 = vmatpush1.msra.mxu0 0.0
      %2028 = vmatprep.subr.mxu0 0.0
      %2029 = vmatpush1.msra.mxu0 0.0
      %2030 = vmatprep.subr.mxu0 0.0
      %2031 = vmatpush1.msra.mxu0 0.0
      %2032 = vmatprep.subr.mxu0 0.0
      %2033 = vmatpush1.msra.mxu0 0.0
      %2034 = vmatprep.subr.mxu0 0.0
      %2035 = vmatpush1.msra.mxu0 0.0
      %2036 = vmatprep.subr.mxu0 0.0
      %2037 = vmatpush1.msra.mxu0 0.0
      %2038 = vmatprep.subr.mxu0 0.0
      %2039 = vmatpush1.msra.mxu0 0.0
      %2040 = vmatprep.subr.mxu0 0.0
      %2041 = vmatpush1.msra.mxu0 0.0
      %2042 = vmatprep.subr.mxu0 0.0
      %2043 = vmatpush1.msra.mxu0 0.0
      %2044 = vmatprep.subr.mxu0 0.0
      %2045 = vmatpush1.msra.mxu0 0.0
      %2046 = vmatprep.subr.mxu0 0.0
      %2047 = vmatpush1.msra.mxu0 0.0
      %2048 = vmatprep.subr.mxu0 0.0
      %2049 = vmatpush1.msra.mxu0 0.0
      %2050 = vmatprep.subr.mxu0 0.0
      %2051 = vmatpush1.msra.mxu0 0.0
      %2052 = vmatprep.subr.mxu0 0.0
      %2053 = vmatpush1.msra.mxu0 0.0
      %2054 = vmatprep.subr.mxu0 0.0
      %2055 = vmatpush1.msra.mxu0 0.0
      %2056 = vmatprep.subr.mxu0 0.0
      %2057 = vmatpush1.msra.mxu0 0.0
      %2058 = vmatprep.subr.mxu0 0.0
      %2059 = vmatpush1.msra.mxu0 0.0
      %2060 = vmatprep.subr.mxu0 0.0
      %2061 = vmatpush1.msra.mxu0 0.0
      %2062 = vmatprep.subr.mxu0 0.0
      %2063 = vmatpush1.msra.mxu0 0.0
      %2064 = vmatprep.mubr.f32.mxu0 0.0
      %2065 = vmatmul.mubr.f32.gmra.mrb[0].mxu0 %v1921
      %v2066 = vpop.f32.mrb[0].mxu0
      %v2067 = vadd.f32 0.0, %v2066
      %v2068 = vpop.f32.mrb[0].mxu0
      %2069 = vdwg.mxu0
      %v2070 = vadd.f32 %v1901, %v1996
      %v2071 = vadd.f32 %v1902, %v1998
      %v2072 = vadd.f32 %v1903, %v2067
      %v2073 = vld [vmem:[%s5] sm:$0x3]
      %2075 = vset.pattern.permute.xlu0 0
      %2076 = vperm.xlu0 %2075, %v2073
      %v2077 = vpop.permute.xlu0 %2076
      %v2079 = vadd.f32 %v2070, %v2077
      %v2080 = vadd.f32 %v2071, %v2077
      %v2081 = vadd.f32 %v2072, %v2077
      %v2083 = vlaneseq
      %v2084 = vshrl.u32 %v2083, 7
      %v2085 = vsub.s32 0, %v2084
      %v2086 = vrot.slane %v377, %v2085
      %v2087 = vlaneseq
      %v2088 = vshrl.u32 %v2087, 7
      %v2089 = vsub.s32 1, %v2088
      %v2090 = vrot.slane %v377, %v2089
      %v2091 = vlaneseq
      %v2092 = vshrl.u32 %v2091, 7
      %v2093 = vsub.s32 2, %v2092
      %v2094 = vrot.slane %v377, %v2093
      %v2098 = vmul.f32 %v2079, %v2086
      %v2099 = vmul.f32 %v2080, %v2090
      %v2100 = vmul.f32 %v2081, %v2094
      %v2104 = vcombine.low %v2098, %v2099
      %2105 = vrot.lane.b32.xlu0 %v2104, 19
      %v2106 = vpop.permute.xlu0 %2105
      %2107 = vrot.lane.b32.xlu0 %v2100, 19
      %v2108 = vpop.permute.xlu0 %2107
      %v2109 = vrot.slane %v2106, 4
      %v2110 = vsel %vm560, %v2109, %v2106
      %v2111 = vsel %vm560, %v2109, %v2108
      %vm2114 = vcmask 1041560
      %vm2115 = vcmask 1045508
      %vm2116 = vmor %vm2115, %vm2114
      %2117 = vst.msk [vmem:[#allocation2] sm:$0x33] %vm2116, %v2110
      %vm2118 = vcmask 410624
      %2119 = vst.msk [vmem:[#allocation2 + $0x8] sm:$0x3] %vm2118, %v2111
      %v2120 = vld [vmem:[%s371] sm:$0x3f]
      %v2122 = vcombine.low %v2120, %v2120
      %v2124 = vunpack.c.l.s4 1983009808
      %v2125 = vunpack.c.0.s8 %v2124
      %v2126 = vlaneseq
      %v2127 = vshrl.u32 %v2126, 7
      %v2128 = vsub.s32 %v2125, %v2127
      %v2129 = vrot.slane %v2122, %v2128
      %v2131 = vunpack.c.l.s4 1983009808
      %v2132 = vunpack.c.0.s8 %v2131
      %v2133 = vlaneseq
      %v2134 = vshrl.u32 %v2133, 7
      %v2135 = vsub.s32 %v2132, %v2134
      %v2136 = vrot.slane %v2120, %v2135
      %2137 = vrot.lane.b32.xlu0 %v2129, 19
      %v2138 = vpop.permute.xlu0 %2137
      %2139 = vrot.lane.b32.xlu0 %v2136, 19
      %v2140 = vpop.permute.xlu0 %2139
      %v2141 = vrot.slane %v2138, 4
      %v2142 = vsel %vm560, %v2141, %v2138
      %v2143 = vsel %vm560, %v2141, %v2140
      %vm2146 = vcmask 1043610
      %vm2147 = vcmask 1047558
      %vm2148 = vmor %vm2147, %vm2146
      %2149 = vst.msk [vmem:[#allocation2] sm:$0xcc] %vm2148, %v2142
      %vm2150 = vcmask 412674
      %2151 = vst.msk [vmem:[#allocation2 + $0x8] sm:$0xc] %vm2150, %v2143
      %v2152 = vld [vmem:[#allocation2] sm:$0xff]
      %v2153 = vld [vmem:[#allocation2 + $0x8] sm:$0xf]
      %v2154 = vld [vmem:[%s6] sm:$0x3]
      %s2155 = scalar_lea.vmem %s6, 2
      %v2156 = vld [vmem:[%s2155] sm:$0x3]
      %v2159 = vcombine.high %v2152, %v2152
      %2160 = vrot.lane.b32.xlu0 %v2152, 127
      %v2161 = vpop.permute.xlu0 %2160
      %2162 = vrot.lane.b32.xlu0 %v2159, 127
      %v2163 = vpop.permute.xlu0 %2162
      %2164 = vrot.lane.b32.xlu0 %v2153, 127
      %v2165 = vpop.permute.xlu0 %2164
      %v2166 = vsel %vm585, %v2161, %v2163
      %v2167 = vsel %vm585, %v2163, %v2165
      %v2169 = vsel %vm588, %v2156, 0
      %v2171 = vsel %vm592, %v2166, 0
      %v2173 = vsel %vm592, %v2167, 0
      %v2175 = vsel %vm592, %v2165, 0
      %2177 = vmatprep.subr.mxu0 %v2173
      %2178 = vmatpush1.msra.mxu0 %v2171
      %2179 = vmatprep.subr.mxu0 0.0
      %2180 = vmatpush1.msra.mxu0 0.0
      %2181 = vmatprep.subr.mxu0 0.0
      %2182 = vmatpush1.msra.mxu0 0.0
      %2183 = vmatprep.subr.mxu0 0.0
      %2184 = vmatpush1.msra.mxu0 0.0
      %2185 = vmatprep.subr.mxu0 0.0
      %2186 = vmatpush1.msra.mxu0 0.0
      %2187 = vmatprep.subr.mxu0 0.0
      %2188 = vmatpush1.msra.mxu0 0.0
      %2189 = vmatprep.subr.mxu0 0.0
      %2190 = vmatpush1.msra.mxu0 0.0
      %2191 = vmatprep.subr.mxu0 0.0
      %2192 = vmatpush1.msra.mxu0 0.0
      %2193 = vmatprep.subr.mxu0 0.0
      %2194 = vmatpush1.msra.mxu0 0.0
      %2195 = vmatprep.subr.mxu0 0.0
      %2196 = vmatpush1.msra.mxu0 0.0
      %2197 = vmatprep.subr.mxu0 0.0
      %2198 = vmatpush1.msra.mxu0 0.0
      %2199 = vmatprep.subr.mxu0 0.0
      %2200 = vmatpush1.msra.mxu0 0.0
      %2201 = vmatprep.subr.mxu0 0.0
      %2202 = vmatpush1.msra.mxu0 0.0
      %2203 = vmatprep.subr.mxu0 0.0
      %2204 = vmatpush1.msra.mxu0 0.0
      %2205 = vmatprep.subr.mxu0 0.0
      %2206 = vmatpush1.msra.mxu0 0.0
      %2207 = vmatprep.subr.mxu0 0.0
      %2208 = vmatpush1.msra.mxu0 0.0
      %2209 = vmatprep.subr.mxu0 0.0
      %2210 = vmatpush1.msra.mxu0 0.0
      %2211 = vmatprep.subr.mxu0 0.0
      %2212 = vmatpush1.msra.mxu0 0.0
      %2213 = vmatprep.subr.mxu0 0.0
      %2214 = vmatpush1.msra.mxu0 0.0
      %2215 = vmatprep.subr.mxu0 0.0
      %2216 = vmatpush1.msra.mxu0 0.0
      %2217 = vmatprep.subr.mxu0 0.0
      %2218 = vmatpush1.msra.mxu0 0.0
      %2219 = vmatprep.subr.mxu0 0.0
      %2220 = vmatpush1.msra.mxu0 0.0
      %2221 = vmatprep.subr.mxu0 0.0
      %2222 = vmatpush1.msra.mxu0 0.0
      %2223 = vmatprep.subr.mxu0 0.0
      %2224 = vmatpush1.msra.mxu0 0.0
      %2225 = vmatprep.subr.mxu0 0.0
      %2226 = vmatpush1.msra.mxu0 0.0
      %2227 = vmatprep.subr.mxu0 0.0
      %2228 = vmatpush1.msra.mxu0 0.0
      %2229 = vmatprep.subr.mxu0 0.0
      %2230 = vmatpush1.msra.mxu0 0.0
      %2231 = vmatprep.subr.mxu0 0.0
      %2232 = vmatpush1.msra.mxu0 0.0
      %2233 = vmatprep.subr.mxu0 0.0
      %2234 = vmatpush1.msra.mxu0 0.0
      %2235 = vmatprep.subr.mxu0 0.0
      %2236 = vmatpush1.msra.mxu0 0.0
      %2237 = vmatprep.subr.mxu0 0.0
      %2238 = vmatpush1.msra.mxu0 0.0
      %2239 = vmatprep.subr.mxu0 0.0
      %2240 = vmatpush1.msra.mxu0 0.0
      %2241 = vmatprep.mubr.f32.mxu0 0.0
      %2242 = vmatmul.mubr.f32.gmra.mrb[0].mxu0 %v2169
      %v2243 = vpop.f32.mrb[0].mxu0
      %v2244 = vadd.f32 0.0, %v2243
      %v2245 = vpop.f32.mrb[0].mxu0
      %v2246 = vadd.f32 0.0, %v2245
      %2247 = vdwg.mxu0
      %2248 = vmatprep.subr.mxu0 0.0
      %2249 = vmatpush1.msra.mxu0 %v2175
      %2250 = vmatprep.subr.mxu0 0.0
      %2251 = vmatpush1.msra.mxu0 0.0
      %2252 = vmatprep.subr.mxu0 0.0
      %2253 = vmatpush1.msra.mxu0 0.0
      %2254 = vmatprep.subr.mxu0 0.0
      %2255 = vmatpush1.msra.mxu0 0.0
      %2256 = vmatprep.subr.mxu0 0.0
      %2257 = vmatpush1.msra.mxu0 0.0
      %2258 = vmatprep.subr.mxu0 0.0
      %2259 = vmatpush1.msra.mxu0 0.0
      %2260 = vmatprep.subr.mxu0 0.0
      %2261 = vmatpush1.msra.mxu0 0.0
      %2262 = vmatprep.subr.mxu0 0.0
      %2263 = vmatpush1.msra.mxu0 0.0
      %2264 = vmatprep.subr.mxu0 0.0
      %2265 = vmatpush1.msra.mxu0 0.0
      %2266 = vmatprep.subr.mxu0 0.0
      %2267 = vmatpush1.msra.mxu0 0.0
      %2268 = vmatprep.subr.mxu0 0.0
      %2269 = vmatpush1.msra.mxu0 0.0
      %2270 = vmatprep.subr.mxu0 0.0
      %2271 = vmatpush1.msra.mxu0 0.0
      %2272 = vmatprep.subr.mxu0 0.0
      %2273 = vmatpush1.msra.mxu0 0.0
      %2274 = vmatprep.subr.mxu0 0.0
      %2275 = vmatpush1.msra.mxu0 0.0
      %2276 = vmatprep.subr.mxu0 0.0
      %2277 = vmatpush1.msra.mxu0 0.0
      %2278 = vmatprep.subr.mxu0 0.0
      %2279 = vmatpush1.msra.mxu0 0.0
      %2280 = vmatprep.subr.mxu0 0.0
      %2281 = vmatpush1.msra.mxu0 0.0
      %2282 = vmatprep.subr.mxu0 0.0
      %2283 = vmatpush1.msra.mxu0 0.0
      %2284 = vmatprep.subr.mxu0 0.0
      %2285 = vmatpush1.msra.mxu0 0.0
      %2286 = vmatprep.subr.mxu0 0.0
      %2287 = vmatpush1.msra.mxu0 0.0
      %2288 = vmatprep.subr.mxu0 0.0
      %2289 = vmatpush1.msra.mxu0 0.0
      %2290 = vmatprep.subr.mxu0 0.0
      %2291 = vmatpush1.msra.mxu0 0.0
      %2292 = vmatprep.subr.mxu0 0.0
      %2293 = vmatpush1.msra.mxu0 0.0
      %2294 = vmatprep.subr.mxu0 0.0
      %2295 = vmatpush1.msra.mxu0 0.0
      %2296 = vmatprep.subr.mxu0 0.0
      %2297 = vmatpush1.msra.mxu0 0.0
      %2298 = vmatprep.subr.mxu0 0.0
      %2299 = vmatpush1.msra.mxu0 0.0
      %2300 = vmatprep.subr.mxu0 0.0
      %2301 = vmatpush1.msra.mxu0 0.0
      %2302 = vmatprep.subr.mxu0 0.0
      %2303 = vmatpush1.msra.mxu0 0.0
      %2304 = vmatprep.subr.mxu0 0.0
      %2305 = vmatpush1.msra.mxu0 0.0
      %2306 = vmatprep.subr.mxu0 0.0
      %2307 = vmatpush1.msra.mxu0 0.0
      %2308 = vmatprep.subr.mxu0 0.0
      %2309 = vmatpush1.msra.mxu0 0.0
      %2310 = vmatprep.subr.mxu0 0.0
      %2311 = vmatpush1.msra.mxu0 0.0
      %2312 = vmatprep.mubr.f32.mxu0 0.0
      %2313 = vmatmul.mubr.f32.gmra.mrb[0].mxu0 %v2169
      %v2314 = vpop.f32.mrb[0].mxu0
      %v2315 = vadd.f32 0.0, %v2314
      %v2316 = vpop.f32.mrb[0].mxu0
      %2317 = vdwg.mxu0
      %v2319 = vsel %vm588, %v2154, 0
      %v2321 = vsel %vm592, %v2152, 0
      %v2323 = vsel %vm592, %v2159, 0
      %v2325 = vsel %vm592, %v2153, 0
      %2327 = vmatprep.subr.mxu0 %v2323
      %2328 = vmatpush1.msra.mxu0 %v2321
      %2329 = vmatprep.subr.mxu0 0.0
      %2330 = vmatpush1.msra.mxu0 0.0
      %2331 = vmatprep.subr.mxu0 0.0
      %2332 = vmatpush1.msra.mxu0 0.0
      %2333 = vmatprep.subr.mxu0 0.0
      %2334 = vmatpush1.msra.mxu0 0.0
      %2335 = vmatprep.subr.mxu0 0.0
      %2336 = vmatpush1.msra.mxu0 0.0
      %2337 = vmatprep.subr.mxu0 0.0
      %2338 = vmatpush1.msra.mxu0 0.0
      %2339 = vmatprep.subr.mxu0 0.0
      %2340 = vmatpush1.msra.mxu0 0.0
      %2341 = vmatprep.subr.mxu0 0.0
      %2342 = vmatpush1.msra.mxu0 0.0
      %2343 = vmatprep.subr.mxu0 0.0
      %2344 = vmatpush1.msra.mxu0 0.0
      %2345 = vmatprep.subr.mxu0 0.0
      %2346 = vmatpush1.msra.mxu0 0.0
      %2347 = vmatprep.subr.mxu0 0.0
      %2348 = vmatpush1.msra.mxu0 0.0
      %2349 = vmatprep.subr.mxu0 0.0
      %2350 = vmatpush1.msra.mxu0 0.0
      %2351 = vmatprep.subr.mxu0 0.0
      %2352 = vmatpush1.msra.mxu0 0.0
      %2353 = vmatprep.subr.mxu0 0.0
      %2354 = vmatpush1.msra.mxu0 0.0
      %2355 = vmatprep.subr.mxu0 0.0
      %2356 = vmatpush1.msra.mxu0 0.0
      %2357 = vmatprep.subr.mxu0 0.0
      %2358 = vmatpush1.msra.mxu0 0.0
      %2359 = vmatprep.subr.mxu0 0.0
      %2360 = vmatpush1.msra.mxu0 0.0
      %2361 = vmatprep.subr.mxu0 0.0
      %2362 = vmatpush1.msra.mxu0 0.0
      %2363 = vmatprep.subr.mxu0 0.0
      %2364 = vmatpush1.msra.mxu0 0.0
      %2365 = vmatprep.subr.mxu0 0.0
      %2366 = vmatpush1.msra.mxu0 0.0
      %2367 = vmatprep.subr.mxu0 0.0
      %2368 = vmatpush1.msra.mxu0 0.0
      %2369 = vmatprep.subr.mxu0 0.0
      %2370 = vmatpush1.msra.mxu0 0.0
      %2371 = vmatprep.subr.mxu0 0.0
      %2372 = vmatpush1.msra.mxu0 0.0
      %2373 = vmatprep.subr.mxu0 0.0
      %2374 = vmatpush1.msra.mxu0 0.0
      %2375 = vmatprep.subr.mxu0 0.0
      %2376 = vmatpush1.msra.mxu0 0.0
      %2377 = vmatprep.subr.mxu0 0.0
      %2378 = vmatpush1.msra.mxu0 0.0
      %2379 = vmatprep.subr.mxu0 0.0
      %2380 = vmatpush1.msra.mxu0 0.0
      %2381 = vmatprep.subr.mxu0 0.0
      %2382 = vmatpush1.msra.mxu0 0.0
      %2383 = vmatprep.subr.mxu0 0.0
      %2384 = vmatpush1.msra.mxu0 0.0
      %2385 = vmatprep.subr.mxu0 0.0
      %2386 = vmatpush1.msra.mxu0 0.0
      %2387 = vmatprep.subr.mxu0 0.0
      %2388 = vmatpush1.msra.mxu0 0.0
      %2389 = vmatprep.subr.mxu0 0.0
      %2390 = vmatpush1.msra.mxu0 0.0
      %2391 = vmatprep.mubr.f32.mxu0 0.0
      %2392 = vmatmul.mubr.f32.gmra.mrb[0].mxu0 %v2319
      %v2393 = vpop.f32.mrb[0].mxu0
      %v2394 = vadd.f32 %v2244, %v2393
      %v2395 = vpop.f32.mrb[0].mxu0
      %v2396 = vadd.f32 %v2246, %v2395
      %2397 = vdwg.mxu0
      %2398 = vmatprep.subr.mxu0 0.0
      %2399 = vmatpush1.msra.mxu0 %v2325
      %2400 = vmatprep.subr.mxu0 0.0
      %2401 = vmatpush1.msra.mxu0 0.0
      %2402 = vmatprep.subr.mxu0 0.0
      %2403 = vmatpush1.msra.mxu0 0.0
      %2404 = vmatprep.subr.mxu0 0.0
      %2405 = vmatpush1.msra.mxu0 0.0
      %2406 = vmatprep.subr.mxu0 0.0
      %2407 = vmatpush1.msra.mxu0 0.0
      %2408 = vmatprep.subr.mxu0 0.0
      %2409 = vmatpush1.msra.mxu0 0.0
      %2410 = vmatprep.subr.mxu0 0.0
      %2411 = vmatpush1.msra.mxu0 0.0
      %2412 = vmatprep.subr.mxu0 0.0
      %2413 = vmatpush1.msra.mxu0 0.0
      %2414 = vmatprep.subr.mxu0 0.0
      %2415 = vmatpush1.msra.mxu0 0.0
      %2416 = vmatprep.subr.mxu0 0.0
      %2417 = vmatpush1.msra.mxu0 0.0
      %2418 = vmatprep.subr.mxu0 0.0
      %2419 = vmatpush1.msra.mxu0 0.0
      %2420 = vmatprep.subr.mxu0 0.0
      %2421 = vmatpush1.msra.mxu0 0.0
      %2422 = vmatprep.subr.mxu0 0.0
      %2423 = vmatpush1.msra.mxu0 0.0
      %2424 = vmatprep.subr.mxu0 0.0
      %2425 = vmatpush1.msra.mxu0 0.0
      %2426 = vmatprep.subr.mxu0 0.0
      %2427 = vmatpush1.msra.mxu0 0.0
      %2428 = vmatprep.subr.mxu0 0.0
      %2429 = vmatpush1.msra.mxu0 0.0
      %2430 = vmatprep.subr.mxu0 0.0
      %2431 = vmatpush1.msra.mxu0 0.0
      %2432 = vmatprep.subr.mxu0 0.0
      %2433 = vmatpush1.msra.mxu0 0.0
      %2434 = vmatprep.subr.mxu0 0.0
      %2435 = vmatpush1.msra.mxu0 0.0
      %2436 = vmatprep.subr.mxu0 0.0
      %2437 = vmatpush1.msra.mxu0 0.0
      %2438 = vmatprep.subr.mxu0 0.0
      %2439 = vmatpush1.msra.mxu0 0.0
      %2440 = vmatprep.subr.mxu0 0.0
      %2441 = vmatpush1.msra.mxu0 0.0
      %2442 = vmatprep.subr.mxu0 0.0
      %2443 = vmatpush1.msra.mxu0 0.0
      %2444 = vmatprep.subr.mxu0 0.0
      %2445 = vmatpush1.msra.mxu0 0.0
      %2446 = vmatprep.subr.mxu0 0.0
      %2447 = vmatpush1.msra.mxu0 0.0
      %2448 = vmatprep.subr.mxu0 0.0
      %2449 = vmatpush1.msra.mxu0 0.0
      %2450 = vmatprep.subr.mxu0 0.0
      %2451 = vmatpush1.msra.mxu0 0.0
      %2452 = vmatprep.subr.mxu0 0.0
      %2453 = vmatpush1.msra.mxu0 0.0
      %2454 = vmatprep.subr.mxu0 0.0
      %2455 = vmatpush1.msra.mxu0 0.0
      %2456 = vmatprep.subr.mxu0 0.0
      %2457 = vmatpush1.msra.mxu0 0.0
      %2458 = vmatprep.subr.mxu0 0.0
      %2459 = vmatpush1.msra.mxu0 0.0
      %2460 = vmatprep.subr.mxu0 0.0
      %2461 = vmatpush1.msra.mxu0 0.0
      %2462 = vmatprep.mubr.f32.mxu0 0.0
      %2463 = vmatmul.mubr.f32.gmra.mrb[0].mxu0 %v2319
      %v2464 = vpop.f32.mrb[0].mxu0
      %v2465 = vadd.f32 %v2315, %v2464
      %v2466 = vpop.f32.mrb[0].mxu0
      %2467 = vdwg.mxu0
      %v2468 = vld [vmem:[#allocation2] sm:$0xff]
      %v2469 = vld [vmem:[#allocation2 + $0x8] sm:$0xf]
      %s2470 = scalar_lea.vmem %s6, 4
      %v2471 = vld [vmem:[%s2470] sm:$0x3]
      %v2474 = vcombine.high %v2468, %v2468
      %2475 = vrot.lane.b32.xlu0 %v2468, 126
      %v2476 = vpop.permute.xlu0 %2475
      %2477 = vrot.lane.b32.xlu0 %v2474, 126
      %v2478 = vpop.permute.xlu0 %2477
      %2479 = vrot.lane.b32.xlu0 %v2469, 126
      %v2480 = vpop.permute.xlu0 %2479
      %v2481 = vsel %vm903, %v2476, %v2478
      %v2482 = vsel %vm903, %v2478, %v2480
      %v2484 = vsel %vm588, %v2471, 0
      %v2486 = vsel %vm592, %v2481, 0
      %v2488 = vsel %vm592, %v2482, 0
      %v2490 = vsel %vm592, %v2480, 0
      %2492 = vmatprep.subr.mxu0 %v2488
      %2493 = vmatpush1.msra.mxu0 %v2486
      %2494 = vmatprep.subr.mxu0 0.0
      %2495 = vmatpush1.msra.mxu0 0.0
      %2496 = vmatprep.subr.mxu0 0.0
      %2497 = vmatpush1.msra.mxu0 0.0
      %2498 = vmatprep.subr.mxu0 0.0
      %2499 = vmatpush1.msra.mxu0 0.0
      %2500 = vmatprep.subr.mxu0 0.0
      %2501 = vmatpush1.msra.mxu0 0.0
      %2502 = vmatprep.subr.mxu0 0.0
      %2503 = vmatpush1.msra.mxu0 0.0
      %2504 = vmatprep.subr.mxu0 0.0
      %2505 = vmatpush1.msra.mxu0 0.0
      %2506 = vmatprep.subr.mxu0 0.0
      %2507 = vmatpush1.msra.mxu0 0.0
      %2508 = vmatprep.subr.mxu0 0.0
      %2509 = vmatpush1.msra.mxu0 0.0
      %2510 = vmatprep.subr.mxu0 0.0
      %2511 = vmatpush1.msra.mxu0 0.0
      %2512 = vmatprep.subr.mxu0 0.0
      %2513 = vmatpush1.msra.mxu0 0.0
      %2514 = vmatprep.subr.mxu0 0.0
      %2515 = vmatpush1.msra.mxu0 0.0
      %2516 = vmatprep.subr.mxu0 0.0
      %2517 = vmatpush1.msra.mxu0 0.0
      %2518 = vmatprep.subr.mxu0 0.0
      %2519 = vmatpush1.msra.mxu0 0.0
      %2520 = vmatprep.subr.mxu0 0.0
      %2521 = vmatpush1.msra.mxu0 0.0
      %2522 = vmatprep.subr.mxu0 0.0
      %2523 = vmatpush1.msra.mxu0 0.0
      %2524 = vmatprep.subr.mxu0 0.0
      %2525 = vmatpush1.msra.mxu0 0.0
      %2526 = vmatprep.subr.mxu0 0.0
      %2527 = vmatpush1.msra.mxu0 0.0
      %2528 = vmatprep.subr.mxu0 0.0
      %2529 = vmatpush1.msra.mxu0 0.0
      %2530 = vmatprep.subr.mxu0 0.0
      %2531 = vmatpush1.msra.mxu0 0.0
      %2532 = vmatprep.subr.mxu0 0.0
      %2533 = vmatpush1.msra.mxu0 0.0
      %2534 = vmatprep.subr.mxu0 0.0
      %2535 = vmatpush1.msra.mxu0 0.0
      %2536 = vmatprep.subr.mxu0 0.0
      %2537 = vmatpush1.msra.mxu0 0.0
      %2538 = vmatprep.subr.mxu0 0.0
      %2539 = vmatpush1.msra.mxu0 0.0
      %2540 = vmatprep.subr.mxu0 0.0
      %2541 = vmatpush1.msra.mxu0 0.0
      %2542 = vmatprep.subr.mxu0 0.0
      %2543 = vmatpush1.msra.mxu0 0.0
      %2544 = vmatprep.subr.mxu0 0.0
      %2545 = vmatpush1.msra.mxu0 0.0
      %2546 = vmatprep.subr.mxu0 0.0
      %2547 = vmatpush1.msra.mxu0 0.0
      %2548 = vmatprep.subr.mxu0 0.0
      %2549 = vmatpush1.msra.mxu0 0.0
      %2550 = vmatprep.subr.mxu0 0.0
      %2551 = vmatpush1.msra.mxu0 0.0
      %2552 = vmatprep.subr.mxu0 0.0
      %2553 = vmatpush1.msra.mxu0 0.0
      %2554 = vmatprep.subr.mxu0 0.0
      %2555 = vmatpush1.msra.mxu0 0.0
      %2556 = vmatprep.mubr.f32.mxu0 0.0
      %2557 = vmatmul.mubr.f32.gmra.mrb[0].mxu0 %v2484
      %v2558 = vpop.f32.mrb[0].mxu0
      %v2559 = vadd.f32 0.0, %v2558
      %v2560 = vpop.f32.mrb[0].mxu0
      %v2561 = vadd.f32 0.0, %v2560
      %2562 = vdwg.mxu0
      %2563 = vmatprep.subr.mxu0 0.0
      %2564 = vmatpush1.msra.mxu0 %v2490
      %2565 = vmatprep.subr.mxu0 0.0
      %2566 = vmatpush1.msra.mxu0 0.0
      %2567 = vmatprep.subr.mxu0 0.0
      %2568 = vmatpush1.msra.mxu0 0.0
      %2569 = vmatprep.subr.mxu0 0.0
      %2570 = vmatpush1.msra.mxu0 0.0
      %2571 = vmatprep.subr.mxu0 0.0
      %2572 = vmatpush1.msra.mxu0 0.0
      %2573 = vmatprep.subr.mxu0 0.0
      %2574 = vmatpush1.msra.mxu0 0.0
      %2575 = vmatprep.subr.mxu0 0.0
      %2576 = vmatpush1.msra.mxu0 0.0
      %2577 = vmatprep.subr.mxu0 0.0
      %2578 = vmatpush1.msra.mxu0 0.0
      %2579 = vmatprep.subr.mxu0 0.0
      %2580 = vmatpush1.msra.mxu0 0.0
      %2581 = vmatprep.subr.mxu0 0.0
      %2582 = vmatpush1.msra.mxu0 0.0
      %2583 = vmatprep.subr.mxu0 0.0
      %2584 = vmatpush1.msra.mxu0 0.0
      %2585 = vmatprep.subr.mxu0 0.0
      %2586 = vmatpush1.msra.mxu0 0.0
      %2587 = vmatprep.subr.mxu0 0.0
      %2588 = vmatpush1.msra.mxu0 0.0
      %2589 = vmatprep.subr.mxu0 0.0
      %2590 = vmatpush1.msra.mxu0 0.0
      %2591 = vmatprep.subr.mxu0 0.0
      %2592 = vmatpush1.msra.mxu0 0.0
      %2593 = vmatprep.subr.mxu0 0.0
      %2594 = vmatpush1.msra.mxu0 0.0
      %2595 = vmatprep.subr.mxu0 0.0
      %2596 = vmatpush1.msra.mxu0 0.0
      %2597 = vmatprep.subr.mxu0 0.0
      %2598 = vmatpush1.msra.mxu0 0.0
      %2599 = vmatprep.subr.mxu0 0.0
      %2600 = vmatpush1.msra.mxu0 0.0
      %2601 = vmatprep.subr.mxu0 0.0
      %2602 = vmatpush1.msra.mxu0 0.0
      %2603 = vmatprep.subr.mxu0 0.0
      %2604 = vmatpush1.msra.mxu0 0.0
      %2605 = vmatprep.subr.mxu0 0.0
      %2606 = vmatpush1.msra.mxu0 0.0
      %2607 = vmatprep.subr.mxu0 0.0
      %2608 = vmatpush1.msra.mxu0 0.0
      %2609 = vmatprep.subr.mxu0 0.0
      %2610 = vmatpush1.msra.mxu0 0.0
      %2611 = vmatprep.subr.mxu0 0.0
      %2612 = vmatpush1.msra.mxu0 0.0
      %2613 = vmatprep.subr.mxu0 0.0
      %2614 = vmatpush1.msra.mxu0 0.0
      %2615 = vmatprep.subr.mxu0 0.0
      %2616 = vmatpush1.msra.mxu0 0.0
      %2617 = vmatprep.subr.mxu0 0.0
      %2618 = vmatpush1.msra.mxu0 0.0
      %2619 = vmatprep.subr.mxu0 0.0
      %2620 = vmatpush1.msra.mxu0 0.0
      %2621 = vmatprep.subr.mxu0 0.0
      %2622 = vmatpush1.msra.mxu0 0.0
      %2623 = vmatprep.subr.mxu0 0.0
      %2624 = vmatpush1.msra.mxu0 0.0
      %2625 = vmatprep.subr.mxu0 0.0
      %2626 = vmatpush1.msra.mxu0 0.0
      %2627 = vmatprep.mubr.f32.mxu0 0.0
      %2628 = vmatmul.mubr.f32.gmra.mrb[0].mxu0 %v2484
      %v2629 = vpop.f32.mrb[0].mxu0
      %v2630 = vadd.f32 0.0, %v2629
      %v2631 = vpop.f32.mrb[0].mxu0
      %2632 = vdwg.mxu0
      %v2633 = vadd.f32 %v2394, %v2559
      %v2634 = vadd.f32 %v2396, %v2561
      %v2635 = vadd.f32 %v2465, %v2630
      %v2636 = vld [vmem:[#allocation2] sm:$0xff]
      %v2637 = vld [vmem:[#allocation2 + $0x8] sm:$0xf]
      %s2638 = scalar_lea.vmem %s6, 6
      %v2639 = vld [vmem:[%s2638] sm:$0x3]
      %v2642 = vcombine.high %v2636, %v2636
      %2643 = vrot.lane.b32.xlu0 %v2636, 110
      %v2644 = vpop.permute.xlu0 %2643
      %2645 = vrot.lane.b32.xlu0 %v2642, 110
      %v2646 = vpop.permute.xlu0 %2645
      %2647 = vrot.lane.b32.xlu0 %v2637, 110
      %v2648 = vpop.permute.xlu0 %2647
      %v2649 = vsel %vm1072, %v2644, %v2646
      %v2650 = vsel %vm1072, %v2646, %v2648
      %v2652 = vsel %vm588, %v2639, 0
      %v2654 = vsel %vm592, %v2649, 0
      %v2656 = vsel %vm592, %v2650, 0
      %v2658 = vsel %vm592, %v2648, 0
      %2660 = vmatprep.subr.mxu0 %v2656
      %2661 = vmatpush1.msra.mxu0 %v2654
      %2662 = vmatprep.subr.mxu0 0.0
      %2663 = vmatpush1.msra.mxu0 0.0
      %2664 = vmatprep.subr.mxu0 0.0
      %2665 = vmatpush1.msra.mxu0 0.0
      %2666 = vmatprep.subr.mxu0 0.0
      %2667 = vmatpush1.msra.mxu0 0.0
      %2668 = vmatprep.subr.mxu0 0.0
      %2669 = vmatpush1.msra.mxu0 0.0
      %2670 = vmatprep.subr.mxu0 0.0
      %2671 = vmatpush1.msra.mxu0 0.0
      %2672 = vmatprep.subr.mxu0 0.0
      %2673 = vmatpush1.msra.mxu0 0.0
      %2674 = vmatprep.subr.mxu0 0.0
      %2675 = vmatpush1.msra.mxu0 0.0
      %2676 = vmatprep.subr.mxu0 0.0
      %2677 = vmatpush1.msra.mxu0 0.0
      %2678 = vmatprep.subr.mxu0 0.0
      %2679 = vmatpush1.msra.mxu0 0.0
      %2680 = vmatprep.subr.mxu0 0.0
      %2681 = vmatpush1.msra.mxu0 0.0
      %2682 = vmatprep.subr.mxu0 0.0
      %2683 = vmatpush1.msra.mxu0 0.0
      %2684 = vmatprep.subr.mxu0 0.0
      %2685 = vmatpush1.msra.mxu0 0.0
      %2686 = vmatprep.subr.mxu0 0.0
      %2687 = vmatpush1.msra.mxu0 0.0
      %2688 = vmatprep.subr.mxu0 0.0
      %2689 = vmatpush1.msra.mxu0 0.0
      %2690 = vmatprep.subr.mxu0 0.0
      %2691 = vmatpush1.msra.mxu0 0.0
      %2692 = vmatprep.subr.mxu0 0.0
      %2693 = vmatpush1.msra.mxu0 0.0
      %2694 = vmatprep.subr.mxu0 0.0
      %2695 = vmatpush1.msra.mxu0 0.0
      %2696 = vmatprep.subr.mxu0 0.0
      %2697 = vmatpush1.msra.mxu0 0.0
      %2698 = vmatprep.subr.mxu0 0.0
      %2699 = vmatpush1.msra.mxu0 0.0
      %2700 = vmatprep.subr.mxu0 0.0
      %2701 = vmatpush1.msra.mxu0 0.0
      %2702 = vmatprep.subr.mxu0 0.0
      %2703 = vmatpush1.msra.mxu0 0.0
      %2704 = vmatprep.subr.mxu0 0.0
      %2705 = vmatpush1.msra.mxu0 0.0
      %2706 = vmatprep.subr.mxu0 0.0
      %2707 = vmatpush1.msra.mxu0 0.0
      %2708 = vmatprep.subr.mxu0 0.0
      %2709 = vmatpush1.msra.mxu0 0.0
      %2710 = vmatprep.subr.mxu0 0.0
      %2711 = vmatpush1.msra.mxu0 0.0
      %2712 = vmatprep.subr.mxu0 0.0
      %2713 = vmatpush1.msra.mxu0 0.0
      %2714 = vmatprep.subr.mxu0 0.0
      %2715 = vmatpush1.msra.mxu0 0.0
      %2716 = vmatprep.subr.mxu0 0.0
      %2717 = vmatpush1.msra.mxu0 0.0
      %2718 = vmatprep.subr.mxu0 0.0
      %2719 = vmatpush1.msra.mxu0 0.0
      %2720 = vmatprep.subr.mxu0 0.0
      %2721 = vmatpush1.msra.mxu0 0.0
      %2722 = vmatprep.subr.mxu0 0.0
      %2723 = vmatpush1.msra.mxu0 0.0
      %2724 = vmatprep.mubr.f32.mxu0 0.0
      %2725 = vmatmul.mubr.f32.gmra.mrb[0].mxu0 %v2652
      %v2726 = vpop.f32.mrb[0].mxu0
      %v2727 = vadd.f32 0.0, %v2726
      %v2728 = vpop.f32.mrb[0].mxu0
      %v2729 = vadd.f32 0.0, %v2728
      %2730 = vdwg.mxu0
      %2731 = vmatprep.subr.mxu0 0.0
      %2732 = vmatpush1.msra.mxu0 %v2658
      %2733 = vmatprep.subr.mxu0 0.0
      %2734 = vmatpush1.msra.mxu0 0.0
      %2735 = vmatprep.subr.mxu0 0.0
      %2736 = vmatpush1.msra.mxu0 0.0
      %2737 = vmatprep.subr.mxu0 0.0
      %2738 = vmatpush1.msra.mxu0 0.0
      %2739 = vmatprep.subr.mxu0 0.0
      %2740 = vmatpush1.msra.mxu0 0.0
      %2741 = vmatprep.subr.mxu0 0.0
      %2742 = vmatpush1.msra.mxu0 0.0
      %2743 = vmatprep.subr.mxu0 0.0
      %2744 = vmatpush1.msra.mxu0 0.0
      %2745 = vmatprep.subr.mxu0 0.0
      %2746 = vmatpush1.msra.mxu0 0.0
      %2747 = vmatprep.subr.mxu0 0.0
      %2748 = vmatpush1.msra.mxu0 0.0
      %2749 = vmatprep.subr.mxu0 0.0
      %2750 = vmatpush1.msra.mxu0 0.0
      %2751 = vmatprep.subr.mxu0 0.0
      %2752 = vmatpush1.msra.mxu0 0.0
      %2753 = vmatprep.subr.mxu0 0.0
      %2754 = vmatpush1.msra.mxu0 0.0
      %2755 = vmatprep.subr.mxu0 0.0
      %2756 = vmatpush1.msra.mxu0 0.0
      %2757 = vmatprep.subr.mxu0 0.0
      %2758 = vmatpush1.msra.mxu0 0.0
      %2759 = vmatprep.subr.mxu0 0.0
      %2760 = vmatpush1.msra.mxu0 0.0
      %2761 = vmatprep.subr.mxu0 0.0
      %2762 = vmatpush1.msra.mxu0 0.0
      %2763 = vmatprep.subr.mxu0 0.0
      %2764 = vmatpush1.msra.mxu0 0.0
      %2765 = vmatprep.subr.mxu0 0.0
      %2766 = vmatpush1.msra.mxu0 0.0
      %2767 = vmatprep.subr.mxu0 0.0
      %2768 = vmatpush1.msra.mxu0 0.0
      %2769 = vmatprep.subr.mxu0 0.0
      %2770 = vmatpush1.msra.mxu0 0.0
      %2771 = vmatprep.subr.mxu0 0.0
      %2772 = vmatpush1.msra.mxu0 0.0
      %2773 = vmatprep.subr.mxu0 0.0
      %2774 = vmatpush1.msra.mxu0 0.0
      %2775 = vmatprep.subr.mxu0 0.0
      %2776 = vmatpush1.msra.mxu0 0.0
      %2777 = vmatprep.subr.mxu0 0.0
      %2778 = vmatpush1.msra.mxu0 0.0
      %2779 = vmatprep.subr.mxu0 0.0
      %2780 = vmatpush1.msra.mxu0 0.0
      %2781 = vmatprep.subr.mxu0 0.0
      %2782 = vmatpush1.msra.mxu0 0.0
      %2783 = vmatprep.subr.mxu0 0.0
      %2784 = vmatpush1.msra.mxu0 0.0
      %2785 = vmatprep.subr.mxu0 0.0
      %2786 = vmatpush1.msra.mxu0 0.0
      %2787 = vmatprep.subr.mxu0 0.0
      %2788 = vmatpush1.msra.mxu0 0.0
      %2789 = vmatprep.subr.mxu0 0.0
      %2790 = vmatpush1.msra.mxu0 0.0
      %2791 = vmatprep.subr.mxu0 0.0
      %2792 = vmatpush1.msra.mxu0 0.0
      %2793 = vmatprep.subr.mxu0 0.0
      %2794 = vmatpush1.msra.mxu0 0.0
      %2795 = vmatprep.mubr.f32.mxu0 0.0
      %2796 = vmatmul.mubr.f32.gmra.mrb[0].mxu0 %v2652
      %v2797 = vpop.f32.mrb[0].mxu0
      %v2798 = vadd.f32 0.0, %v2797
      %v2799 = vpop.f32.mrb[0].mxu0
      %2800 = vdwg.mxu0
      %v2801 = vadd.f32 %v2633, %v2727
      %v2802 = vadd.f32 %v2634, %v2729
      %v2803 = vadd.f32 %v2635, %v2798
      %v2804 = vld [vmem:[#allocation2] sm:$0xff]
      %v2805 = vld [vmem:[#allocation2 + $0x8] sm:$0xf]
      %s2806 = scalar_lea.vmem %s6, 8
      %v2807 = vld [vmem:[%s2806] sm:$0x3]
      %v2810 = vcombine.high %v2804, %v2804
      %2811 = vrot.lane.b32.xlu0 %v2804, 109
      %v2812 = vpop.permute.xlu0 %2811
      %2813 = vrot.lane.b32.xlu0 %v2810, 109
      %v2814 = vpop.permute.xlu0 %2813
      %2815 = vrot.lane.b32.xlu0 %v2805, 109
      %v2816 = vpop.permute.xlu0 %2815
      %v2817 = vsel %vm1241, %v2812, %v2814
      %v2818 = vsel %vm1241, %v2814, %v2816
      %v2820 = vsel %vm588, %v2807, 0
      %v2822 = vsel %vm592, %v2817, 0
      %v2824 = vsel %vm592, %v2818, 0
      %v2826 = vsel %vm592, %v2816, 0
      %2828 = vmatprep.subr.mxu0 %v2824
      %2829 = vmatpush1.msra.mxu0 %v2822
      %2830 = vmatprep.subr.mxu0 0.0
      %2831 = vmatpush1.msra.mxu0 0.0
      %2832 = vmatprep.subr.mxu0 0.0
      %2833 = vmatpush1.msra.mxu0 0.0
      %2834 = vmatprep.subr.mxu0 0.0
      %2835 = vmatpush1.msra.mxu0 0.0
      %2836 = vmatprep.subr.mxu0 0.0
      %2837 = vmatpush1.msra.mxu0 0.0
      %2838 = vmatprep.subr.mxu0 0.0
      %2839 = vmatpush1.msra.mxu0 0.0
      %2840 = vmatprep.subr.mxu0 0.0
      %2841 = vmatpush1.msra.mxu0 0.0
      %2842 = vmatprep.subr.mxu0 0.0
      %2843 = vmatpush1.msra.mxu0 0.0
      %2844 = vmatprep.subr.mxu0 0.0
      %2845 = vmatpush1.msra.mxu0 0.0
      %2846 = vmatprep.subr.mxu0 0.0
      %2847 = vmatpush1.msra.mxu0 0.0
      %2848 = vmatprep.subr.mxu0 0.0
      %2849 = vmatpush1.msra.mxu0 0.0
      %2850 = vmatprep.subr.mxu0 0.0
      %2851 = vmatpush1.msra.mxu0 0.0
      %2852 = vmatprep.subr.mxu0 0.0
      %2853 = vmatpush1.msra.mxu0 0.0
      %2854 = vmatprep.subr.mxu0 0.0
      %2855 = vmatpush1.msra.mxu0 0.0
      %2856 = vmatprep.subr.mxu0 0.0
      %2857 = vmatpush1.msra.mxu0 0.0
      %2858 = vmatprep.subr.mxu0 0.0
      %2859 = vmatpush1.msra.mxu0 0.0
      %2860 = vmatprep.subr.mxu0 0.0
      %2861 = vmatpush1.msra.mxu0 0.0
      %2862 = vmatprep.subr.mxu0 0.0
      %2863 = vmatpush1.msra.mxu0 0.0
      %2864 = vmatprep.subr.mxu0 0.0
      %2865 = vmatpush1.msra.mxu0 0.0
      %2866 = vmatprep.subr.mxu0 0.0
      %2867 = vmatpush1.msra.mxu0 0.0
      %2868 = vmatprep.subr.mxu0 0.0
      %2869 = vmatpush1.msra.mxu0 0.0
      %2870 = vmatprep.subr.mxu0 0.0
      %2871 = vmatpush1.msra.mxu0 0.0
      %2872 = vmatprep.subr.mxu0 0.0
      %2873 = vmatpush1.msra.mxu0 0.0
      %2874 = vmatprep.subr.mxu0 0.0
      %2875 = vmatpush1.msra.mxu0 0.0
      %2876 = vmatprep.subr.mxu0 0.0
      %2877 = vmatpush1.msra.mxu0 0.0
      %2878 = vmatprep.subr.mxu0 0.0
      %2879 = vmatpush1.msra.mxu0 0.0
      %2880 = vmatprep.subr.mxu0 0.0
      %2881 = vmatpush1.msra.mxu0 0.0
      %2882 = vmatprep.subr.mxu0 0.0
      %2883 = vmatpush1.msra.mxu0 0.0
      %2884 = vmatprep.subr.mxu0 0.0
      %2885 = vmatpush1.msra.mxu0 0.0
      %2886 = vmatprep.subr.mxu0 0.0
      %2887 = vmatpush1.msra.mxu0 0.0
      %2888 = vmatprep.subr.mxu0 0.0
      %2889 = vmatpush1.msra.mxu0 0.0
      %2890 = vmatprep.subr.mxu0 0.0
      %2891 = vmatpush1.msra.mxu0 0.0
      %2892 = vmatprep.mubr.f32.mxu0 0.0
      %2893 = vmatmul.mubr.f32.gmra.mrb[0].mxu0 %v2820
      %v2894 = vpop.f32.mrb[0].mxu0
      %v2895 = vadd.f32 0.0, %v2894
      %v2896 = vpop.f32.mrb[0].mxu0
      %v2897 = vadd.f32 0.0, %v2896
      %2898 = vdwg.mxu0
      %2899 = vmatprep.subr.mxu0 0.0
      %2900 = vmatpush1.msra.mxu0 %v2826
      %2901 = vmatprep.subr.mxu0 0.0
      %2902 = vmatpush1.msra.mxu0 0.0
      %2903 = vmatprep.subr.mxu0 0.0
      %2904 = vmatpush1.msra.mxu0 0.0
      %2905 = vmatprep.subr.mxu0 0.0
      %2906 = vmatpush1.msra.mxu0 0.0
      %2907 = vmatprep.subr.mxu0 0.0
      %2908 = vmatpush1.msra.mxu0 0.0
      %2909 = vmatprep.subr.mxu0 0.0
      %2910 = vmatpush1.msra.mxu0 0.0
      %2911 = vmatprep.subr.mxu0 0.0
      %2912 = vmatpush1.msra.mxu0 0.0
      %2913 = vmatprep.subr.mxu0 0.0
      %2914 = vmatpush1.msra.mxu0 0.0
      %2915 = vmatprep.subr.mxu0 0.0
      %2916 = vmatpush1.msra.mxu0 0.0
      %2917 = vmatprep.subr.mxu0 0.0
      %2918 = vmatpush1.msra.mxu0 0.0
      %2919 = vmatprep.subr.mxu0 0.0
      %2920 = vmatpush1.msra.mxu0 0.0
      %2921 = vmatprep.subr.mxu0 0.0
      %2922 = vmatpush1.msra.mxu0 0.0
      %2923 = vmatprep.subr.mxu0 0.0
      %2924 = vmatpush1.msra.mxu0 0.0
      %2925 = vmatprep.subr.mxu0 0.0
      %2926 = vmatpush1.msra.mxu0 0.0
      %2927 = vmatprep.subr.mxu0 0.0
      %2928 = vmatpush1.msra.mxu0 0.0
      %2929 = vmatprep.subr.mxu0 0.0
      %2930 = vmatpush1.msra.mxu0 0.0
      %2931 = vmatprep.subr.mxu0 0.0
      %2932 = vmatpush1.msra.mxu0 0.0
      %2933 = vmatprep.subr.mxu0 0.0
      %2934 = vmatpush1.msra.mxu0 0.0
      %2935 = vmatprep.subr.mxu0 0.0
      %2936 = vmatpush1.msra.mxu0 0.0
      %2937 = vmatprep.subr.mxu0 0.0
      %2938 = vmatpush1.msra.mxu0 0.0
      %2939 = vmatprep.subr.mxu0 0.0
      %2940 = vmatpush1.msra.mxu0 0.0
      %2941 = vmatprep.subr.mxu0 0.0
      %2942 = vmatpush1.msra.mxu0 0.0
      %2943 = vmatprep.subr.mxu0 0.0
      %2944 = vmatpush1.msra.mxu0 0.0
      %2945 = vmatprep.subr.mxu0 0.0
      %2946 = vmatpush1.msra.mxu0 0.0
      %2947 = vmatprep.subr.mxu0 0.0
      %2948 = vmatpush1.msra.mxu0 0.0
      %2949 = vmatprep.subr.mxu0 0.0
      %2950 = vmatpush1.msra.mxu0 0.0
      %2951 = vmatprep.subr.mxu0 0.0
      %2952 = vmatpush1.msra.mxu0 0.0
      %2953 = vmatprep.subr.mxu0 0.0
      %2954 = vmatpush1.msra.mxu0 0.0
      %2955 = vmatprep.subr.mxu0 0.0
      %2956 = vmatpush1.msra.mxu0 0.0
      %2957 = vmatprep.subr.mxu0 0.0
      %2958 = vmatpush1.msra.mxu0 0.0
      %2959 = vmatprep.subr.mxu0 0.0
      %2960 = vmatpush1.msra.mxu0 0.0
      %2961 = vmatprep.subr.mxu0 0.0
      %2962 = vmatpush1.msra.mxu0 0.0
      %2963 = vmatprep.mubr.f32.mxu0 0.0
      %2964 = vmatmul.mubr.f32.gmra.mrb[0].mxu0 %v2820
      %v2965 = vpop.f32.mrb[0].mxu0
      %v2966 = vadd.f32 0.0, %v2965
      %v2967 = vpop.f32.mrb[0].mxu0
      %2968 = vdwg.mxu0
      %v2969 = vadd.f32 %v2801, %v2895
      %v2970 = vadd.f32 %v2802, %v2897
      %v2971 = vadd.f32 %v2803, %v2966
      %v2972 = vld [vmem:[#allocation2] sm:$0xff]
      %v2973 = vld [vmem:[#allocation2 + $0x8] sm:$0xf]
      %s2974 = scalar_lea.vmem %s6, 10
      %v2975 = vld [vmem:[%s2974] sm:$0x3]
      %v2978 = vcombine.high %v2972, %v2972
      %2979 = vrot.lane.b32.xlu0 %v2972, 108
      %v2980 = vpop.permute.xlu0 %2979
      %2981 = vrot.lane.b32.xlu0 %v2978, 108
      %v2982 = vpop.permute.xlu0 %2981
      %2983 = vrot.lane.b32.xlu0 %v2973, 108
      %v2984 = vpop.permute.xlu0 %2983
      %v2985 = vsel %vm1410, %v2980, %v2982
      %v2986 = vsel %vm1410, %v2982, %v2984
      %v2988 = vsel %vm588, %v2975, 0
      %v2990 = vsel %vm592, %v2985, 0
      %v2992 = vsel %vm592, %v2986, 0
      %v2994 = vsel %vm592, %v2984, 0
      %2996 = vmatprep.subr.mxu0 %v2992
      %2997 = vmatpush1.msra.mxu0 %v2990
      %2998 = vmatprep.subr.mxu0 0.0
      %2999 = vmatpush1.msra.mxu0 0.0
      %3000 = vmatprep.subr.mxu0 0.0
      %3001 = vmatpush1.msra.mxu0 0.0
      %3002 = vmatprep.subr.mxu0 0.0
      %3003 = vmatpush1.msra.mxu0 0.0
      %3004 = vmatprep.subr.mxu0 0.0
      %3005 = vmatpush1.msra.mxu0 0.0
      %3006 = vmatprep.subr.mxu0 0.0
      %3007 = vmatpush1.msra.mxu0 0.0
      %3008 = vmatprep.subr.mxu0 0.0
      %3009 = vmatpush1.msra.mxu0 0.0
      %3010 = vmatprep.subr.mxu0 0.0
      %3011 = vmatpush1.msra.mxu0 0.0
      %3012 = vmatprep.subr.mxu0 0.0
      %3013 = vmatpush1.msra.mxu0 0.0
      %3014 = vmatprep.subr.mxu0 0.0
      %3015 = vmatpush1.msra.mxu0 0.0
      %3016 = vmatprep.subr.mxu0 0.0
      %3017 = vmatpush1.msra.mxu0 0.0
      %3018 = vmatprep.subr.mxu0 0.0
      %3019 = vmatpush1.msra.mxu0 0.0
      %3020 = vmatprep.subr.mxu0 0.0
      %3021 = vmatpush1.msra.mxu0 0.0
      %3022 = vmatprep.subr.mxu0 0.0
      %3023 = vmatpush1.msra.mxu0 0.0
      %3024 = vmatprep.subr.mxu0 0.0
      %3025 = vmatpush1.msra.mxu0 0.0
      %3026 = vmatprep.subr.mxu0 0.0
      %3027 = vmatpush1.msra.mxu0 0.0
      %3028 = vmatprep.subr.mxu0 0.0
      %3029 = vmatpush1.msra.mxu0 0.0
      %3030 = vmatprep.subr.mxu0 0.0
      %3031 = vmatpush1.msra.mxu0 0.0
      %3032 = vmatprep.subr.mxu0 0.0
      %3033 = vmatpush1.msra.mxu0 0.0
      %3034 = vmatprep.subr.mxu0 0.0
      %3035 = vmatpush1.msra.mxu0 0.0
      %3036 = vmatprep.subr.mxu0 0.0
      %3037 = vmatpush1.msra.mxu0 0.0
      %3038 = vmatprep.subr.mxu0 0.0
      %3039 = vmatpush1.msra.mxu0 0.0
      %3040 = vmatprep.subr.mxu0 0.0
      %3041 = vmatpush1.msra.mxu0 0.0
      %3042 = vmatprep.subr.mxu0 0.0
      %3043 = vmatpush1.msra.mxu0 0.0
      %3044 = vmatprep.subr.mxu0 0.0
      %3045 = vmatpush1.msra.mxu0 0.0
      %3046 = vmatprep.subr.mxu0 0.0
      %3047 = vmatpush1.msra.mxu0 0.0
      %3048 = vmatprep.subr.mxu0 0.0
      %3049 = vmatpush1.msra.mxu0 0.0
      %3050 = vmatprep.subr.mxu0 0.0
      %3051 = vmatpush1.msra.mxu0 0.0
      %3052 = vmatprep.subr.mxu0 0.0
      %3053 = vmatpush1.msra.mxu0 0.0
      %3054 = vmatprep.subr.mxu0 0.0
      %3055 = vmatpush1.msra.mxu0 0.0
      %3056 = vmatprep.subr.mxu0 0.0
      %3057 = vmatpush1.msra.mxu0 0.0
      %3058 = vmatprep.subr.mxu0 0.0
      %3059 = vmatpush1.msra.mxu0 0.0
      %3060 = vmatprep.mubr.f32.mxu0 0.0
      %3061 = vmatmul.mubr.f32.gmra.mrb[0].mxu0 %v2988
      %v3062 = vpop.f32.mrb[0].mxu0
      %v3063 = vadd.f32 0.0, %v3062
      %v3064 = vpop.f32.mrb[0].mxu0
      %v3065 = vadd.f32 0.0, %v3064
      %3066 = vdwg.mxu0
      %3067 = vmatprep.subr.mxu0 0.0
      %3068 = vmatpush1.msra.mxu0 %v2994
      %3069 = vmatprep.subr.mxu0 0.0
      %3070 = vmatpush1.msra.mxu0 0.0
      %3071 = vmatprep.subr.mxu0 0.0
      %3072 = vmatpush1.msra.mxu0 0.0
      %3073 = vmatprep.subr.mxu0 0.0
      %3074 = vmatpush1.msra.mxu0 0.0
      %3075 = vmatprep.subr.mxu0 0.0
      %3076 = vmatpush1.msra.mxu0 0.0
      %3077 = vmatprep.subr.mxu0 0.0
      %3078 = vmatpush1.msra.mxu0 0.0
      %3079 = vmatprep.subr.mxu0 0.0
      %3080 = vmatpush1.msra.mxu0 0.0
      %3081 = vmatprep.subr.mxu0 0.0
      %3082 = vmatpush1.msra.mxu0 0.0
      %3083 = vmatprep.subr.mxu0 0.0
      %3084 = vmatpush1.msra.mxu0 0.0
      %3085 = vmatprep.subr.mxu0 0.0
      %3086 = vmatpush1.msra.mxu0 0.0
      %3087 = vmatprep.subr.mxu0 0.0
      %3088 = vmatpush1.msra.mxu0 0.0
      %3089 = vmatprep.subr.mxu0 0.0
      %3090 = vmatpush1.msra.mxu0 0.0
      %3091 = vmatprep.subr.mxu0 0.0
      %3092 = vmatpush1.msra.mxu0 0.0
      %3093 = vmatprep.subr.mxu0 0.0
      %3094 = vmatpush1.msra.mxu0 0.0
      %3095 = vmatprep.subr.mxu0 0.0
      %3096 = vmatpush1.msra.mxu0 0.0
      %3097 = vmatprep.subr.mxu0 0.0
      %3098 = vmatpush1.msra.mxu0 0.0
      %3099 = vmatprep.subr.mxu0 0.0
      %3100 = vmatpush1.msra.mxu0 0.0
      %3101 = vmatprep.subr.mxu0 0.0
      %3102 = vmatpush1.msra.mxu0 0.0
      %3103 = vmatprep.subr.mxu0 0.0
      %3104 = vmatpush1.msra.mxu0 0.0
      %3105 = vmatprep.subr.mxu0 0.0
      %3106 = vmatpush1.msra.mxu0 0.0
      %3107 = vmatprep.subr.mxu0 0.0
      %3108 = vmatpush1.msra.mxu0 0.0
      %3109 = vmatprep.subr.mxu0 0.0
      %3110 = vmatpush1.msra.mxu0 0.0
      %3111 = vmatprep.subr.mxu0 0.0
      %3112 = vmatpush1.msra.mxu0 0.0
      %3113 = vmatprep.subr.mxu0 0.0
      %3114 = vmatpush1.msra.mxu0 0.0
      %3115 = vmatprep.subr.mxu0 0.0
      %3116 = vmatpush1.msra.mxu0 0.0
      %3117 = vmatprep.subr.mxu0 0.0
      %3118 = vmatpush1.msra.mxu0 0.0
      %3119 = vmatprep.subr.mxu0 0.0
      %3120 = vmatpush1.msra.mxu0 0.0
      %3121 = vmatprep.subr.mxu0 0.0
      %3122 = vmatpush1.msra.mxu0 0.0
      %3123 = vmatprep.subr.mxu0 0.0
      %3124 = vmatpush1.msra.mxu0 0.0
      %3125 = vmatprep.subr.mxu0 0.0
      %3126 = vmatpush1.msra.mxu0 0.0
      %3127 = vmatprep.subr.mxu0 0.0
      %3128 = vmatpush1.msra.mxu0 0.0
      %3129 = vmatprep.subr.mxu0 0.0
      %3130 = vmatpush1.msra.mxu0 0.0
      %3131 = vmatprep.mubr.f32.mxu0 0.0
      %3132 = vmatmul.mubr.f32.gmra.mrb[0].mxu0 %v2988
      %v3133 = vpop.f32.mrb[0].mxu0
      %v3134 = vadd.f32 0.0, %v3133
      %v3135 = vpop.f32.mrb[0].mxu0
      %3136 = vdwg.mxu0
      %v3137 = vadd.f32 %v2969, %v3063
      %v3138 = vadd.f32 %v2970, %v3065
      %v3139 = vadd.f32 %v2971, %v3134
      %v3140 = vld [vmem:[#allocation2] sm:$0xff]
      %v3141 = vld [vmem:[#allocation2 + $0x8] sm:$0xf]
      %s3142 = scalar_lea.vmem %s6, 12
      %v3143 = vld [vmem:[%s3142] sm:$0x3]
      %v3146 = vcombine.high %v3140, %v3140
      %3147 = vrot.lane.b32.xlu0 %v3140, 92
      %v3148 = vpop.permute.xlu0 %3147
      %3149 = vrot.lane.b32.xlu0 %v3146, 92
      %v3150 = vpop.permute.xlu0 %3149
      %3151 = vrot.lane.b32.xlu0 %v3141, 92
      %v3152 = vpop.permute.xlu0 %3151
      %v3153 = vsel %vm1579, %v3148, %v3150
      %v3154 = vsel %vm1579, %v3150, %v3152
      %v3156 = vsel %vm588, %v3143, 0
      %v3158 = vsel %vm592, %v3153, 0
      %v3160 = vsel %vm592, %v3154, 0
      %v3162 = vsel %vm592, %v3152, 0
      %3164 = vmatprep.subr.mxu0 %v3160
      %3165 = vmatpush1.msra.mxu0 %v3158
      %3166 = vmatprep.subr.mxu0 0.0
      %3167 = vmatpush1.msra.mxu0 0.0
      %3168 = vmatprep.subr.mxu0 0.0
      %3169 = vmatpush1.msra.mxu0 0.0
      %3170 = vmatprep.subr.mxu0 0.0
      %3171 = vmatpush1.msra.mxu0 0.0
      %3172 = vmatprep.subr.mxu0 0.0
      %3173 = vmatpush1.msra.mxu0 0.0
      %3174 = vmatprep.subr.mxu0 0.0
      %3175 = vmatpush1.msra.mxu0 0.0
      %3176 = vmatprep.subr.mxu0 0.0
      %3177 = vmatpush1.msra.mxu0 0.0
      %3178 = vmatprep.subr.mxu0 0.0
      %3179 = vmatpush1.msra.mxu0 0.0
      %3180 = vmatprep.subr.mxu0 0.0
      %3181 = vmatpush1.msra.mxu0 0.0
      %3182 = vmatprep.subr.mxu0 0.0
      %3183 = vmatpush1.msra.mxu0 0.0
      %3184 = vmatprep.subr.mxu0 0.0
      %3185 = vmatpush1.msra.mxu0 0.0
      %3186 = vmatprep.subr.mxu0 0.0
      %3187 = vmatpush1.msra.mxu0 0.0
      %3188 = vmatprep.subr.mxu0 0.0
      %3189 = vmatpush1.msra.mxu0 0.0
      %3190 = vmatprep.subr.mxu0 0.0
      %3191 = vmatpush1.msra.mxu0 0.0
      %3192 = vmatprep.subr.mxu0 0.0
      %3193 = vmatpush1.msra.mxu0 0.0
      %3194 = vmatprep.subr.mxu0 0.0
      %3195 = vmatpush1.msra.mxu0 0.0
      %3196 = vmatprep.subr.mxu0 0.0
      %3197 = vmatpush1.msra.mxu0 0.0
      %3198 = vmatprep.subr.mxu0 0.0
      %3199 = vmatpush1.msra.mxu0 0.0
      %3200 = vmatprep.subr.mxu0 0.0
      %3201 = vmatpush1.msra.mxu0 0.0
      %3202 = vmatprep.subr.mxu0 0.0
      %3203 = vmatpush1.msra.mxu0 0.0
      %3204 = vmatprep.subr.mxu0 0.0
      %3205 = vmatpush1.msra.mxu0 0.0
      %3206 = vmatprep.subr.mxu0 0.0
      %3207 = vmatpush1.msra.mxu0 0.0
      %3208 = vmatprep.subr.mxu0 0.0
      %3209 = vmatpush1.msra.mxu0 0.0
      %3210 = vmatprep.subr.mxu0 0.0
      %3211 = vmatpush1.msra.mxu0 0.0
      %3212 = vmatprep.subr.mxu0 0.0
      %3213 = vmatpush1.msra.mxu0 0.0
      %3214 = vmatprep.subr.mxu0 0.0
      %3215 = vmatpush1.msra.mxu0 0.0
      %3216 = vmatprep.subr.mxu0 0.0
      %3217 = vmatpush1.msra.mxu0 0.0
      %3218 = vmatprep.subr.mxu0 0.0
      %3219 = vmatpush1.msra.mxu0 0.0
      %3220 = vmatprep.subr.mxu0 0.0
      %3221 = vmatpush1.msra.mxu0 0.0
      %3222 = vmatprep.subr.mxu0 0.0
      %3223 = vmatpush1.msra.mxu0 0.0
      %3224 = vmatprep.subr.mxu0 0.0
      %3225 = vmatpush1.msra.mxu0 0.0
      %3226 = vmatprep.subr.mxu0 0.0
      %3227 = vmatpush1.msra.mxu0 0.0
      %3228 = vmatprep.mubr.f32.mxu0 0.0
      %3229 = vmatmul.mubr.f32.gmra.mrb[0].mxu0 %v3156
      %v3230 = vpop.f32.mrb[0].mxu0
      %v3231 = vadd.f32 0.0, %v3230
      %v3232 = vpop.f32.mrb[0].mxu0
      %v3233 = vadd.f32 0.0, %v3232
      %3234 = vdwg.mxu0
      %3235 = vmatprep.subr.mxu0 0.0
      %3236 = vmatpush1.msra.mxu0 %v3162
      %3237 = vmatprep.subr.mxu0 0.0
      %3238 = vmatpush1.msra.mxu0 0.0
      %3239 = vmatprep.subr.mxu0 0.0
      %3240 = vmatpush1.msra.mxu0 0.0
      %3241 = vmatprep.subr.mxu0 0.0
      %3242 = vmatpush1.msra.mxu0 0.0
      %3243 = vmatprep.subr.mxu0 0.0
      %3244 = vmatpush1.msra.mxu0 0.0
      %3245 = vmatprep.subr.mxu0 0.0
      %3246 = vmatpush1.msra.mxu0 0.0
      %3247 = vmatprep.subr.mxu0 0.0
      %3248 = vmatpush1.msra.mxu0 0.0
      %3249 = vmatprep.subr.mxu0 0.0
      %3250 = vmatpush1.msra.mxu0 0.0
      %3251 = vmatprep.subr.mxu0 0.0
      %3252 = vmatpush1.msra.mxu0 0.0
      %3253 = vmatprep.subr.mxu0 0.0
      %3254 = vmatpush1.msra.mxu0 0.0
      %3255 = vmatprep.subr.mxu0 0.0
      %3256 = vmatpush1.msra.mxu0 0.0
      %3257 = vmatprep.subr.mxu0 0.0
      %3258 = vmatpush1.msra.mxu0 0.0
      %3259 = vmatprep.subr.mxu0 0.0
      %3260 = vmatpush1.msra.mxu0 0.0
      %3261 = vmatprep.subr.mxu0 0.0
      %3262 = vmatpush1.msra.mxu0 0.0
      %3263 = vmatprep.subr.mxu0 0.0
      %3264 = vmatpush1.msra.mxu0 0.0
      %3265 = vmatprep.subr.mxu0 0.0
      %3266 = vmatpush1.msra.mxu0 0.0
      %3267 = vmatprep.subr.mxu0 0.0
      %3268 = vmatpush1.msra.mxu0 0.0
      %3269 = vmatprep.subr.mxu0 0.0
      %3270 = vmatpush1.msra.mxu0 0.0
      %3271 = vmatprep.subr.mxu0 0.0
      %3272 = vmatpush1.msra.mxu0 0.0
      %3273 = vmatprep.subr.mxu0 0.0
      %3274 = vmatpush1.msra.mxu0 0.0
      %3275 = vmatprep.subr.mxu0 0.0
      %3276 = vmatpush1.msra.mxu0 0.0
      %3277 = vmatprep.subr.mxu0 0.0
      %3278 = vmatpush1.msra.mxu0 0.0
      %3279 = vmatprep.subr.mxu0 0.0
      %3280 = vmatpush1.msra.mxu0 0.0
      %3281 = vmatprep.subr.mxu0 0.0
      %3282 = vmatpush1.msra.mxu0 0.0
      %3283 = vmatprep.subr.mxu0 0.0
      %3284 = vmatpush1.msra.mxu0 0.0
      %3285 = vmatprep.subr.mxu0 0.0
      %3286 = vmatpush1.msra.mxu0 0.0
      %3287 = vmatprep.subr.mxu0 0.0
      %3288 = vmatpush1.msra.mxu0 0.0
      %3289 = vmatprep.subr.mxu0 0.0
      %3290 = vmatpush1.msra.mxu0 0.0
      %3291 = vmatprep.subr.mxu0 0.0
      %3292 = vmatpush1.msra.mxu0 0.0
      %3293 = vmatprep.subr.mxu0 0.0
      %3294 = vmatpush1.msra.mxu0 0.0
      %3295 = vmatprep.subr.mxu0 0.0
      %3296 = vmatpush1.msra.mxu0 0.0
      %3297 = vmatprep.subr.mxu0 0.0
      %3298 = vmatpush1.msra.mxu0 0.0
      %3299 = vmatprep.mubr.f32.mxu0 0.0
      %3300 = vmatmul.mubr.f32.gmra.mrb[0].mxu0 %v3156
      %v3301 = vpop.f32.mrb[0].mxu0
      %v3302 = vadd.f32 0.0, %v3301
      %v3303 = vpop.f32.mrb[0].mxu0
      %3304 = vdwg.mxu0
      %v3305 = vadd.f32 %v3137, %v3231
      %v3306 = vadd.f32 %v3138, %v3233
      %v3307 = vadd.f32 %v3139, %v3302
      %v3308 = vld [vmem:[#allocation2] sm:$0xff]
      %v3309 = vld [vmem:[#allocation2 + $0x8] sm:$0xf]
      %s3310 = scalar_lea.vmem %s6, 14
      %v3311 = vld [vmem:[%s3310] sm:$0x3]
      %v3314 = vcombine.high %v3308, %v3308
      %3315 = vrot.lane.b32.xlu0 %v3308, 91
      %v3316 = vpop.permute.xlu0 %3315
      %3317 = vrot.lane.b32.xlu0 %v3314, 91
      %v3318 = vpop.permute.xlu0 %3317
      %3319 = vrot.lane.b32.xlu0 %v3309, 91
      %v3320 = vpop.permute.xlu0 %3319
      %v3321 = vsel %vm1748, %v3316, %v3318
      %v3322 = vsel %vm1748, %v3318, %v3320
      %v3324 = vsel %vm588, %v3311, 0
      %v3326 = vsel %vm592, %v3321, 0
      %v3328 = vsel %vm592, %v3322, 0
      %v3330 = vsel %vm592, %v3320, 0
      %3332 = vmatprep.subr.mxu0 %v3328
      %3333 = vmatpush1.msra.mxu0 %v3326
      %3334 = vmatprep.subr.mxu0 0.0
      %3335 = vmatpush1.msra.mxu0 0.0
      %3336 = vmatprep.subr.mxu0 0.0
      %3337 = vmatpush1.msra.mxu0 0.0
      %3338 = vmatprep.subr.mxu0 0.0
      %3339 = vmatpush1.msra.mxu0 0.0
      %3340 = vmatprep.subr.mxu0 0.0
      %3341 = vmatpush1.msra.mxu0 0.0
      %3342 = vmatprep.subr.mxu0 0.0
      %3343 = vmatpush1.msra.mxu0 0.0
      %3344 = vmatprep.subr.mxu0 0.0
      %3345 = vmatpush1.msra.mxu0 0.0
      %3346 = vmatprep.subr.mxu0 0.0
      %3347 = vmatpush1.msra.mxu0 0.0
      %3348 = vmatprep.subr.mxu0 0.0
      %3349 = vmatpush1.msra.mxu0 0.0
      %3350 = vmatprep.subr.mxu0 0.0
      %3351 = vmatpush1.msra.mxu0 0.0
      %3352 = vmatprep.subr.mxu0 0.0
      %3353 = vmatpush1.msra.mxu0 0.0
      %3354 = vmatprep.subr.mxu0 0.0
      %3355 = vmatpush1.msra.mxu0 0.0
      %3356 = vmatprep.subr.mxu0 0.0
      %3357 = vmatpush1.msra.mxu0 0.0
      %3358 = vmatprep.subr.mxu0 0.0
      %3359 = vmatpush1.msra.mxu0 0.0
      %3360 = vmatprep.subr.mxu0 0.0
      %3361 = vmatpush1.msra.mxu0 0.0
      %3362 = vmatprep.subr.mxu0 0.0
      %3363 = vmatpush1.msra.mxu0 0.0
      %3364 = vmatprep.subr.mxu0 0.0
      %3365 = vmatpush1.msra.mxu0 0.0
      %3366 = vmatprep.subr.mxu0 0.0
      %3367 = vmatpush1.msra.mxu0 0.0
      %3368 = vmatprep.subr.mxu0 0.0
      %3369 = vmatpush1.msra.mxu0 0.0
      %3370 = vmatprep.subr.mxu0 0.0
      %3371 = vmatpush1.msra.mxu0 0.0
      %3372 = vmatprep.subr.mxu0 0.0
      %3373 = vmatpush1.msra.mxu0 0.0
      %3374 = vmatprep.subr.mxu0 0.0
      %3375 = vmatpush1.msra.mxu0 0.0
      %3376 = vmatprep.subr.mxu0 0.0
      %3377 = vmatpush1.msra.mxu0 0.0
      %3378 = vmatprep.subr.mxu0 0.0
      %3379 = vmatpush1.msra.mxu0 0.0
      %3380 = vmatprep.subr.mxu0 0.0
      %3381 = vmatpush1.msra.mxu0 0.0
      %3382 = vmatprep.subr.mxu0 0.0
      %3383 = vmatpush1.msra.mxu0 0.0
      %3384 = vmatprep.subr.mxu0 0.0
      %3385 = vmatpush1.msra.mxu0 0.0
      %3386 = vmatprep.subr.mxu0 0.0
      %3387 = vmatpush1.msra.mxu0 0.0
      %3388 = vmatprep.subr.mxu0 0.0
      %3389 = vmatpush1.msra.mxu0 0.0
      %3390 = vmatprep.subr.mxu0 0.0
      %3391 = vmatpush1.msra.mxu0 0.0
      %3392 = vmatprep.subr.mxu0 0.0
      %3393 = vmatpush1.msra.mxu0 0.0
      %3394 = vmatprep.subr.mxu0 0.0
      %3395 = vmatpush1.msra.mxu0 0.0
      %3396 = vmatprep.mubr.f32.mxu0 0.0
      %3397 = vmatmul.mubr.f32.gmra.mrb[0].mxu0 %v3324
      %v3398 = vpop.f32.mrb[0].mxu0
      %v3399 = vadd.f32 0.0, %v3398
      %v3400 = vpop.f32.mrb[0].mxu0
      %v3401 = vadd.f32 0.0, %v3400
      %3402 = vdwg.mxu0
      %3403 = vmatprep.subr.mxu0 0.0
      %3404 = vmatpush1.msra.mxu0 %v3330
      %3405 = vmatprep.subr.mxu0 0.0
      %3406 = vmatpush1.msra.mxu0 0.0
      %3407 = vmatprep.subr.mxu0 0.0
      %3408 = vmatpush1.msra.mxu0 0.0
      %3409 = vmatprep.subr.mxu0 0.0
      %3410 = vmatpush1.msra.mxu0 0.0
      %3411 = vmatprep.subr.mxu0 0.0
      %3412 = vmatpush1.msra.mxu0 0.0
      %3413 = vmatprep.subr.mxu0 0.0
      %3414 = vmatpush1.msra.mxu0 0.0
      %3415 = vmatprep.subr.mxu0 0.0
      %3416 = vmatpush1.msra.mxu0 0.0
      %3417 = vmatprep.subr.mxu0 0.0
      %3418 = vmatpush1.msra.mxu0 0.0
      %3419 = vmatprep.subr.mxu0 0.0
      %3420 = vmatpush1.msra.mxu0 0.0
      %3421 = vmatprep.subr.mxu0 0.0
      %3422 = vmatpush1.msra.mxu0 0.0
      %3423 = vmatprep.subr.mxu0 0.0
      %3424 = vmatpush1.msra.mxu0 0.0
      %3425 = vmatprep.subr.mxu0 0.0
      %3426 = vmatpush1.msra.mxu0 0.0
      %3427 = vmatprep.subr.mxu0 0.0
      %3428 = vmatpush1.msra.mxu0 0.0
      %3429 = vmatprep.subr.mxu0 0.0
      %3430 = vmatpush1.msra.mxu0 0.0
      %3431 = vmatprep.subr.mxu0 0.0
      %3432 = vmatpush1.msra.mxu0 0.0
      %3433 = vmatprep.subr.mxu0 0.0
      %3434 = vmatpush1.msra.mxu0 0.0
      %3435 = vmatprep.subr.mxu0 0.0
      %3436 = vmatpush1.msra.mxu0 0.0
      %3437 = vmatprep.subr.mxu0 0.0
      %3438 = vmatpush1.msra.mxu0 0.0
      %3439 = vmatprep.subr.mxu0 0.0
      %3440 = vmatpush1.msra.mxu0 0.0
      %3441 = vmatprep.subr.mxu0 0.0
      %3442 = vmatpush1.msra.mxu0 0.0
      %3443 = vmatprep.subr.mxu0 0.0
      %3444 = vmatpush1.msra.mxu0 0.0
      %3445 = vmatprep.subr.mxu0 0.0
      %3446 = vmatpush1.msra.mxu0 0.0
      %3447 = vmatprep.subr.mxu0 0.0
      %3448 = vmatpush1.msra.mxu0 0.0
      %3449 = vmatprep.subr.mxu0 0.0
      %3450 = vmatpush1.msra.mxu0 0.0
      %3451 = vmatprep.subr.mxu0 0.0
      %3452 = vmatpush1.msra.mxu0 0.0
      %3453 = vmatprep.subr.mxu0 0.0
      %3454 = vmatpush1.msra.mxu0 0.0
      %3455 = vmatprep.subr.mxu0 0.0
      %3456 = vmatpush1.msra.mxu0 0.0
      %3457 = vmatprep.subr.mxu0 0.0
      %3458 = vmatpush1.msra.mxu0 0.0
      %3459 = vmatprep.subr.mxu0 0.0
      %3460 = vmatpush1.msra.mxu0 0.0
      %3461 = vmatprep.subr.mxu0 0.0
      %3462 = vmatpush1.msra.mxu0 0.0
      %3463 = vmatprep.subr.mxu0 0.0
      %3464 = vmatpush1.msra.mxu0 0.0
      %3465 = vmatprep.subr.mxu0 0.0
      %3466 = vmatpush1.msra.mxu0 0.0
      %3467 = vmatprep.mubr.f32.mxu0 0.0
      %3468 = vmatmul.mubr.f32.gmra.mrb[0].mxu0 %v3324
      %v3469 = vpop.f32.mrb[0].mxu0
      %v3470 = vadd.f32 0.0, %v3469
      %v3471 = vpop.f32.mrb[0].mxu0
      %3472 = vdwg.mxu0
      %v3473 = vadd.f32 %v3305, %v3399
      %v3474 = vadd.f32 %v3306, %v3401
      %v3475 = vadd.f32 %v3307, %v3470
      %v3476 = vld [vmem:[#allocation2] sm:$0xff]
      %v3477 = vld [vmem:[#allocation2 + $0x8] sm:$0xf]
      %s3478 = scalar_lea.vmem %s6, 16
      %v3479 = vld [vmem:[%s3478] sm:$0x3]
      %v3482 = vcombine.high %v3476, %v3476
      %3483 = vrot.lane.b32.xlu0 %v3476, 90
      %v3484 = vpop.permute.xlu0 %3483
      %3485 = vrot.lane.b32.xlu0 %v3482, 90
      %v3486 = vpop.permute.xlu0 %3485
      %3487 = vrot.lane.b32.xlu0 %v3477, 90
      %v3488 = vpop.permute.xlu0 %3487
      %v3489 = vsel %vm1917, %v3484, %v3486
      %v3490 = vsel %vm1917, %v3486, %v3488
      %v3492 = vsel %vm588, %v3479, 0
      %v3494 = vsel %vm592, %v3489, 0
      %v3496 = vsel %vm592, %v3490, 0
      %v3498 = vsel %vm592, %v3488, 0
      %3500 = vmatprep.subr.mxu0 %v3496
      %3501 = vmatpush1.msra.mxu0 %v3494
      %3502 = vmatprep.subr.mxu0 0.0
      %3503 = vmatpush1.msra.mxu0 0.0
      %3504 = vmatprep.subr.mxu0 0.0
      %3505 = vmatpush1.msra.mxu0 0.0
      %3506 = vmatprep.subr.mxu0 0.0
      %3507 = vmatpush1.msra.mxu0 0.0
      %3508 = vmatprep.subr.mxu0 0.0
      %3509 = vmatpush1.msra.mxu0 0.0
      %3510 = vmatprep.subr.mxu0 0.0
      %3511 = vmatpush1.msra.mxu0 0.0
      %3512 = vmatprep.subr.mxu0 0.0
      %3513 = vmatpush1.msra.mxu0 0.0
      %3514 = vmatprep.subr.mxu0 0.0
      %3515 = vmatpush1.msra.mxu0 0.0
      %3516 = vmatprep.subr.mxu0 0.0
      %3517 = vmatpush1.msra.mxu0 0.0
      %3518 = vmatprep.subr.mxu0 0.0
      %3519 = vmatpush1.msra.mxu0 0.0
      %3520 = vmatprep.subr.mxu0 0.0
      %3521 = vmatpush1.msra.mxu0 0.0
      %3522 = vmatprep.subr.mxu0 0.0
      %3523 = vmatpush1.msra.mxu0 0.0
      %3524 = vmatprep.subr.mxu0 0.0
      %3525 = vmatpush1.msra.mxu0 0.0
      %3526 = vmatprep.subr.mxu0 0.0
      %3527 = vmatpush1.msra.mxu0 0.0
      %3528 = vmatprep.subr.mxu0 0.0
      %3529 = vmatpush1.msra.mxu0 0.0
      %3530 = vmatprep.subr.mxu0 0.0
      %3531 = vmatpush1.msra.mxu0 0.0
      %3532 = vmatprep.subr.mxu0 0.0
      %3533 = vmatpush1.msra.mxu0 0.0
      %3534 = vmatprep.subr.mxu0 0.0
      %3535 = vmatpush1.msra.mxu0 0.0
      %3536 = vmatprep.subr.mxu0 0.0
      %3537 = vmatpush1.msra.mxu0 0.0
      %3538 = vmatprep.subr.mxu0 0.0
      %3539 = vmatpush1.msra.mxu0 0.0
      %3540 = vmatprep.subr.mxu0 0.0
      %3541 = vmatpush1.msra.mxu0 0.0
      %3542 = vmatprep.subr.mxu0 0.0
      %3543 = vmatpush1.msra.mxu0 0.0
      %3544 = vmatprep.subr.mxu0 0.0
      %3545 = vmatpush1.msra.mxu0 0.0
      %3546 = vmatprep.subr.mxu0 0.0
      %3547 = vmatpush1.msra.mxu0 0.0
      %3548 = vmatprep.subr.mxu0 0.0
      %3549 = vmatpush1.msra.mxu0 0.0
      %3550 = vmatprep.subr.mxu0 0.0
      %3551 = vmatpush1.msra.mxu0 0.0
      %3552 = vmatprep.subr.mxu0 0.0
      %3553 = vmatpush1.msra.mxu0 0.0
      %3554 = vmatprep.subr.mxu0 0.0
      %3555 = vmatpush1.msra.mxu0 0.0
      %3556 = vmatprep.subr.mxu0 0.0
      %3557 = vmatpush1.msra.mxu0 0.0
      %3558 = vmatprep.subr.mxu0 0.0
      %3559 = vmatpush1.msra.mxu0 0.0
      %3560 = vmatprep.subr.mxu0 0.0
      %3561 = vmatpush1.msra.mxu0 0.0
      %3562 = vmatprep.subr.mxu0 0.0
      %3563 = vmatpush1.msra.mxu0 0.0
      %3564 = vmatprep.mubr.f32.mxu0 0.0
      %3565 = vmatmul.mubr.f32.gmra.mrb[0].mxu0 %v3492
      %v3566 = vpop.f32.mrb[0].mxu0
      %v3567 = vadd.f32 0.0, %v3566
      %v3568 = vpop.f32.mrb[0].mxu0
      %v3569 = vadd.f32 0.0, %v3568
      %3570 = vdwg.mxu0
      %3571 = vmatprep.subr.mxu0 0.0
      %3572 = vmatpush1.msra.mxu0 %v3498
      %3573 = vmatprep.subr.mxu0 0.0
      %3574 = vmatpush1.msra.mxu0 0.0
      %3575 = vmatprep.subr.mxu0 0.0
      %3576 = vmatpush1.msra.mxu0 0.0
      %3577 = vmatprep.subr.mxu0 0.0
      %3578 = vmatpush1.msra.mxu0 0.0
      %3579 = vmatprep.subr.mxu0 0.0
      %3580 = vmatpush1.msra.mxu0 0.0
      %3581 = vmatprep.subr.mxu0 0.0
      %3582 = vmatpush1.msra.mxu0 0.0
      %3583 = vmatprep.subr.mxu0 0.0
      %3584 = vmatpush1.msra.mxu0 0.0
      %3585 = vmatprep.subr.mxu0 0.0
      %3586 = vmatpush1.msra.mxu0 0.0
      %3587 = vmatprep.subr.mxu0 0.0
      %3588 = vmatpush1.msra.mxu0 0.0
      %3589 = vmatprep.subr.mxu0 0.0
      %3590 = vmatpush1.msra.mxu0 0.0
      %3591 = vmatprep.subr.mxu0 0.0
      %3592 = vmatpush1.msra.mxu0 0.0
      %3593 = vmatprep.subr.mxu0 0.0
      %3594 = vmatpush1.msra.mxu0 0.0
      %3595 = vmatprep.subr.mxu0 0.0
      %3596 = vmatpush1.msra.mxu0 0.0
      %3597 = vmatprep.subr.mxu0 0.0
      %3598 = vmatpush1.msra.mxu0 0.0
      %3599 = vmatprep.subr.mxu0 0.0
      %3600 = vmatpush1.msra.mxu0 0.0
      %3601 = vmatprep.subr.mxu0 0.0
      %3602 = vmatpush1.msra.mxu0 0.0
      %3603 = vmatprep.subr.mxu0 0.0
      %3604 = vmatpush1.msra.mxu0 0.0
      %3605 = vmatprep.subr.mxu0 0.0
      %3606 = vmatpush1.msra.mxu0 0.0
      %3607 = vmatprep.subr.mxu0 0.0
      %3608 = vmatpush1.msra.mxu0 0.0
      %3609 = vmatprep.subr.mxu0 0.0
      %3610 = vmatpush1.msra.mxu0 0.0
      %3611 = vmatprep.subr.mxu0 0.0
      %3612 = vmatpush1.msra.mxu0 0.0
      %3613 = vmatprep.subr.mxu0 0.0
      %3614 = vmatpush1.msra.mxu0 0.0
      %3615 = vmatprep.subr.mxu0 0.0
      %3616 = vmatpush1.msra.mxu0 0.0
      %3617 = vmatprep.subr.mxu0 0.0
      %3618 = vmatpush1.msra.mxu0 0.0
      %3619 = vmatprep.subr.mxu0 0.0
      %3620 = vmatpush1.msra.mxu0 0.0
      %3621 = vmatprep.subr.mxu0 0.0
      %3622 = vmatpush1.msra.mxu0 0.0
      %3623 = vmatprep.subr.mxu0 0.0
      %3624 = vmatpush1.msra.mxu0 0.0
      %3625 = vmatprep.subr.mxu0 0.0
      %3626 = vmatpush1.msra.mxu0 0.0
      %3627 = vmatprep.subr.mxu0 0.0
      %3628 = vmatpush1.msra.mxu0 0.0
      %3629 = vmatprep.subr.mxu0 0.0
      %3630 = vmatpush1.msra.mxu0 0.0
      %3631 = vmatprep.subr.mxu0 0.0
      %3632 = vmatpush1.msra.mxu0 0.0
      %3633 = vmatprep.subr.mxu0 0.0
      %3634 = vmatpush1.msra.mxu0 0.0
      %3635 = vmatprep.mubr.f32.mxu0 0.0
      %3636 = vmatmul.mubr.f32.gmra.mrb[0].mxu0 %v3492
      %v3637 = vpop.f32.mrb[0].mxu0
      %v3638 = vadd.f32 0.0, %v3637
      %v3639 = vpop.f32.mrb[0].mxu0
      %3640 = vdwg.mxu0
      %v3641 = vadd.f32 %v3473, %v3567
      %v3642 = vadd.f32 %v3474, %v3569
      %v3643 = vadd.f32 %v3475, %v3638
      %v3644 = vld [vmem:[%s7] sm:$0x3]
      %3646 = vset.pattern.permute.xlu0 0
      %3647 = vperm.xlu0 %3646, %v3644
      %v3648 = vpop.permute.xlu0 %3647
      %v3650 = vadd.f32 %v3641, %v3648
      %v3651 = vadd.f32 %v3642, %v3648
      %v3652 = vadd.f32 %v3643, %v3648
      %v3653 = vmax.f32 %v3650, 0.0
      %v3654 = vmax.f32 %v3651, 0.0
      %v3655 = vmax.f32 %v3652, 0.0
      %v3656 = vmul.f32 %v3653, %v2086
      %v3657 = vmul.f32 %v3654, %v2090
      %v3658 = vmul.f32 %v3655, %v2094
      %v3662 = vcombine.low %v3656, %v3657
      %3663 = vrot.lane.b32.xlu0 %v3662, 19
      %v3664 = vpop.permute.xlu0 %3663
      %3665 = vrot.lane.b32.xlu0 %v3658, 19
      %v3666 = vpop.permute.xlu0 %3665
      %v3667 = vrot.slane %v3664, 4
      %v3668 = vsel %vm560, %v3667, %v3664
      %v3669 = vsel %vm560, %v3667, %v3666
      %3672 = vst.msk [vmem:[#allocation2] sm:$0x33] %vm2116, %v3668
      %3673 = vst.msk [vmem:[#allocation2 + $0x8] sm:$0x3] %vm2118, %v3669
      %v3674 = vld [vmem:[#allocation2] sm:$0x33]
      %v3675 = vld [vmem:[#allocation2 + $0x8] sm:$0x3]
      %v3676 = vld [vmem:[%s8] sm:$0x3]
      %s3677 = scalar_lea.vmem %s8, 2
      %v3678 = vld [vmem:[%s3677] sm:$0x3]
      %v3681 = vcombine.high %v3674, %v3674
      %3682 = vrot.lane.b32.xlu0 %v3674, 127
      %v3683 = vpop.permute.xlu0 %3682
      %3684 = vrot.lane.b32.xlu0 %v3681, 127
      %v3685 = vpop.permute.xlu0 %3684
      %3686 = vrot.lane.b32.xlu0 %v3675, 127
      %v3687 = vpop.permute.xlu0 %3686
      %v3688 = vsel %vm585, %v3683, %v3685
      %v3689 = vsel %vm585, %v3685, %v3687
      %vm3690 = vcmask 15360
      %v3692 = vsel %vm3690, %v3678, 0
      %vm3694 = vcmask 1041408
      %v3695 = vsel %vm3694, %v3688, 0
      %v3697 = vsel %vm3694, %v3689, 0
      %v3699 = vsel %vm3694, %v3687, 0
      %3701 = vmatprep.subr.mxu0 %v3697
      %3702 = vmatpush1.msra.mxu0 %v3695
      %3703 = vmatprep.subr.mxu0 0.0
      %3704 = vmatpush1.msra.mxu0 0.0
      %3705 = vmatprep.subr.mxu0 0.0
      %3706 = vmatpush1.msra.mxu0 0.0
      %3707 = vmatprep.subr.mxu0 0.0
      %3708 = vmatpush1.msra.mxu0 0.0
      %3709 = vmatprep.subr.mxu0 0.0
      %3710 = vmatpush1.msra.mxu0 0.0
      %3711 = vmatprep.subr.mxu0 0.0
      %3712 = vmatpush1.msra.mxu0 0.0
      %3713 = vmatprep.subr.mxu0 0.0
      %3714 = vmatpush1.msra.mxu0 0.0
      %3715 = vmatprep.subr.mxu0 0.0
      %3716 = vmatpush1.msra.mxu0 0.0
      %3717 = vmatprep.subr.mxu0 0.0
      %3718 = vmatpush1.msra.mxu0 0.0
      %3719 = vmatprep.subr.mxu0 0.0
      %3720 = vmatpush1.msra.mxu0 0.0
      %3721 = vmatprep.subr.mxu0 0.0
      %3722 = vmatpush1.msra.mxu0 0.0
      %3723 = vmatprep.subr.mxu0 0.0
      %3724 = vmatpush1.msra.mxu0 0.0
      %3725 = vmatprep.subr.mxu0 0.0
      %3726 = vmatpush1.msra.mxu0 0.0
      %3727 = vmatprep.subr.mxu0 0.0
      %3728 = vmatpush1.msra.mxu0 0.0
      %3729 = vmatprep.subr.mxu0 0.0
      %3730 = vmatpush1.msra.mxu0 0.0
      %3731 = vmatprep.subr.mxu0 0.0
      %3732 = vmatpush1.msra.mxu0 0.0
      %3733 = vmatprep.subr.mxu0 0.0
      %3734 = vmatpush1.msra.mxu0 0.0
      %3735 = vmatprep.subr.mxu0 0.0
      %3736 = vmatpush1.msra.mxu0 0.0
      %3737 = vmatprep.subr.mxu0 0.0
      %3738 = vmatpush1.msra.mxu0 0.0
      %3739 = vmatprep.subr.mxu0 0.0
      %3740 = vmatpush1.msra.mxu0 0.0
      %3741 = vmatprep.subr.mxu0 0.0
      %3742 = vmatpush1.msra.mxu0 0.0
      %3743 = vmatprep.subr.mxu0 0.0
      %3744 = vmatpush1.msra.mxu0 0.0
      %3745 = vmatprep.subr.mxu0 0.0
      %3746 = vmatpush1.msra.mxu0 0.0
      %3747 = vmatprep.subr.mxu0 0.0
      %3748 = vmatpush1.msra.mxu0 0.0
      %3749 = vmatprep.subr.mxu0 0.0
      %3750 = vmatpush1.msra.mxu0 0.0
      %3751 = vmatprep.subr.mxu0 0.0
      %3752 = vmatpush1.msra.mxu0 0.0
      %3753 = vmatprep.subr.mxu0 0.0
      %3754 = vmatpush1.msra.mxu0 0.0
      %3755 = vmatprep.subr.mxu0 0.0
      %3756 = vmatpush1.msra.mxu0 0.0
      %3757 = vmatprep.subr.mxu0 0.0
      %3758 = vmatpush1.msra.mxu0 0.0
      %3759 = vmatprep.subr.mxu0 0.0
      %3760 = vmatpush1.msra.mxu0 0.0
      %3761 = vmatprep.subr.mxu0 0.0
      %3762 = vmatpush1.msra.mxu0 0.0
      %3763 = vmatprep.subr.mxu0 0.0
      %3764 = vmatpush1.msra.mxu0 0.0
      %3765 = vmatprep.mubr.f32.mxu0 0.0
      %3766 = vmatmul.mubr.f32.gmra.mrb[0].mxu0 %v3692
      %v3767 = vpop.f32.mrb[0].mxu0
      %v3768 = vadd.f32 0.0, %v3767
      %v3769 = vpop.f32.mrb[0].mxu0
      %v3770 = vadd.f32 0.0, %v3769
      %3771 = vdwg.mxu0
      %3772 = vmatprep.subr.mxu0 0.0
      %3773 = vmatpush1.msra.mxu0 %v3699
      %3774 = vmatprep.subr.mxu0 0.0
      %3775 = vmatpush1.msra.mxu0 0.0
      %3776 = vmatprep.subr.mxu0 0.0
      %3777 = vmatpush1.msra.mxu0 0.0
      %3778 = vmatprep.subr.mxu0 0.0
      %3779 = vmatpush1.msra.mxu0 0.0
      %3780 = vmatprep.subr.mxu0 0.0
      %3781 = vmatpush1.msra.mxu0 0.0
      %3782 = vmatprep.subr.mxu0 0.0
      %3783 = vmatpush1.msra.mxu0 0.0
      %3784 = vmatprep.subr.mxu0 0.0
      %3785 = vmatpush1.msra.mxu0 0.0
      %3786 = vmatprep.subr.mxu0 0.0
      %3787 = vmatpush1.msra.mxu0 0.0
      %3788 = vmatprep.subr.mxu0 0.0
      %3789 = vmatpush1.msra.mxu0 0.0
      %3790 = vmatprep.subr.mxu0 0.0
      %3791 = vmatpush1.msra.mxu0 0.0
      %3792 = vmatprep.subr.mxu0 0.0
      %3793 = vmatpush1.msra.mxu0 0.0
      %3794 = vmatprep.subr.mxu0 0.0
      %3795 = vmatpush1.msra.mxu0 0.0
      %3796 = vmatprep.subr.mxu0 0.0
      %3797 = vmatpush1.msra.mxu0 0.0
      %3798 = vmatprep.subr.mxu0 0.0
      %3799 = vmatpush1.msra.mxu0 0.0
      %3800 = vmatprep.subr.mxu0 0.0
      %3801 = vmatpush1.msra.mxu0 0.0
      %3802 = vmatprep.subr.mxu0 0.0
      %3803 = vmatpush1.msra.mxu0 0.0
      %3804 = vmatprep.subr.mxu0 0.0
      %3805 = vmatpush1.msra.mxu0 0.0
      %3806 = vmatprep.subr.mxu0 0.0
      %3807 = vmatpush1.msra.mxu0 0.0
      %3808 = vmatprep.subr.mxu0 0.0
      %3809 = vmatpush1.msra.mxu0 0.0
      %3810 = vmatprep.subr.mxu0 0.0
      %3811 = vmatpush1.msra.mxu0 0.0
      %3812 = vmatprep.subr.mxu0 0.0
      %3813 = vmatpush1.msra.mxu0 0.0
      %3814 = vmatprep.subr.mxu0 0.0
      %3815 = vmatpush1.msra.mxu0 0.0
      %3816 = vmatprep.subr.mxu0 0.0
      %3817 = vmatpush1.msra.mxu0 0.0
      %3818 = vmatprep.subr.mxu0 0.0
      %3819 = vmatpush1.msra.mxu0 0.0
      %3820 = vmatprep.subr.mxu0 0.0
      %3821 = vmatpush1.msra.mxu0 0.0
      %3822 = vmatprep.subr.mxu0 0.0
      %3823 = vmatpush1.msra.mxu0 0.0
      %3824 = vmatprep.subr.mxu0 0.0
      %3825 = vmatpush1.msra.mxu0 0.0
      %3826 = vmatprep.subr.mxu0 0.0
      %3827 = vmatpush1.msra.mxu0 0.0
      %3828 = vmatprep.subr.mxu0 0.0
      %3829 = vmatpush1.msra.mxu0 0.0
      %3830 = vmatprep.subr.mxu0 0.0
      %3831 = vmatpush1.msra.mxu0 0.0
      %3832 = vmatprep.subr.mxu0 0.0
      %3833 = vmatpush1.msra.mxu0 0.0
      %3834 = vmatprep.subr.mxu0 0.0
      %3835 = vmatpush1.msra.mxu0 0.0
      %3836 = vmatprep.mubr.f32.mxu0 0.0
      %3837 = vmatmul.mubr.f32.gmra.mrb[0].mxu0 %v3692
      %v3838 = vpop.f32.mrb[0].mxu0
      %v3839 = vadd.f32 0.0, %v3838
      %v3840 = vpop.f32.mrb[0].mxu0
      %3841 = vdwg.mxu0
      %v3843 = vsel %vm3690, %v3676, 0
      %v3845 = vsel %vm3694, %v3674, 0
      %v3847 = vsel %vm3694, %v3681, 0
      %v3849 = vsel %vm3694, %v3675, 0
      %3851 = vmatprep.subr.mxu0 %v3847
      %3852 = vmatpush1.msra.mxu0 %v3845
      %3853 = vmatprep.subr.mxu0 0.0
      %3854 = vmatpush1.msra.mxu0 0.0
      %3855 = vmatprep.subr.mxu0 0.0
      %3856 = vmatpush1.msra.mxu0 0.0
      %3857 = vmatprep.subr.mxu0 0.0
      %3858 = vmatpush1.msra.mxu0 0.0
      %3859 = vmatprep.subr.mxu0 0.0
      %3860 = vmatpush1.msra.mxu0 0.0
      %3861 = vmatprep.subr.mxu0 0.0
      %3862 = vmatpush1.msra.mxu0 0.0
      %3863 = vmatprep.subr.mxu0 0.0
      %3864 = vmatpush1.msra.mxu0 0.0
      %3865 = vmatprep.subr.mxu0 0.0
      %3866 = vmatpush1.msra.mxu0 0.0
      %3867 = vmatprep.subr.mxu0 0.0
      %3868 = vmatpush1.msra.mxu0 0.0
      %3869 = vmatprep.subr.mxu0 0.0
      %3870 = vmatpush1.msra.mxu0 0.0
      %3871 = vmatprep.subr.mxu0 0.0
      %3872 = vmatpush1.msra.mxu0 0.0
      %3873 = vmatprep.subr.mxu0 0.0
      %3874 = vmatpush1.msra.mxu0 0.0
      %3875 = vmatprep.subr.mxu0 0.0
      %3876 = vmatpush1.msra.mxu0 0.0
      %3877 = vmatprep.subr.mxu0 0.0
      %3878 = vmatpush1.msra.mxu0 0.0
      %3879 = vmatprep.subr.mxu0 0.0
      %3880 = vmatpush1.msra.mxu0 0.0
      %3881 = vmatprep.subr.mxu0 0.0
      %3882 = vmatpush1.msra.mxu0 0.0
      %3883 = vmatprep.subr.mxu0 0.0
      %3884 = vmatpush1.msra.mxu0 0.0
      %3885 = vmatprep.subr.mxu0 0.0
      %3886 = vmatpush1.msra.mxu0 0.0
      %3887 = vmatprep.subr.mxu0 0.0
      %3888 = vmatpush1.msra.mxu0 0.0
      %3889 = vmatprep.subr.mxu0 0.0
      %3890 = vmatpush1.msra.mxu0 0.0
      %3891 = vmatprep.subr.mxu0 0.0
      %3892 = vmatpush1.msra.mxu0 0.0
      %3893 = vmatprep.subr.mxu0 0.0
      %3894 = vmatpush1.msra.mxu0 0.0
      %3895 = vmatprep.subr.mxu0 0.0
      %3896 = vmatpush1.msra.mxu0 0.0
      %3897 = vmatprep.subr.mxu0 0.0
      %3898 = vmatpush1.msra.mxu0 0.0
      %3899 = vmatprep.subr.mxu0 0.0
      %3900 = vmatpush1.msra.mxu0 0.0
      %3901 = vmatprep.subr.mxu0 0.0
      %3902 = vmatpush1.msra.mxu0 0.0
      %3903 = vmatprep.subr.mxu0 0.0
      %3904 = vmatpush1.msra.mxu0 0.0
      %3905 = vmatprep.subr.mxu0 0.0
      %3906 = vmatpush1.msra.mxu0 0.0
      %3907 = vmatprep.subr.mxu0 0.0
      %3908 = vmatpush1.msra.mxu0 0.0
      %3909 = vmatprep.subr.mxu0 0.0
      %3910 = vmatpush1.msra.mxu0 0.0
      %3911 = vmatprep.subr.mxu0 0.0
      %3912 = vmatpush1.msra.mxu0 0.0
      %3913 = vmatprep.subr.mxu0 0.0
      %3914 = vmatpush1.msra.mxu0 0.0
      %3915 = vmatprep.mubr.f32.mxu0 0.0
      %3916 = vmatmul.mubr.f32.gmra.mrb[0].mxu0 %v3843
      %v3917 = vpop.f32.mrb[0].mxu0
      %v3918 = vadd.f32 %v3768, %v3917
      %v3919 = vpop.f32.mrb[0].mxu0
      %v3920 = vadd.f32 %v3770, %v3919
      %3921 = vdwg.mxu0
      %3922 = vmatprep.subr.mxu0 0.0
      %3923 = vmatpush1.msra.mxu0 %v3849
      %3924 = vmatprep.subr.mxu0 0.0
      %3925 = vmatpush1.msra.mxu0 0.0
      %3926 = vmatprep.subr.mxu0 0.0
      %3927 = vmatpush1.msra.mxu0 0.0
      %3928 = vmatprep.subr.mxu0 0.0
      %3929 = vmatpush1.msra.mxu0 0.0
      %3930 = vmatprep.subr.mxu0 0.0
      %3931 = vmatpush1.msra.mxu0 0.0
      %3932 = vmatprep.subr.mxu0 0.0
      %3933 = vmatpush1.msra.mxu0 0.0
      %3934 = vmatprep.subr.mxu0 0.0
      %3935 = vmatpush1.msra.mxu0 0.0
      %3936 = vmatprep.subr.mxu0 0.0
      %3937 = vmatpush1.msra.mxu0 0.0
      %3938 = vmatprep.subr.mxu0 0.0
      %3939 = vmatpush1.msra.mxu0 0.0
      %3940 = vmatprep.subr.mxu0 0.0
      %3941 = vmatpush1.msra.mxu0 0.0
      %3942 = vmatprep.subr.mxu0 0.0
      %3943 = vmatpush1.msra.mxu0 0.0
      %3944 = vmatprep.subr.mxu0 0.0
      %3945 = vmatpush1.msra.mxu0 0.0
      %3946 = vmatprep.subr.mxu0 0.0
      %3947 = vmatpush1.msra.mxu0 0.0
      %3948 = vmatprep.subr.mxu0 0.0
      %3949 = vmatpush1.msra.mxu0 0.0
      %3950 = vmatprep.subr.mxu0 0.0
      %3951 = vmatpush1.msra.mxu0 0.0
      %3952 = vmatprep.subr.mxu0 0.0
      %3953 = vmatpush1.msra.mxu0 0.0
      %3954 = vmatprep.subr.mxu0 0.0
      %3955 = vmatpush1.msra.mxu0 0.0
      %3956 = vmatprep.subr.mxu0 0.0
      %3957 = vmatpush1.msra.mxu0 0.0
      %3958 = vmatprep.subr.mxu0 0.0
      %3959 = vmatpush1.msra.mxu0 0.0
      %3960 = vmatprep.subr.mxu0 0.0
      %3961 = vmatpush1.msra.mxu0 0.0
      %3962 = vmatprep.subr.mxu0 0.0
      %3963 = vmatpush1.msra.mxu0 0.0
      %3964 = vmatprep.subr.mxu0 0.0
      %3965 = vmatpush1.msra.mxu0 0.0
      %3966 = vmatprep.subr.mxu0 0.0
      %3967 = vmatpush1.msra.mxu0 0.0
      %3968 = vmatprep.subr.mxu0 0.0
      %3969 = vmatpush1.msra.mxu0 0.0
      %3970 = vmatprep.subr.mxu0 0.0
      %3971 = vmatpush1.msra.mxu0 0.0
      %3972 = vmatprep.subr.mxu0 0.0
      %3973 = vmatpush1.msra.mxu0 0.0
      %3974 = vmatprep.subr.mxu0 0.0
      %3975 = vmatpush1.msra.mxu0 0.0
      %3976 = vmatprep.subr.mxu0 0.0
      %3977 = vmatpush1.msra.mxu0 0.0
      %3978 = vmatprep.subr.mxu0 0.0
      %3979 = vmatpush1.msra.mxu0 0.0
      %3980 = vmatprep.subr.mxu0 0.0
      %3981 = vmatpush1.msra.mxu0 0.0
      %3982 = vmatprep.subr.mxu0 0.0
      %3983 = vmatpush1.msra.mxu0 0.0
      %3984 = vmatprep.subr.mxu0 0.0
      %3985 = vmatpush1.msra.mxu0 0.0
      %3986 = vmatprep.mubr.f32.mxu0 0.0
      %3987 = vmatmul.mubr.f32.gmra.mrb[0].mxu0 %v3843
      %v3988 = vpop.f32.mrb[0].mxu0
      %v3989 = vadd.f32 %v3839, %v3988
      %v3990 = vpop.f32.mrb[0].mxu0
      %3991 = vdwg.mxu0
      %v3992 = vld [vmem:[#allocation2] sm:$0x33]
      %v3993 = vld [vmem:[#allocation2 + $0x8] sm:$0x3]
      %s3994 = scalar_lea.vmem %s8, 4
      %v3995 = vld [vmem:[%s3994] sm:$0x3]
      %v3998 = vcombine.high %v3992, %v3992
      %3999 = vrot.lane.b32.xlu0 %v3992, 126
      %v4000 = vpop.permute.xlu0 %3999
      %4001 = vrot.lane.b32.xlu0 %v3998, 126
      %v4002 = vpop.permute.xlu0 %4001
      %4003 = vrot.lane.b32.xlu0 %v3993, 126
      %v4004 = vpop.permute.xlu0 %4003
      %v4005 = vsel %vm903, %v4000, %v4002
      %v4006 = vsel %vm903, %v4002, %v4004
      %v4008 = vsel %vm3690, %v3995, 0
      %v4010 = vsel %vm3694, %v4005, 0
      %v4012 = vsel %vm3694, %v4006, 0
      %v4014 = vsel %vm3694, %v4004, 0
      %4016 = vmatprep.subr.mxu0 %v4012
      %4017 = vmatpush1.msra.mxu0 %v4010
      %4018 = vmatprep.subr.mxu0 0.0
      %4019 = vmatpush1.msra.mxu0 0.0
      %4020 = vmatprep.subr.mxu0 0.0
      %4021 = vmatpush1.msra.mxu0 0.0
      %4022 = vmatprep.subr.mxu0 0.0
      %4023 = vmatpush1.msra.mxu0 0.0
      %4024 = vmatprep.subr.mxu0 0.0
      %4025 = vmatpush1.msra.mxu0 0.0
      %4026 = vmatprep.subr.mxu0 0.0
      %4027 = vmatpush1.msra.mxu0 0.0
      %4028 = vmatprep.subr.mxu0 0.0
      %4029 = vmatpush1.msra.mxu0 0.0
      %4030 = vmatprep.subr.mxu0 0.0
      %4031 = vmatpush1.msra.mxu0 0.0
      %4032 = vmatprep.subr.mxu0 0.0
      %4033 = vmatpush1.msra.mxu0 0.0
      %4034 = vmatprep.subr.mxu0 0.0
      %4035 = vmatpush1.msra.mxu0 0.0
      %4036 = vmatprep.subr.mxu0 0.0
      %4037 = vmatpush1.msra.mxu0 0.0
      %4038 = vmatprep.subr.mxu0 0.0
      %4039 = vmatpush1.msra.mxu0 0.0
      %4040 = vmatprep.subr.mxu0 0.0
      %4041 = vmatpush1.msra.mxu0 0.0
      %4042 = vmatprep.subr.mxu0 0.0
      %4043 = vmatpush1.msra.mxu0 0.0
      %4044 = vmatprep.subr.mxu0 0.0
      %4045 = vmatpush1.msra.mxu0 0.0
      %4046 = vmatprep.subr.mxu0 0.0
      %4047 = vmatpush1.msra.mxu0 0.0
      %4048 = vmatprep.subr.mxu0 0.0
      %4049 = vmatpush1.msra.mxu0 0.0
      %4050 = vmatprep.subr.mxu0 0.0
      %4051 = vmatpush1.msra.mxu0 0.0
      %4052 = vmatprep.subr.mxu0 0.0
      %4053 = vmatpush1.msra.mxu0 0.0
      %4054 = vmatprep.subr.mxu0 0.0
      %4055 = vmatpush1.msra.mxu0 0.0
      %4056 = vmatprep.subr.mxu0 0.0
      %4057 = vmatpush1.msra.mxu0 0.0
      %4058 = vmatprep.subr.mxu0 0.0
      %4059 = vmatpush1.msra.mxu0 0.0
      %4060 = vmatprep.subr.mxu0 0.0
      %4061 = vmatpush1.msra.mxu0 0.0
      %4062 = vmatprep.subr.mxu0 0.0
      %4063 = vmatpush1.msra.mxu0 0.0
      %4064 = vmatprep.subr.mxu0 0.0
      %4065 = vmatpush1.msra.mxu0 0.0
      %4066 = vmatprep.subr.mxu0 0.0
      %4067 = vmatpush1.msra.mxu0 0.0
      %4068 = vmatprep.subr.mxu0 0.0
      %4069 = vmatpush1.msra.mxu0 0.0
      %4070 = vmatprep.subr.mxu0 0.0
      %4071 = vmatpush1.msra.mxu0 0.0
      %4072 = vmatprep.subr.mxu0 0.0
      %4073 = vmatpush1.msra.mxu0 0.0
      %4074 = vmatprep.subr.mxu0 0.0
      %4075 = vmatpush1.msra.mxu0 0.0
      %4076 = vmatprep.subr.mxu0 0.0
      %4077 = vmatpush1.msra.mxu0 0.0
      %4078 = vmatprep.subr.mxu0 0.0
      %4079 = vmatpush1.msra.mxu0 0.0
      %4080 = vmatprep.mubr.f32.mxu0 0.0
      %4081 = vmatmul.mubr.f32.gmra.mrb[0].mxu0 %v4008
      %v4082 = vpop.f32.mrb[0].mxu0
      %v4083 = vadd.f32 0.0, %v4082
      %v4084 = vpop.f32.mrb[0].mxu0
      %v4085 = vadd.f32 0.0, %v4084
      %4086 = vdwg.mxu0
      %4087 = vmatprep.subr.mxu0 0.0
      %4088 = vmatpush1.msra.mxu0 %v4014
      %4089 = vmatprep.subr.mxu0 0.0
      %4090 = vmatpush1.msra.mxu0 0.0
      %4091 = vmatprep.subr.mxu0 0.0
      %4092 = vmatpush1.msra.mxu0 0.0
      %4093 = vmatprep.subr.mxu0 0.0
      %4094 = vmatpush1.msra.mxu0 0.0
      %4095 = vmatprep.subr.mxu0 0.0
      %4096 = vmatpush1.msra.mxu0 0.0
      %4097 = vmatprep.subr.mxu0 0.0
      %4098 = vmatpush1.msra.mxu0 0.0
      %4099 = vmatprep.subr.mxu0 0.0
      %4100 = vmatpush1.msra.mxu0 0.0
      %4101 = vmatprep.subr.mxu0 0.0
      %4102 = vmatpush1.msra.mxu0 0.0
      %4103 = vmatprep.subr.mxu0 0.0
      %4104 = vmatpush1.msra.mxu0 0.0
      %4105 = vmatprep.subr.mxu0 0.0
      %4106 = vmatpush1.msra.mxu0 0.0
      %4107 = vmatprep.subr.mxu0 0.0
      %4108 = vmatpush1.msra.mxu0 0.0
      %4109 = vmatprep.subr.mxu0 0.0
      %4110 = vmatpush1.msra.mxu0 0.0
      %4111 = vmatprep.subr.mxu0 0.0
      %4112 = vmatpush1.msra.mxu0 0.0
      %4113 = vmatprep.subr.mxu0 0.0
      %4114 = vmatpush1.msra.mxu0 0.0
      %4115 = vmatprep.subr.mxu0 0.0
      %4116 = vmatpush1.msra.mxu0 0.0
      %4117 = vmatprep.subr.mxu0 0.0
      %4118 = vmatpush1.msra.mxu0 0.0
      %4119 = vmatprep.subr.mxu0 0.0
      %4120 = vmatpush1.msra.mxu0 0.0
      %4121 = vmatprep.subr.mxu0 0.0
      %4122 = vmatpush1.msra.mxu0 0.0
      %4123 = vmatprep.subr.mxu0 0.0
      %4124 = vmatpush1.msra.mxu0 0.0
      %4125 = vmatprep.subr.mxu0 0.0
      %4126 = vmatpush1.msra.mxu0 0.0
      %4127 = vmatprep.subr.mxu0 0.0
      %4128 = vmatpush1.msra.mxu0 0.0
      %4129 = vmatprep.subr.mxu0 0.0
      %4130 = vmatpush1.msra.mxu0 0.0
      %4131 = vmatprep.subr.mxu0 0.0
      %4132 = vmatpush1.msra.mxu0 0.0
      %4133 = vmatprep.subr.mxu0 0.0
      %4134 = vmatpush1.msra.mxu0 0.0
      %4135 = vmatprep.subr.mxu0 0.0
      %4136 = vmatpush1.msra.mxu0 0.0
      %4137 = vmatprep.subr.mxu0 0.0
      %4138 = vmatpush1.msra.mxu0 0.0
      %4139 = vmatprep.subr.mxu0 0.0
      %4140 = vmatpush1.msra.mxu0 0.0
      %4141 = vmatprep.subr.mxu0 0.0
      %4142 = vmatpush1.msra.mxu0 0.0
      %4143 = vmatprep.subr.mxu0 0.0
      %4144 = vmatpush1.msra.mxu0 0.0
      %4145 = vmatprep.subr.mxu0 0.0
      %4146 = vmatpush1.msra.mxu0 0.0
      %4147 = vmatprep.subr.mxu0 0.0
      %4148 = vmatpush1.msra.mxu0 0.0
      %4149 = vmatprep.subr.mxu0 0.0
      %4150 = vmatpush1.msra.mxu0 0.0
      %4151 = vmatprep.mubr.f32.mxu0 0.0
      %4152 = vmatmul.mubr.f32.gmra.mrb[0].mxu0 %v4008
      %v4153 = vpop.f32.mrb[0].mxu0
      %v4154 = vadd.f32 0.0, %v4153
      %v4155 = vpop.f32.mrb[0].mxu0
      %4156 = vdwg.mxu0
      %v4157 = vadd.f32 %v3918, %v4083
      %v4158 = vadd.f32 %v3920, %v4085
      %v4159 = vadd.f32 %v3989, %v4154
      %v4160 = vld [vmem:[#allocation2] sm:$0x33]
      %v4161 = vld [vmem:[#allocation2 + $0x8] sm:$0x3]
      %s4162 = scalar_lea.vmem %s8, 6
      %v4163 = vld [vmem:[%s4162] sm:$0x3]
      %v4166 = vcombine.high %v4160, %v4160
      %4167 = vrot.lane.b32.xlu0 %v4160, 110
      %v4168 = vpop.permute.xlu0 %4167
      %4169 = vrot.lane.b32.xlu0 %v4166, 110
      %v4170 = vpop.permute.xlu0 %4169
      %4171 = vrot.lane.b32.xlu0 %v4161, 110
      %v4172 = vpop.permute.xlu0 %4171
      %v4173 = vsel %vm1072, %v4168, %v4170
      %v4174 = vsel %vm1072, %v4170, %v4172
      %v4176 = vsel %vm3690, %v4163, 0
      %v4178 = vsel %vm3694, %v4173, 0
      %v4180 = vsel %vm3694, %v4174, 0
      %v4182 = vsel %vm3694, %v4172, 0
      %4184 = vmatprep.subr.mxu0 %v4180
      %4185 = vmatpush1.msra.mxu0 %v4178
      %4186 = vmatprep.subr.mxu0 0.0
      %4187 = vmatpush1.msra.mxu0 0.0
      %4188 = vmatprep.subr.mxu0 0.0
      %4189 = vmatpush1.msra.mxu0 0.0
      %4190 = vmatprep.subr.mxu0 0.0
      %4191 = vmatpush1.msra.mxu0 0.0
      %4192 = vmatprep.subr.mxu0 0.0
      %4193 = vmatpush1.msra.mxu0 0.0
      %4194 = vmatprep.subr.mxu0 0.0
      %4195 = vmatpush1.msra.mxu0 0.0
      %4196 = vmatprep.subr.mxu0 0.0
      %4197 = vmatpush1.msra.mxu0 0.0
      %4198 = vmatprep.subr.mxu0 0.0
      %4199 = vmatpush1.msra.mxu0 0.0
      %4200 = vmatprep.subr.mxu0 0.0
      %4201 = vmatpush1.msra.mxu0 0.0
      %4202 = vmatprep.subr.mxu0 0.0
      %4203 = vmatpush1.msra.mxu0 0.0
      %4204 = vmatprep.subr.mxu0 0.0
      %4205 = vmatpush1.msra.mxu0 0.0
      %4206 = vmatprep.subr.mxu0 0.0
      %4207 = vmatpush1.msra.mxu0 0.0
      %4208 = vmatprep.subr.mxu0 0.0
      %4209 = vmatpush1.msra.mxu0 0.0
      %4210 = vmatprep.subr.mxu0 0.0
      %4211 = vmatpush1.msra.mxu0 0.0
      %4212 = vmatprep.subr.mxu0 0.0
      %4213 = vmatpush1.msra.mxu0 0.0
      %4214 = vmatprep.subr.mxu0 0.0
      %4215 = vmatpush1.msra.mxu0 0.0
      %4216 = vmatprep.subr.mxu0 0.0
      %4217 = vmatpush1.msra.mxu0 0.0
      %4218 = vmatprep.subr.mxu0 0.0
      %4219 = vmatpush1.msra.mxu0 0.0
      %4220 = vmatprep.subr.mxu0 0.0
      %4221 = vmatpush1.msra.mxu0 0.0
      %4222 = vmatprep.subr.mxu0 0.0
      %4223 = vmatpush1.msra.mxu0 0.0
      %4224 = vmatprep.subr.mxu0 0.0
      %4225 = vmatpush1.msra.mxu0 0.0
      %4226 = vmatprep.subr.mxu0 0.0
      %4227 = vmatpush1.msra.mxu0 0.0
      %4228 = vmatprep.subr.mxu0 0.0
      %4229 = vmatpush1.msra.mxu0 0.0
      %4230 = vmatprep.subr.mxu0 0.0
      %4231 = vmatpush1.msra.mxu0 0.0
      %4232 = vmatprep.subr.mxu0 0.0
      %4233 = vmatpush1.msra.mxu0 0.0
      %4234 = vmatprep.subr.mxu0 0.0
      %4235 = vmatpush1.msra.mxu0 0.0
      %4236 = vmatprep.subr.mxu0 0.0
      %4237 = vmatpush1.msra.mxu0 0.0
      %4238 = vmatprep.subr.mxu0 0.0
      %4239 = vmatpush1.msra.mxu0 0.0
      %4240 = vmatprep.subr.mxu0 0.0
      %4241 = vmatpush1.msra.mxu0 0.0
      %4242 = vmatprep.subr.mxu0 0.0
      %4243 = vmatpush1.msra.mxu0 0.0
      %4244 = vmatprep.subr.mxu0 0.0
      %4245 = vmatpush1.msra.mxu0 0.0
      %4246 = vmatprep.subr.mxu0 0.0
      %4247 = vmatpush1.msra.mxu0 0.0
      %4248 = vmatprep.mubr.f32.mxu0 0.0
      %4249 = vmatmul.mubr.f32.gmra.mrb[0].mxu0 %v4176
      %v4250 = vpop.f32.mrb[0].mxu0
      %v4251 = vadd.f32 0.0, %v4250
      %v4252 = vpop.f32.mrb[0].mxu0
      %v4253 = vadd.f32 0.0, %v4252
      %4254 = vdwg.mxu0
      %4255 = vmatprep.subr.mxu0 0.0
      %4256 = vmatpush1.msra.mxu0 %v4182
      %4257 = vmatprep.subr.mxu0 0.0
      %4258 = vmatpush1.msra.mxu0 0.0
      %4259 = vmatprep.subr.mxu0 0.0
      %4260 = vmatpush1.msra.mxu0 0.0
      %4261 = vmatprep.subr.mxu0 0.0
      %4262 = vmatpush1.msra.mxu0 0.0
      %4263 = vmatprep.subr.mxu0 0.0
      %4264 = vmatpush1.msra.mxu0 0.0
      %4265 = vmatprep.subr.mxu0 0.0
      %4266 = vmatpush1.msra.mxu0 0.0
      %4267 = vmatprep.subr.mxu0 0.0
      %4268 = vmatpush1.msra.mxu0 0.0
      %4269 = vmatprep.subr.mxu0 0.0
      %4270 = vmatpush1.msra.mxu0 0.0
      %4271 = vmatprep.subr.mxu0 0.0
      %4272 = vmatpush1.msra.mxu0 0.0
      %4273 = vmatprep.subr.mxu0 0.0
      %4274 = vmatpush1.msra.mxu0 0.0
      %4275 = vmatprep.subr.mxu0 0.0
      %4276 = vmatpush1.msra.mxu0 0.0
      %4277 = vmatprep.subr.mxu0 0.0
      %4278 = vmatpush1.msra.mxu0 0.0
      %4279 = vmatprep.subr.mxu0 0.0
      %4280 = vmatpush1.msra.mxu0 0.0
      %4281 = vmatprep.subr.mxu0 0.0
      %4282 = vmatpush1.msra.mxu0 0.0
      %4283 = vmatprep.subr.mxu0 0.0
      %4284 = vmatpush1.msra.mxu0 0.0
      %4285 = vmatprep.subr.mxu0 0.0
      %4286 = vmatpush1.msra.mxu0 0.0
      %4287 = vmatprep.subr.mxu0 0.0
      %4288 = vmatpush1.msra.mxu0 0.0
      %4289 = vmatprep.subr.mxu0 0.0
      %4290 = vmatpush1.msra.mxu0 0.0
      %4291 = vmatprep.subr.mxu0 0.0
      %4292 = vmatpush1.msra.mxu0 0.0
      %4293 = vmatprep.subr.mxu0 0.0
      %4294 = vmatpush1.msra.mxu0 0.0
      %4295 = vmatprep.subr.mxu0 0.0
      %4296 = vmatpush1.msra.mxu0 0.0
      %4297 = vmatprep.subr.mxu0 0.0
      %4298 = vmatpush1.msra.mxu0 0.0
      %4299 = vmatprep.subr.mxu0 0.0
      %4300 = vmatpush1.msra.mxu0 0.0
      %4301 = vmatprep.subr.mxu0 0.0
      %4302 = vmatpush1.msra.mxu0 0.0
      %4303 = vmatprep.subr.mxu0 0.0
      %4304 = vmatpush1.msra.mxu0 0.0
      %4305 = vmatprep.subr.mxu0 0.0
      %4306 = vmatpush1.msra.mxu0 0.0
      %4307 = vmatprep.subr.mxu0 0.0
      %4308 = vmatpush1.msra.mxu0 0.0
      %4309 = vmatprep.subr.mxu0 0.0
      %4310 = vmatpush1.msra.mxu0 0.0
      %4311 = vmatprep.subr.mxu0 0.0
      %4312 = vmatpush1.msra.mxu0 0.0
      %4313 = vmatprep.subr.mxu0 0.0
      %4314 = vmatpush1.msra.mxu0 0.0
      %4315 = vmatprep.subr.mxu0 0.0
      %4316 = vmatpush1.msra.mxu0 0.0
      %4317 = vmatprep.subr.mxu0 0.0
      %4318 = vmatpush1.msra.mxu0 0.0
      %4319 = vmatprep.mubr.f32.mxu0 0.0
      %4320 = vmatmul.mubr.f32.gmra.mrb[0].mxu0 %v4176
      %v4321 = vpop.f32.mrb[0].mxu0
      %v4322 = vadd.f32 0.0, %v4321
      %v4323 = vpop.f32.mrb[0].mxu0
      %4324 = vdwg.mxu0
      %v4325 = vadd.f32 %v4157, %v4251
      %v4326 = vadd.f32 %v4158, %v4253
      %v4327 = vadd.f32 %v4159, %v4322
      %v4328 = vld [vmem:[#allocation2] sm:$0x33]
      %v4329 = vld [vmem:[#allocation2 + $0x8] sm:$0x3]
      %s4330 = scalar_lea.vmem %s8, 8
      %v4331 = vld [vmem:[%s4330] sm:$0x3]
      %v4334 = vcombine.high %v4328, %v4328
      %4335 = vrot.lane.b32.xlu0 %v4328, 109
      %v4336 = vpop.permute.xlu0 %4335
      %4337 = vrot.lane.b32.xlu0 %v4334, 109
      %v4338 = vpop.permute.xlu0 %4337
      %4339 = vrot.lane.b32.xlu0 %v4329, 109
      %v4340 = vpop.permute.xlu0 %4339
      %v4341 = vsel %vm1241, %v4336, %v4338
      %v4342 = vsel %vm1241, %v4338, %v4340
      %v4344 = vsel %vm3690, %v4331, 0
      %v4346 = vsel %vm3694, %v4341, 0
      %v4348 = vsel %vm3694, %v4342, 0
      %v4350 = vsel %vm3694, %v4340, 0
      %4352 = vmatprep.subr.mxu0 %v4348
      %4353 = vmatpush1.msra.mxu0 %v4346
      %4354 = vmatprep.subr.mxu0 0.0
      %4355 = vmatpush1.msra.mxu0 0.0
      %4356 = vmatprep.subr.mxu0 0.0
      %4357 = vmatpush1.msra.mxu0 0.0
      %4358 = vmatprep.subr.mxu0 0.0
      %4359 = vmatpush1.msra.mxu0 0.0
      %4360 = vmatprep.subr.mxu0 0.0
      %4361 = vmatpush1.msra.mxu0 0.0
      %4362 = vmatprep.subr.mxu0 0.0
      %4363 = vmatpush1.msra.mxu0 0.0
      %4364 = vmatprep.subr.mxu0 0.0
      %4365 = vmatpush1.msra.mxu0 0.0
      %4366 = vmatprep.subr.mxu0 0.0
      %4367 = vmatpush1.msra.mxu0 0.0
      %4368 = vmatprep.subr.mxu0 0.0
      %4369 = vmatpush1.msra.mxu0 0.0
      %4370 = vmatprep.subr.mxu0 0.0
      %4371 = vmatpush1.msra.mxu0 0.0
      %4372 = vmatprep.subr.mxu0 0.0
      %4373 = vmatpush1.msra.mxu0 0.0
      %4374 = vmatprep.subr.mxu0 0.0
      %4375 = vmatpush1.msra.mxu0 0.0
      %4376 = vmatprep.subr.mxu0 0.0
      %4377 = vmatpush1.msra.mxu0 0.0
      %4378 = vmatprep.subr.mxu0 0.0
      %4379 = vmatpush1.msra.mxu0 0.0
      %4380 = vmatprep.subr.mxu0 0.0
      %4381 = vmatpush1.msra.mxu0 0.0
      %4382 = vmatprep.subr.mxu0 0.0
      %4383 = vmatpush1.msra.mxu0 0.0
      %4384 = vmatprep.subr.mxu0 0.0
      %4385 = vmatpush1.msra.mxu0 0.0
      %4386 = vmatprep.subr.mxu0 0.0
      %4387 = vmatpush1.msra.mxu0 0.0
      %4388 = vmatprep.subr.mxu0 0.0
      %4389 = vmatpush1.msra.mxu0 0.0
      %4390 = vmatprep.subr.mxu0 0.0
      %4391 = vmatpush1.msra.mxu0 0.0
      %4392 = vmatprep.subr.mxu0 0.0
      %4393 = vmatpush1.msra.mxu0 0.0
      %4394 = vmatprep.subr.mxu0 0.0
      %4395 = vmatpush1.msra.mxu0 0.0
      %4396 = vmatprep.subr.mxu0 0.0
      %4397 = vmatpush1.msra.mxu0 0.0
      %4398 = vmatprep.subr.mxu0 0.0
      %4399 = vmatpush1.msra.mxu0 0.0
      %4400 = vmatprep.subr.mxu0 0.0
      %4401 = vmatpush1.msra.mxu0 0.0
      %4402 = vmatprep.subr.mxu0 0.0
      %4403 = vmatpush1.msra.mxu0 0.0
      %4404 = vmatprep.subr.mxu0 0.0
      %4405 = vmatpush1.msra.mxu0 0.0
      %4406 = vmatprep.subr.mxu0 0.0
      %4407 = vmatpush1.msra.mxu0 0.0
      %4408 = vmatprep.subr.mxu0 0.0
      %4409 = vmatpush1.msra.mxu0 0.0
      %4410 = vmatprep.subr.mxu0 0.0
      %4411 = vmatpush1.msra.mxu0 0.0
      %4412 = vmatprep.subr.mxu0 0.0
      %4413 = vmatpush1.msra.mxu0 0.0
      %4414 = vmatprep.subr.mxu0 0.0
      %4415 = vmatpush1.msra.mxu0 0.0
      %4416 = vmatprep.mubr.f32.mxu0 0.0
      %4417 = vmatmul.mubr.f32.gmra.mrb[0].mxu0 %v4344
      %v4418 = vpop.f32.mrb[0].mxu0
      %v4419 = vadd.f32 0.0, %v4418
      %v4420 = vpop.f32.mrb[0].mxu0
      %v4421 = vadd.f32 0.0, %v4420
      %4422 = vdwg.mxu0
      %4423 = vmatprep.subr.mxu0 0.0
      %4424 = vmatpush1.msra.mxu0 %v4350
      %4425 = vmatprep.subr.mxu0 0.0
      %4426 = vmatpush1.msra.mxu0 0.0
      %4427 = vmatprep.subr.mxu0 0.0
      %4428 = vmatpush1.msra.mxu0 0.0
      %4429 = vmatprep.subr.mxu0 0.0
      %4430 = vmatpush1.msra.mxu0 0.0
      %4431 = vmatprep.subr.mxu0 0.0
      %4432 = vmatpush1.msra.mxu0 0.0
      %4433 = vmatprep.subr.mxu0 0.0
      %4434 = vmatpush1.msra.mxu0 0.0
      %4435 = vmatprep.subr.mxu0 0.0
      %4436 = vmatpush1.msra.mxu0 0.0
      %4437 = vmatprep.subr.mxu0 0.0
      %4438 = vmatpush1.msra.mxu0 0.0
      %4439 = vmatprep.subr.mxu0 0.0
      %4440 = vmatpush1.msra.mxu0 0.0
      %4441 = vmatprep.subr.mxu0 0.0
      %4442 = vmatpush1.msra.mxu0 0.0
      %4443 = vmatprep.subr.mxu0 0.0
      %4444 = vmatpush1.msra.mxu0 0.0
      %4445 = vmatprep.subr.mxu0 0.0
      %4446 = vmatpush1.msra.mxu0 0.0
      %4447 = vmatprep.subr.mxu0 0.0
      %4448 = vmatpush1.msra.mxu0 0.0
      %4449 = vmatprep.subr.mxu0 0.0
      %4450 = vmatpush1.msra.mxu0 0.0
      %4451 = vmatprep.subr.mxu0 0.0
      %4452 = vmatpush1.msra.mxu0 0.0
      %4453 = vmatprep.subr.mxu0 0.0
      %4454 = vmatpush1.msra.mxu0 0.0
      %4455 = vmatprep.subr.mxu0 0.0
      %4456 = vmatpush1.msra.mxu0 0.0
      %4457 = vmatprep.subr.mxu0 0.0
      %4458 = vmatpush1.msra.mxu0 0.0
      %4459 = vmatprep.subr.mxu0 0.0
      %4460 = vmatpush1.msra.mxu0 0.0
      %4461 = vmatprep.subr.mxu0 0.0
      %4462 = vmatpush1.msra.mxu0 0.0
      %4463 = vmatprep.subr.mxu0 0.0
      %4464 = vmatpush1.msra.mxu0 0.0
      %4465 = vmatprep.subr.mxu0 0.0
      %4466 = vmatpush1.msra.mxu0 0.0
      %4467 = vmatprep.subr.mxu0 0.0
      %4468 = vmatpush1.msra.mxu0 0.0
      %4469 = vmatprep.subr.mxu0 0.0
      %4470 = vmatpush1.msra.mxu0 0.0
      %4471 = vmatprep.subr.mxu0 0.0
      %4472 = vmatpush1.msra.mxu0 0.0
      %4473 = vmatprep.subr.mxu0 0.0
      %4474 = vmatpush1.msra.mxu0 0.0
      %4475 = vmatprep.subr.mxu0 0.0
      %4476 = vmatpush1.msra.mxu0 0.0
      %4477 = vmatprep.subr.mxu0 0.0
      %4478 = vmatpush1.msra.mxu0 0.0
      %4479 = vmatprep.subr.mxu0 0.0
      %4480 = vmatpush1.msra.mxu0 0.0
      %4481 = vmatprep.subr.mxu0 0.0
      %4482 = vmatpush1.msra.mxu0 0.0
      %4483 = vmatprep.subr.mxu0 0.0
      %4484 = vmatpush1.msra.mxu0 0.0
      %4485 = vmatprep.subr.mxu0 0.0
      %4486 = vmatpush1.msra.mxu0 0.0
      %4487 = vmatprep.mubr.f32.mxu0 0.0
      %4488 = vmatmul.mubr.f32.gmra.mrb[0].mxu0 %v4344
      %v4489 = vpop.f32.mrb[0].mxu0
      %v4490 = vadd.f32 0.0, %v4489
      %v4491 = vpop.f32.mrb[0].mxu0
      %4492 = vdwg.mxu0
      %v4493 = vadd.f32 %v4325, %v4419
      %v4494 = vadd.f32 %v4326, %v4421
      %v4495 = vadd.f32 %v4327, %v4490
      %v4496 = vld [vmem:[#allocation2] sm:$0x33]
      %v4497 = vld [vmem:[#allocation2 + $0x8] sm:$0x3]
      %s4498 = scalar_lea.vmem %s8, 10
      %v4499 = vld [vmem:[%s4498] sm:$0x3]
      %v4502 = vcombine.high %v4496, %v4496
      %4503 = vrot.lane.b32.xlu0 %v4496, 108
      %v4504 = vpop.permute.xlu0 %4503
      %4505 = vrot.lane.b32.xlu0 %v4502, 108
      %v4506 = vpop.permute.xlu0 %4505
      %4507 = vrot.lane.b32.xlu0 %v4497, 108
      %v4508 = vpop.permute.xlu0 %4507
      %v4509 = vsel %vm1410, %v4504, %v4506
      %v4510 = vsel %vm1410, %v4506, %v4508
      %v4512 = vsel %vm3690, %v4499, 0
      %v4514 = vsel %vm3694, %v4509, 0
      %v4516 = vsel %vm3694, %v4510, 0
      %v4518 = vsel %vm3694, %v4508, 0
      %4520 = vmatprep.subr.mxu0 %v4516
      %4521 = vmatpush1.msra.mxu0 %v4514
      %4522 = vmatprep.subr.mxu0 0.0
      %4523 = vmatpush1.msra.mxu0 0.0
      %4524 = vmatprep.subr.mxu0 0.0
      %4525 = vmatpush1.msra.mxu0 0.0
      %4526 = vmatprep.subr.mxu0 0.0
      %4527 = vmatpush1.msra.mxu0 0.0
      %4528 = vmatprep.subr.mxu0 0.0
      %4529 = vmatpush1.msra.mxu0 0.0
      %4530 = vmatprep.subr.mxu0 0.0
      %4531 = vmatpush1.msra.mxu0 0.0
      %4532 = vmatprep.subr.mxu0 0.0
      %4533 = vmatpush1.msra.mxu0 0.0
      %4534 = vmatprep.subr.mxu0 0.0
      %4535 = vmatpush1.msra.mxu0 0.0
      %4536 = vmatprep.subr.mxu0 0.0
      %4537 = vmatpush1.msra.mxu0 0.0
      %4538 = vmatprep.subr.mxu0 0.0
      %4539 = vmatpush1.msra.mxu0 0.0
      %4540 = vmatprep.subr.mxu0 0.0
      %4541 = vmatpush1.msra.mxu0 0.0
      %4542 = vmatprep.subr.mxu0 0.0
      %4543 = vmatpush1.msra.mxu0 0.0
      %4544 = vmatprep.subr.mxu0 0.0
      %4545 = vmatpush1.msra.mxu0 0.0
      %4546 = vmatprep.subr.mxu0 0.0
      %4547 = vmatpush1.msra.mxu0 0.0
      %4548 = vmatprep.subr.mxu0 0.0
      %4549 = vmatpush1.msra.mxu0 0.0
      %4550 = vmatprep.subr.mxu0 0.0
      %4551 = vmatpush1.msra.mxu0 0.0
      %4552 = vmatprep.subr.mxu0 0.0
      %4553 = vmatpush1.msra.mxu0 0.0
      %4554 = vmatprep.subr.mxu0 0.0
      %4555 = vmatpush1.msra.mxu0 0.0
      %4556 = vmatprep.subr.mxu0 0.0
      %4557 = vmatpush1.msra.mxu0 0.0
      %4558 = vmatprep.subr.mxu0 0.0
      %4559 = vmatpush1.msra.mxu0 0.0
      %4560 = vmatprep.subr.mxu0 0.0
      %4561 = vmatpush1.msra.mxu0 0.0
      %4562 = vmatprep.subr.mxu0 0.0
      %4563 = vmatpush1.msra.mxu0 0.0
      %4564 = vmatprep.subr.mxu0 0.0
      %4565 = vmatpush1.msra.mxu0 0.0
      %4566 = vmatprep.subr.mxu0 0.0
      %4567 = vmatpush1.msra.mxu0 0.0
      %4568 = vmatprep.subr.mxu0 0.0
      %4569 = vmatpush1.msra.mxu0 0.0
      %4570 = vmatprep.subr.mxu0 0.0
      %4571 = vmatpush1.msra.mxu0 0.0
      %4572 = vmatprep.subr.mxu0 0.0
      %4573 = vmatpush1.msra.mxu0 0.0
      %4574 = vmatprep.subr.mxu0 0.0
      %4575 = vmatpush1.msra.mxu0 0.0
      %4576 = vmatprep.subr.mxu0 0.0
      %4577 = vmatpush1.msra.mxu0 0.0
      %4578 = vmatprep.subr.mxu0 0.0
      %4579 = vmatpush1.msra.mxu0 0.0
      %4580 = vmatprep.subr.mxu0 0.0
      %4581 = vmatpush1.msra.mxu0 0.0
      %4582 = vmatprep.subr.mxu0 0.0
      %4583 = vmatpush1.msra.mxu0 0.0
      %4584 = vmatprep.mubr.f32.mxu0 0.0
      %4585 = vmatmul.mubr.f32.gmra.mrb[0].mxu0 %v4512
      %v4586 = vpop.f32.mrb[0].mxu0
      %v4587 = vadd.f32 0.0, %v4586
      %v4588 = vpop.f32.mrb[0].mxu0
      %v4589 = vadd.f32 0.0, %v4588
      %4590 = vdwg.mxu0
      %4591 = vmatprep.subr.mxu0 0.0
      %4592 = vmatpush1.msra.mxu0 %v4518
      %4593 = vmatprep.subr.mxu0 0.0
      %4594 = vmatpush1.msra.mxu0 0.0
      %4595 = vmatprep.subr.mxu0 0.0
      %4596 = vmatpush1.msra.mxu0 0.0
      %4597 = vmatprep.subr.mxu0 0.0
      %4598 = vmatpush1.msra.mxu0 0.0
      %4599 = vmatprep.subr.mxu0 0.0
      %4600 = vmatpush1.msra.mxu0 0.0
      %4601 = vmatprep.subr.mxu0 0.0
      %4602 = vmatpush1.msra.mxu0 0.0
      %4603 = vmatprep.subr.mxu0 0.0
      %4604 = vmatpush1.msra.mxu0 0.0
      %4605 = vmatprep.subr.mxu0 0.0
      %4606 = vmatpush1.msra.mxu0 0.0
      %4607 = vmatprep.subr.mxu0 0.0
      %4608 = vmatpush1.msra.mxu0 0.0
      %4609 = vmatprep.subr.mxu0 0.0
      %4610 = vmatpush1.msra.mxu0 0.0
      %4611 = vmatprep.subr.mxu0 0.0
      %4612 = vmatpush1.msra.mxu0 0.0
      %4613 = vmatprep.subr.mxu0 0.0
      %4614 = vmatpush1.msra.mxu0 0.0
      %4615 = vmatprep.subr.mxu0 0.0
      %4616 = vmatpush1.msra.mxu0 0.0
      %4617 = vmatprep.subr.mxu0 0.0
      %4618 = vmatpush1.msra.mxu0 0.0
      %4619 = vmatprep.subr.mxu0 0.0
      %4620 = vmatpush1.msra.mxu0 0.0
      %4621 = vmatprep.subr.mxu0 0.0
      %4622 = vmatpush1.msra.mxu0 0.0
      %4623 = vmatprep.subr.mxu0 0.0
      %4624 = vmatpush1.msra.mxu0 0.0
      %4625 = vmatprep.subr.mxu0 0.0
      %4626 = vmatpush1.msra.mxu0 0.0
      %4627 = vmatprep.subr.mxu0 0.0
      %4628 = vmatpush1.msra.mxu0 0.0
      %4629 = vmatprep.subr.mxu0 0.0
      %4630 = vmatpush1.msra.mxu0 0.0
      %4631 = vmatprep.subr.mxu0 0.0
      %4632 = vmatpush1.msra.mxu0 0.0
      %4633 = vmatprep.subr.mxu0 0.0
      %4634 = vmatpush1.msra.mxu0 0.0
      %4635 = vmatprep.subr.mxu0 0.0
      %4636 = vmatpush1.msra.mxu0 0.0
      %4637 = vmatprep.subr.mxu0 0.0
      %4638 = vmatpush1.msra.mxu0 0.0
      %4639 = vmatprep.subr.mxu0 0.0
      %4640 = vmatpush1.msra.mxu0 0.0
      %4641 = vmatprep.subr.mxu0 0.0
      %4642 = vmatpush1.msra.mxu0 0.0
      %4643 = vmatprep.subr.mxu0 0.0
      %4644 = vmatpush1.msra.mxu0 0.0
      %4645 = vmatprep.subr.mxu0 0.0
      %4646 = vmatpush1.msra.mxu0 0.0
      %4647 = vmatprep.subr.mxu0 0.0
      %4648 = vmatpush1.msra.mxu0 0.0
      %4649 = vmatprep.subr.mxu0 0.0
      %4650 = vmatpush1.msra.mxu0 0.0
      %4651 = vmatprep.subr.mxu0 0.0
      %4652 = vmatpush1.msra.mxu0 0.0
      %4653 = vmatprep.subr.mxu0 0.0
      %4654 = vmatpush1.msra.mxu0 0.0
      %4655 = vmatprep.mubr.f32.mxu0 0.0
      %4656 = vmatmul.mubr.f32.gmra.mrb[0].mxu0 %v4512
      %v4657 = vpop.f32.mrb[0].mxu0
      %v4658 = vadd.f32 0.0, %v4657
      %v4659 = vpop.f32.mrb[0].mxu0
      %4660 = vdwg.mxu0
      %v4661 = vadd.f32 %v4493, %v4587
      %v4662 = vadd.f32 %v4494, %v4589
      %v4663 = vadd.f32 %v4495, %v4658
      %v4664 = vld [vmem:[#allocation2] sm:$0x33]
      %v4665 = vld [vmem:[#allocation2 + $0x8] sm:$0x3]
      %s4666 = scalar_lea.vmem %s8, 12
      %v4667 = vld [vmem:[%s4666] sm:$0x3]
      %v4670 = vcombine.high %v4664, %v4664
      %4671 = vrot.lane.b32.xlu0 %v4664, 92
      %v4672 = vpop.permute.xlu0 %4671
      %4673 = vrot.lane.b32.xlu0 %v4670, 92
      %v4674 = vpop.permute.xlu0 %4673
      %4675 = vrot.lane.b32.xlu0 %v4665, 92
      %v4676 = vpop.permute.xlu0 %4675
      %v4677 = vsel %vm1579, %v4672, %v4674
      %v4678 = vsel %vm1579, %v4674, %v4676
      %v4680 = vsel %vm3690, %v4667, 0
      %v4682 = vsel %vm3694, %v4677, 0
      %v4684 = vsel %vm3694, %v4678, 0
      %v4686 = vsel %vm3694, %v4676, 0
      %4688 = vmatprep.subr.mxu0 %v4684
      %4689 = vmatpush1.msra.mxu0 %v4682
      %4690 = vmatprep.subr.mxu0 0.0
      %4691 = vmatpush1.msra.mxu0 0.0
      %4692 = vmatprep.subr.mxu0 0.0
      %4693 = vmatpush1.msra.mxu0 0.0
      %4694 = vmatprep.subr.mxu0 0.0
      %4695 = vmatpush1.msra.mxu0 0.0
      %4696 = vmatprep.subr.mxu0 0.0
      %4697 = vmatpush1.msra.mxu0 0.0
      %4698 = vmatprep.subr.mxu0 0.0
      %4699 = vmatpush1.msra.mxu0 0.0
      %4700 = vmatprep.subr.mxu0 0.0
      %4701 = vmatpush1.msra.mxu0 0.0
      %4702 = vmatprep.subr.mxu0 0.0
      %4703 = vmatpush1.msra.mxu0 0.0
      %4704 = vmatprep.subr.mxu0 0.0
      %4705 = vmatpush1.msra.mxu0 0.0
      %4706 = vmatprep.subr.mxu0 0.0
      %4707 = vmatpush1.msra.mxu0 0.0
      %4708 = vmatprep.subr.mxu0 0.0
      %4709 = vmatpush1.msra.mxu0 0.0
      %4710 = vmatprep.subr.mxu0 0.0
      %4711 = vmatpush1.msra.mxu0 0.0
      %4712 = vmatprep.subr.mxu0 0.0
      %4713 = vmatpush1.msra.mxu0 0.0
      %4714 = vmatprep.subr.mxu0 0.0
      %4715 = vmatpush1.msra.mxu0 0.0
      %4716 = vmatprep.subr.mxu0 0.0
      %4717 = vmatpush1.msra.mxu0 0.0
      %4718 = vmatprep.subr.mxu0 0.0
      %4719 = vmatpush1.msra.mxu0 0.0
      %4720 = vmatprep.subr.mxu0 0.0
      %4721 = vmatpush1.msra.mxu0 0.0
      %4722 = vmatprep.subr.mxu0 0.0
      %4723 = vmatpush1.msra.mxu0 0.0
      %4724 = vmatprep.subr.mxu0 0.0
      %4725 = vmatpush1.msra.mxu0 0.0
      %4726 = vmatprep.subr.mxu0 0.0
      %4727 = vmatpush1.msra.mxu0 0.0
      %4728 = vmatprep.subr.mxu0 0.0
      %4729 = vmatpush1.msra.mxu0 0.0
      %4730 = vmatprep.subr.mxu0 0.0
      %4731 = vmatpush1.msra.mxu0 0.0
      %4732 = vmatprep.subr.mxu0 0.0
      %4733 = vmatpush1.msra.mxu0 0.0
      %4734 = vmatprep.subr.mxu0 0.0
      %4735 = vmatpush1.msra.mxu0 0.0
      %4736 = vmatprep.subr.mxu0 0.0
      %4737 = vmatpush1.msra.mxu0 0.0
      %4738 = vmatprep.subr.mxu0 0.0
      %4739 = vmatpush1.msra.mxu0 0.0
      %4740 = vmatprep.subr.mxu0 0.0
      %4741 = vmatpush1.msra.mxu0 0.0
      %4742 = vmatprep.subr.mxu0 0.0
      %4743 = vmatpush1.msra.mxu0 0.0
      %4744 = vmatprep.subr.mxu0 0.0
      %4745 = vmatpush1.msra.mxu0 0.0
      %4746 = vmatprep.subr.mxu0 0.0
      %4747 = vmatpush1.msra.mxu0 0.0
      %4748 = vmatprep.subr.mxu0 0.0
      %4749 = vmatpush1.msra.mxu0 0.0
      %4750 = vmatprep.subr.mxu0 0.0
      %4751 = vmatpush1.msra.mxu0 0.0
      %4752 = vmatprep.mubr.f32.mxu0 0.0
      %4753 = vmatmul.mubr.f32.gmra.mrb[0].mxu0 %v4680
      %v4754 = vpop.f32.mrb[0].mxu0
      %v4755 = vadd.f32 0.0, %v4754
      %v4756 = vpop.f32.mrb[0].mxu0
      %v4757 = vadd.f32 0.0, %v4756
      %4758 = vdwg.mxu0
      %4759 = vmatprep.subr.mxu0 0.0
      %4760 = vmatpush1.msra.mxu0 %v4686
      %4761 = vmatprep.subr.mxu0 0.0
      %4762 = vmatpush1.msra.mxu0 0.0
      %4763 = vmatprep.subr.mxu0 0.0
      %4764 = vmatpush1.msra.mxu0 0.0
      %4765 = vmatprep.subr.mxu0 0.0
      %4766 = vmatpush1.msra.mxu0 0.0
      %4767 = vmatprep.subr.mxu0 0.0
      %4768 = vmatpush1.msra.mxu0 0.0
      %4769 = vmatprep.subr.mxu0 0.0
      %4770 = vmatpush1.msra.mxu0 0.0
      %4771 = vmatprep.subr.mxu0 0.0
      %4772 = vmatpush1.msra.mxu0 0.0
      %4773 = vmatprep.subr.mxu0 0.0
      %4774 = vmatpush1.msra.mxu0 0.0
      %4775 = vmatprep.subr.mxu0 0.0
      %4776 = vmatpush1.msra.mxu0 0.0
      %4777 = vmatprep.subr.mxu0 0.0
      %4778 = vmatpush1.msra.mxu0 0.0
      %4779 = vmatprep.subr.mxu0 0.0
      %4780 = vmatpush1.msra.mxu0 0.0
      %4781 = vmatprep.subr.mxu0 0.0
      %4782 = vmatpush1.msra.mxu0 0.0
      %4783 = vmatprep.subr.mxu0 0.0
      %4784 = vmatpush1.msra.mxu0 0.0
      %4785 = vmatprep.subr.mxu0 0.0
      %4786 = vmatpush1.msra.mxu0 0.0
      %4787 = vmatprep.subr.mxu0 0.0
      %4788 = vmatpush1.msra.mxu0 0.0
      %4789 = vmatprep.subr.mxu0 0.0
      %4790 = vmatpush1.msra.mxu0 0.0
      %4791 = vmatprep.subr.mxu0 0.0
      %4792 = vmatpush1.msra.mxu0 0.0
      %4793 = vmatprep.subr.mxu0 0.0
      %4794 = vmatpush1.msra.mxu0 0.0
      %4795 = vmatprep.subr.mxu0 0.0
      %4796 = vmatpush1.msra.mxu0 0.0
      %4797 = vmatprep.subr.mxu0 0.0
      %4798 = vmatpush1.msra.mxu0 0.0
      %4799 = vmatprep.subr.mxu0 0.0
      %4800 = vmatpush1.msra.mxu0 0.0
      %4801 = vmatprep.subr.mxu0 0.0
      %4802 = vmatpush1.msra.mxu0 0.0
      %4803 = vmatprep.subr.mxu0 0.0
      %4804 = vmatpush1.msra.mxu0 0.0
      %4805 = vmatprep.subr.mxu0 0.0
      %4806 = vmatpush1.msra.mxu0 0.0
      %4807 = vmatprep.subr.mxu0 0.0
      %4808 = vmatpush1.msra.mxu0 0.0
      %4809 = vmatprep.subr.mxu0 0.0
      %4810 = vmatpush1.msra.mxu0 0.0
      %4811 = vmatprep.subr.mxu0 0.0
      %4812 = vmatpush1.msra.mxu0 0.0
      %4813 = vmatprep.subr.mxu0 0.0
      %4814 = vmatpush1.msra.mxu0 0.0
      %4815 = vmatprep.subr.mxu0 0.0
      %4816 = vmatpush1.msra.mxu0 0.0
      %4817 = vmatprep.subr.mxu0 0.0
      %4818 = vmatpush1.msra.mxu0 0.0
      %4819 = vmatprep.subr.mxu0 0.0
      %4820 = vmatpush1.msra.mxu0 0.0
      %4821 = vmatprep.subr.mxu0 0.0
      %4822 = vmatpush1.msra.mxu0 0.0
      %4823 = vmatprep.mubr.f32.mxu0 0.0
      %4824 = vmatmul.mubr.f32.gmra.mrb[0].mxu0 %v4680
      %v4825 = vpop.f32.mrb[0].mxu0
      %v4826 = vadd.f32 0.0, %v4825
      %v4827 = vpop.f32.mrb[0].mxu0
      %4828 = vdwg.mxu0
      %v4829 = vadd.f32 %v4661, %v4755
      %v4830 = vadd.f32 %v4662, %v4757
      %v4831 = vadd.f32 %v4663, %v4826
      %v4832 = vld [vmem:[#allocation2] sm:$0x33]
      %v4833 = vld [vmem:[#allocation2 + $0x8] sm:$0x3]
      %s4834 = scalar_lea.vmem %s8, 14
      %v4835 = vld [vmem:[%s4834] sm:$0x3]
      %v4838 = vcombine.high %v4832, %v4832
      %4839 = vrot.lane.b32.xlu0 %v4832, 91
      %v4840 = vpop.permute.xlu0 %4839
      %4841 = vrot.lane.b32.xlu0 %v4838, 91
      %v4842 = vpop.permute.xlu0 %4841
      %4843 = vrot.lane.b32.xlu0 %v4833, 91
      %v4844 = vpop.permute.xlu0 %4843
      %v4845 = vsel %vm1748, %v4840, %v4842
      %v4846 = vsel %vm1748, %v4842, %v4844
      %v4848 = vsel %vm3690, %v4835, 0
      %v4850 = vsel %vm3694, %v4845, 0
      %v4852 = vsel %vm3694, %v4846, 0
      %v4854 = vsel %vm3694, %v4844, 0
      %4856 = vmatprep.subr.mxu0 %v4852
      %4857 = vmatpush1.msra.mxu0 %v4850
      %4858 = vmatprep.subr.mxu0 0.0
      %4859 = vmatpush1.msra.mxu0 0.0
      %4860 = vmatprep.subr.mxu0 0.0
      %4861 = vmatpush1.msra.mxu0 0.0
      %4862 = vmatprep.subr.mxu0 0.0
      %4863 = vmatpush1.msra.mxu0 0.0
      %4864 = vmatprep.subr.mxu0 0.0
      %4865 = vmatpush1.msra.mxu0 0.0
      %4866 = vmatprep.subr.mxu0 0.0
      %4867 = vmatpush1.msra.mxu0 0.0
      %4868 = vmatprep.subr.mxu0 0.0
      %4869 = vmatpush1.msra.mxu0 0.0
      %4870 = vmatprep.subr.mxu0 0.0
      %4871 = vmatpush1.msra.mxu0 0.0
      %4872 = vmatprep.subr.mxu0 0.0
      %4873 = vmatpush1.msra.mxu0 0.0
      %4874 = vmatprep.subr.mxu0 0.0
      %4875 = vmatpush1.msra.mxu0 0.0
      %4876 = vmatprep.subr.mxu0 0.0
      %4877 = vmatpush1.msra.mxu0 0.0
      %4878 = vmatprep.subr.mxu0 0.0
      %4879 = vmatpush1.msra.mxu0 0.0
      %4880 = vmatprep.subr.mxu0 0.0
      %4881 = vmatpush1.msra.mxu0 0.0
      %4882 = vmatprep.subr.mxu0 0.0
      %4883 = vmatpush1.msra.mxu0 0.0
      %4884 = vmatprep.subr.mxu0 0.0
      %4885 = vmatpush1.msra.mxu0 0.0
      %4886 = vmatprep.subr.mxu0 0.0
      %4887 = vmatpush1.msra.mxu0 0.0
      %4888 = vmatprep.subr.mxu0 0.0
      %4889 = vmatpush1.msra.mxu0 0.0
      %4890 = vmatprep.subr.mxu0 0.0
      %4891 = vmatpush1.msra.mxu0 0.0
      %4892 = vmatprep.subr.mxu0 0.0
      %4893 = vmatpush1.msra.mxu0 0.0
      %4894 = vmatprep.subr.mxu0 0.0
      %4895 = vmatpush1.msra.mxu0 0.0
      %4896 = vmatprep.subr.mxu0 0.0
      %4897 = vmatpush1.msra.mxu0 0.0
      %4898 = vmatprep.subr.mxu0 0.0
      %4899 = vmatpush1.msra.mxu0 0.0
      %4900 = vmatprep.subr.mxu0 0.0
      %4901 = vmatpush1.msra.mxu0 0.0
      %4902 = vmatprep.subr.mxu0 0.0
      %4903 = vmatpush1.msra.mxu0 0.0
      %4904 = vmatprep.subr.mxu0 0.0
      %4905 = vmatpush1.msra.mxu0 0.0
      %4906 = vmatprep.subr.mxu0 0.0
      %4907 = vmatpush1.msra.mxu0 0.0
      %4908 = vmatprep.subr.mxu0 0.0
      %4909 = vmatpush1.msra.mxu0 0.0
      %4910 = vmatprep.subr.mxu0 0.0
      %4911 = vmatpush1.msra.mxu0 0.0
      %4912 = vmatprep.subr.mxu0 0.0
      %4913 = vmatpush1.msra.mxu0 0.0
      %4914 = vmatprep.subr.mxu0 0.0
      %4915 = vmatpush1.msra.mxu0 0.0
      %4916 = vmatprep.subr.mxu0 0.0
      %4917 = vmatpush1.msra.mxu0 0.0
      %4918 = vmatprep.subr.mxu0 0.0
      %4919 = vmatpush1.msra.mxu0 0.0
      %4920 = vmatprep.mubr.f32.mxu0 0.0
      %4921 = vmatmul.mubr.f32.gmra.mrb[0].mxu0 %v4848
      %v4922 = vpop.f32.mrb[0].mxu0
      %v4923 = vadd.f32 0.0, %v4922
      %v4924 = vpop.f32.mrb[0].mxu0
      %v4925 = vadd.f32 0.0, %v4924
      %4926 = vdwg.mxu0
      %4927 = vmatprep.subr.mxu0 0.0
      %4928 = vmatpush1.msra.mxu0 %v4854
      %4929 = vmatprep.subr.mxu0 0.0
      %4930 = vmatpush1.msra.mxu0 0.0
      %4931 = vmatprep.subr.mxu0 0.0
      %4932 = vmatpush1.msra.mxu0 0.0
      %4933 = vmatprep.subr.mxu0 0.0
      %4934 = vmatpush1.msra.mxu0 0.0
      %4935 = vmatprep.subr.mxu0 0.0
      %4936 = vmatpush1.msra.mxu0 0.0
      %4937 = vmatprep.subr.mxu0 0.0
      %4938 = vmatpush1.msra.mxu0 0.0
      %4939 = vmatprep.subr.mxu0 0.0
      %4940 = vmatpush1.msra.mxu0 0.0
      %4941 = vmatprep.subr.mxu0 0.0
      %4942 = vmatpush1.msra.mxu0 0.0
      %4943 = vmatprep.subr.mxu0 0.0
      %4944 = vmatpush1.msra.mxu0 0.0
      %4945 = vmatprep.subr.mxu0 0.0
      %4946 = vmatpush1.msra.mxu0 0.0
      %4947 = vmatprep.subr.mxu0 0.0
      %4948 = vmatpush1.msra.mxu0 0.0
      %4949 = vmatprep.subr.mxu0 0.0
      %4950 = vmatpush1.msra.mxu0 0.0
      %4951 = vmatprep.subr.mxu0 0.0
      %4952 = vmatpush1.msra.mxu0 0.0
      %4953 = vmatprep.subr.mxu0 0.0
      %4954 = vmatpush1.msra.mxu0 0.0
      %4955 = vmatprep.subr.mxu0 0.0
      %4956 = vmatpush1.msra.mxu0 0.0
      %4957 = vmatprep.subr.mxu0 0.0
      %4958 = vmatpush1.msra.mxu0 0.0
      %4959 = vmatprep.subr.mxu0 0.0
      %4960 = vmatpush1.msra.mxu0 0.0
      %4961 = vmatprep.subr.mxu0 0.0
      %4962 = vmatpush1.msra.mxu0 0.0
      %4963 = vmatprep.subr.mxu0 0.0
      %4964 = vmatpush1.msra.mxu0 0.0
      %4965 = vmatprep.subr.mxu0 0.0
      %4966 = vmatpush1.msra.mxu0 0.0
      %4967 = vmatprep.subr.mxu0 0.0
      %4968 = vmatpush1.msra.mxu0 0.0
      %4969 = vmatprep.subr.mxu0 0.0
      %4970 = vmatpush1.msra.mxu0 0.0
      %4971 = vmatprep.subr.mxu0 0.0
      %4972 = vmatpush1.msra.mxu0 0.0
      %4973 = vmatprep.subr.mxu0 0.0
      %4974 = vmatpush1.msra.mxu0 0.0
      %4975 = vmatprep.subr.mxu0 0.0
      %4976 = vmatpush1.msra.mxu0 0.0
      %4977 = vmatprep.subr.mxu0 0.0
      %4978 = vmatpush1.msra.mxu0 0.0
      %4979 = vmatprep.subr.mxu0 0.0
      %4980 = vmatpush1.msra.mxu0 0.0
      %4981 = vmatprep.subr.mxu0 0.0
      %4982 = vmatpush1.msra.mxu0 0.0
      %4983 = vmatprep.subr.mxu0 0.0
      %4984 = vmatpush1.msra.mxu0 0.0
      %4985 = vmatprep.subr.mxu0 0.0
      %4986 = vmatpush1.msra.mxu0 0.0
      %4987 = vmatprep.subr.mxu0 0.0
      %4988 = vmatpush1.msra.mxu0 0.0
      %4989 = vmatprep.subr.mxu0 0.0
      %4990 = vmatpush1.msra.mxu0 0.0
      %4991 = vmatprep.mubr.f32.mxu0 0.0
      %4992 = vmatmul.mubr.f32.gmra.mrb[0].mxu0 %v4848
      %v4993 = vpop.f32.mrb[0].mxu0
      %v4994 = vadd.f32 0.0, %v4993
      %v4995 = vpop.f32.mrb[0].mxu0
      %4996 = vdwg.mxu0
      %v4997 = vadd.f32 %v4829, %v4923
      %v4998 = vadd.f32 %v4830, %v4925
      %v4999 = vadd.f32 %v4831, %v4994
      %v5000 = vld [vmem:[#allocation2] sm:$0x33]
      %v5001 = vld [vmem:[#allocation2 + $0x8] sm:$0x3]
      %s5002 = scalar_lea.vmem %s8, 16
      %v5003 = vld [vmem:[%s5002] sm:$0x3]
      %v5006 = vcombine.high %v5000, %v5000
      %5007 = vrot.lane.b32.xlu0 %v5000, 90
      %v5008 = vpop.permute.xlu0 %5007
      %5009 = vrot.lane.b32.xlu0 %v5006, 90
      %v5010 = vpop.permute.xlu0 %5009
      %5011 = vrot.lane.b32.xlu0 %v5001, 90
      %v5012 = vpop.permute.xlu0 %5011
      %v5013 = vsel %vm1917, %v5008, %v5010
      %v5014 = vsel %vm1917, %v5010, %v5012
      %v5016 = vsel %vm3690, %v5003, 0
      %v5018 = vsel %vm3694, %v5013, 0
      %v5020 = vsel %vm3694, %v5014, 0
      %v5022 = vsel %vm3694, %v5012, 0
      %5024 = vmatprep.subr.mxu0 %v5020
      %5025 = vmatpush1.msra.mxu0 %v5018
      %5026 = vmatprep.subr.mxu0 0.0
      %5027 = vmatpush1.msra.mxu0 0.0
      %5028 = vmatprep.subr.mxu0 0.0
      %5029 = vmatpush1.msra.mxu0 0.0
      %5030 = vmatprep.subr.mxu0 0.0
      %5031 = vmatpush1.msra.mxu0 0.0
      %5032 = vmatprep.subr.mxu0 0.0
      %5033 = vmatpush1.msra.mxu0 0.0
      %5034 = vmatprep.subr.mxu0 0.0
      %5035 = vmatpush1.msra.mxu0 0.0
      %5036 = vmatprep.subr.mxu0 0.0
      %5037 = vmatpush1.msra.mxu0 0.0
      %5038 = vmatprep.subr.mxu0 0.0
      %5039 = vmatpush1.msra.mxu0 0.0
      %5040 = vmatprep.subr.mxu0 0.0
      %5041 = vmatpush1.msra.mxu0 0.0
      %5042 = vmatprep.subr.mxu0 0.0
      %5043 = vmatpush1.msra.mxu0 0.0
      %5044 = vmatprep.subr.mxu0 0.0
      %5045 = vmatpush1.msra.mxu0 0.0
      %5046 = vmatprep.subr.mxu0 0.0
      %5047 = vmatpush1.msra.mxu0 0.0
      %5048 = vmatprep.subr.mxu0 0.0
      %5049 = vmatpush1.msra.mxu0 0.0
      %5050 = vmatprep.subr.mxu0 0.0
      %5051 = vmatpush1.msra.mxu0 0.0
      %5052 = vmatprep.subr.mxu0 0.0
      %5053 = vmatpush1.msra.mxu0 0.0
      %5054 = vmatprep.subr.mxu0 0.0
      %5055 = vmatpush1.msra.mxu0 0.0
      %5056 = vmatprep.subr.mxu0 0.0
      %5057 = vmatpush1.msra.mxu0 0.0
      %5058 = vmatprep.subr.mxu0 0.0
      %5059 = vmatpush1.msra.mxu0 0.0
      %5060 = vmatprep.subr.mxu0 0.0
      %5061 = vmatpush1.msra.mxu0 0.0
      %5062 = vmatprep.subr.mxu0 0.0
      %5063 = vmatpush1.msra.mxu0 0.0
      %5064 = vmatprep.subr.mxu0 0.0
      %5065 = vmatpush1.msra.mxu0 0.0
      %5066 = vmatprep.subr.mxu0 0.0
      %5067 = vmatpush1.msra.mxu0 0.0
      %5068 = vmatprep.subr.mxu0 0.0
      %5069 = vmatpush1.msra.mxu0 0.0
      %5070 = vmatprep.subr.mxu0 0.0
      %5071 = vmatpush1.msra.mxu0 0.0
      %5072 = vmatprep.subr.mxu0 0.0
      %5073 = vmatpush1.msra.mxu0 0.0
      %5074 = vmatprep.subr.mxu0 0.0
      %5075 = vmatpush1.msra.mxu0 0.0
      %5076 = vmatprep.subr.mxu0 0.0
      %5077 = vmatpush1.msra.mxu0 0.0
      %5078 = vmatprep.subr.mxu0 0.0
      %5079 = vmatpush1.msra.mxu0 0.0
      %5080 = vmatprep.subr.mxu0 0.0
      %5081 = vmatpush1.msra.mxu0 0.0
      %5082 = vmatprep.subr.mxu0 0.0
      %5083 = vmatpush1.msra.mxu0 0.0
      %5084 = vmatprep.subr.mxu0 0.0
      %5085 = vmatpush1.msra.mxu0 0.0
      %5086 = vmatprep.subr.mxu0 0.0
      %5087 = vmatpush1.msra.mxu0 0.0
      %5088 = vmatprep.mubr.f32.mxu0 0.0
      %5089 = vmatmul.mubr.f32.gmra.mrb[0].mxu0 %v5016
      %v5090 = vpop.f32.mrb[0].mxu0
      %v5091 = vadd.f32 0.0, %v5090
      %v5092 = vpop.f32.mrb[0].mxu0
      %v5093 = vadd.f32 0.0, %v5092
      %5094 = vdwg.mxu0
      %5095 = vmatprep.subr.mxu0 0.0
      %5096 = vmatpush1.msra.mxu0 %v5022
      %5097 = vmatprep.subr.mxu0 0.0
      %5098 = vmatpush1.msra.mxu0 0.0
      %5099 = vmatprep.subr.mxu0 0.0
      %5100 = vmatpush1.msra.mxu0 0.0
      %5101 = vmatprep.subr.mxu0 0.0
      %5102 = vmatpush1.msra.mxu0 0.0
      %5103 = vmatprep.subr.mxu0 0.0
      %5104 = vmatpush1.msra.mxu0 0.0
      %5105 = vmatprep.subr.mxu0 0.0
      %5106 = vmatpush1.msra.mxu0 0.0
      %5107 = vmatprep.subr.mxu0 0.0
      %5108 = vmatpush1.msra.mxu0 0.0
      %5109 = vmatprep.subr.mxu0 0.0
      %5110 = vmatpush1.msra.mxu0 0.0
      %5111 = vmatprep.subr.mxu0 0.0
      %5112 = vmatpush1.msra.mxu0 0.0
      %5113 = vmatprep.subr.mxu0 0.0
      %5114 = vmatpush1.msra.mxu0 0.0
      %5115 = vmatprep.subr.mxu0 0.0
      %5116 = vmatpush1.msra.mxu0 0.0
      %5117 = vmatprep.subr.mxu0 0.0
      %5118 = vmatpush1.msra.mxu0 0.0
      %5119 = vmatprep.subr.mxu0 0.0
      %5120 = vmatpush1.msra.mxu0 0.0
      %5121 = vmatprep.subr.mxu0 0.0
      %5122 = vmatpush1.msra.mxu0 0.0
      %5123 = vmatprep.subr.mxu0 0.0
      %5124 = vmatpush1.msra.mxu0 0.0
      %5125 = vmatprep.subr.mxu0 0.0
      %5126 = vmatpush1.msra.mxu0 0.0
      %5127 = vmatprep.subr.mxu0 0.0
      %5128 = vmatpush1.msra.mxu0 0.0
      %5129 = vmatprep.subr.mxu0 0.0
      %5130 = vmatpush1.msra.mxu0 0.0
      %5131 = vmatprep.subr.mxu0 0.0
      %5132 = vmatpush1.msra.mxu0 0.0
      %5133 = vmatprep.subr.mxu0 0.0
      %5134 = vmatpush1.msra.mxu0 0.0
      %5135 = vmatprep.subr.mxu0 0.0
      %5136 = vmatpush1.msra.mxu0 0.0
      %5137 = vmatprep.subr.mxu0 0.0
      %5138 = vmatpush1.msra.mxu0 0.0
      %5139 = vmatprep.subr.mxu0 0.0
      %5140 = vmatpush1.msra.mxu0 0.0
      %5141 = vmatprep.subr.mxu0 0.0
      %5142 = vmatpush1.msra.mxu0 0.0
      %5143 = vmatprep.subr.mxu0 0.0
      %5144 = vmatpush1.msra.mxu0 0.0
      %5145 = vmatprep.subr.mxu0 0.0
      %5146 = vmatpush1.msra.mxu0 0.0
      %5147 = vmatprep.subr.mxu0 0.0
      %5148 = vmatpush1.msra.mxu0 0.0
      %5149 = vmatprep.subr.mxu0 0.0
      %5150 = vmatpush1.msra.mxu0 0.0
      %5151 = vmatprep.subr.mxu0 0.0
      %5152 = vmatpush1.msra.mxu0 0.0
      %5153 = vmatprep.subr.mxu0 0.0
      %5154 = vmatpush1.msra.mxu0 0.0
      %5155 = vmatprep.subr.mxu0 0.0
      %5156 = vmatpush1.msra.mxu0 0.0
      %5157 = vmatprep.subr.mxu0 0.0
      %5158 = vmatpush1.msra.mxu0 0.0
      %5159 = vmatprep.mubr.f32.mxu0 0.0
      %5160 = vmatmul.mubr.f32.gmra.mrb[0].mxu0 %v5016
      %v5161 = vpop.f32.mrb[0].mxu0
      %v5162 = vadd.f32 0.0, %v5161
      %v5163 = vpop.f32.mrb[0].mxu0
      %5164 = vdwg.mxu0
      %v5165 = vadd.f32 %v4997, %v5091
      %v5166 = vadd.f32 %v4998, %v5093
      %v5167 = vadd.f32 %v4999, %v5162
      %v5168 = vld [vmem:[%s9] sm:$0x3]
      %5170 = vset.pattern.permute.xlu0 0
      %5171 = vperm.xlu0 %5170, %v5168
      %v5172 = vpop.permute.xlu0 %5171
      %v5174 = vadd.f32 %v5165, %v5172
      %v5175 = vadd.f32 %v5166, %v5172
      %v5176 = vadd.f32 %v5167, %v5172
      %v5177 = vmax.f32 %v5174, 0.0
      %v5178 = vmax.f32 %v5175, 0.0
      %v5179 = vmax.f32 %v5176, 0.0
      %v5183 = vcombine.low %v5177, %v5178
      %v5185 = vunpack.c.l.s4 1983009808
      %v5186 = vunpack.c.0.s8 %v5185
      %v5187 = vlaneseq
      %v5188 = vshrl.u32 %v5187, 7
      %v5189 = vsub.s32 %v5186, %v5188
      %v5190 = vrot.slane %v5183, %v5189
      %v5192 = vunpack.c.l.s4 1983009808
      %v5193 = vunpack.c.0.s8 %v5192
      %v5194 = vlaneseq
      %v5195 = vshrl.u32 %v5194, 7
      %v5196 = vsub.s32 %v5193, %v5195
      %v5197 = vrot.slane %v5179, %v5196
      %v5198 = vcombine.low %v5190, %v5197
      %vm5200 = vcmask 1043458
      %vm5201 = vmor %vm5200, %vm3694
      %vm5202 = vcmask 259076
      %vm5203 = vmor %vm5202, %vm5201
      %5204 = vst.msk [vmem:[%s376] sm:$0x3f] %vm5203, %v5198
      %p5205 = scmp.lt.s32.totalorder %s21, 1
      %s5206 = scalar_select %p5205, %s21, 1
      %s5207 = smul.addr %s5206, 3
      %s5208 = smul.addr %s5207, 2
      %s5209 = scalar_lea.vmem %s10, %s5208
      // Predicated region
      $region61: #{expanding_block_forward.1} parent=59 // pred_check
        %p5210 = pneg %p259
      $region62: #{expanding_block_forward.1} parent=59 // pred_check_branch
        %5212 = sbr.rel (%p5210) target = $region64
      $region63: #{expanding_block_forward.1} parent=59 // pred_region
        _
      $region64: #{expanding_block_forward.1} parent=59 // pred_fallthru
        _
    $region60: #{expanding_block_forward.1} parent=5 // pred_fallthru
      _
    %p5213 = scmp.le.s32.totalorder 2, %s16
    // Predicated region
    $region65: #{expanding_block_forward.1} parent=5 // pred_check
      %p5214 = pneg %p5213
    $region66: #{expanding_block_forward.1} parent=5 // pred_check_branch
      %5216 = sbr.rel (%p5214) target = $region68
    $region67: #{expanding_block_forward.1} parent=5 // pred_region
      %s5217 = ssub.s32 %s16, 2
      // Predicated region
      $region69: #{expanding_block_forward.1} parent=67 // pred_check
        %p5218 = pneg %p265
      $region70: #{expanding_block_forward.1} parent=67 // pred_check_branch
        %5220 = sbr.rel (%p5218) target = $region72
      $region71: #{expanding_block_forward.1} parent=67 // pred_region
        %p5221 = scmp.lt.s32.totalorder %s22, 1
        %s5222 = scalar_select %p5221, %s22, 1
        %s5223 = smul.addr %s5222, 3
        %s5224 = smul.addr %s5223, 2
        %s5225 = scalar_lea.vmem %s10, %s5224
      $region72: #{expanding_block_forward.1} parent=67 // pred_fallthru
        _
    $region68: #{expanding_block_forward.1} parent=5 // pred_fallthru
      _
  $region6: #{expanding_block_forward.1} parent=0 // loop_footer
    %s20 = sadd.s32 1, %s16
  $region7: #{expanding_block_forward.1} parent=0 // loop_footer_branch
    %15 = sbr.rel target = $region3
  $region8: #{expanding_block_forward.1} parent=0 // loop_exit
    _

</llo_original>
